<compile_context>
chip_gen: v6e
topology: v6e:2x2x1
jax: 0.10.0
libtpu: 0.0.40
codegen_flags: <defaults>
</compile_context>

<pallas_src>
import functools
import math

import jax
import jax.numpy as jnp
from jax import lax
from jax.experimental import pallas as pl
from jax.experimental.pallas import tpu as pltpu

# Fixed NatureCNN hyper-parameters (from the PyTorch module).
K1, S1, O1 = 8, 4, 32
K2, S2, O2 = 4, 2, 64
K3, S3, O3 = 3, 1, 64
FEAT = 256
STATE_OUT = 64


# ----------------------------------------------------------------------------
# One-time weight re-layout (pure XLA, outside the hot kernel)
# ----------------------------------------------------------------------------
def prepare_params(params):
    """Re-layout weights so the fused kernel only does four plain 2-D matmuls."""
    c_in = params["c1_w"].shape[1]
    s_in = params["st_w"].shape[0]
    n_flat = params["fc_w"].shape[0]
    # conv weights -> (kh, kw, c_in) x out, matching the in-kernel im2col order.
    w1 = jnp.transpose(params["c1_w"], (2, 3, 1, 0)).reshape(K1 * K1 * c_in, O1)
    w2 = jnp.transpose(params["c2_w"], (2, 3, 1, 0)).reshape(K2 * K2 * O1, O2)
    w3 = jnp.transpose(params["c3_w"], (2, 3, 1, 0)).reshape(K3 * K3 * O2, O3)
    # merged FC + state head: block-diagonal (64+S, 256+64) so the tail is one
    # matmul and one full-width output store.
    wfs = jnp.zeros((n_flat + s_in, FEAT + STATE_OUT), jnp.float32)
    wfs = wfs.at[:n_flat, :FEAT].set(params["fc_w"])
    wfs = wfs.at[n_flat:, FEAT:].set(params["st_w"])
    bfs = jnp.concatenate([params["fc_b"], params["st_b"]]).reshape(1, FEAT + STATE_OUT)
    return {
        "w1": w1, "b1": params["c1_b"].reshape(1, O1),
        "w2": w2, "b2": params["c2_b"].reshape(1, O2),
        "w3": w3, "b3": params["c3_b"].reshape(1, O3),
        "wfs": wfs, "bfs": bfs,
    }


def _conv1_im2col(x):
    """(B,C,H,W) -> (B*OH*OW, K1*K1*C); rows (b,oy,ox), cols (kh,kw,c).  Tiny (~128 KB)."""
    B, C, H, W = x.shape
    OH = (H - K1) // S1 + 1
    OW = (W - K1) // S1 + 1
    slabs = []
    for kh in range(K1):
        for kw in range(K1):
            v = x[:, :, kh:kh + S1 * (OH - 1) + 1:S1, kw:kw + S1 * (OW - 1) + 1:S1]
            slabs.append(jnp.transpose(v, (0, 2, 3, 1)))          # (B,OH,OW,C)
    col = jnp.concatenate(slabs, axis=-1)                          # (B,OH,OW,K1*K1*C)
    return col.reshape(B * OH * OW, K1 * K1 * C)


# ----------------------------------------------------------------------------
# Fused Pallas kernel: conv1 -> conv2 -> conv3 -> (FC + state head)
# ----------------------------------------------------------------------------
def _nature_cnn_kernel(xcol_ref, state_ref, w1_ref, b1_ref, w2_ref, b2_ref,
                       w3_ref, b3_ref, wfs_ref, bfs_ref, out_ref,
                       h1_ref, col2_ref, h2_ref, h3in_ref, fcin_ref, *, TB):
    f32 = jnp.float32

    # ---- conv1: ONE (TB*64, 256) x (256, 32) matmul -------------------------
    h1 = jnp.dot(xcol_ref[...], w1_ref[...], preferred_element_type=f32) + b1_ref[...]
    h1 = jnp.maximum(h1, 0.0)
    # leading-dim split only -> layout-preserving store into VMEM scratch.
    h1_ref[...] = h1.reshape(TB, 8, 8, O1)

    # ---- conv2 im2col: only the 9 stride-2 positions conv3 consumes ---------
    # col2 rows ordered (position p, batch b); lanes ordered (kh, kw, c_in).
    # All copies are static-offset (TB, 32) loads/stores: no relayouts.
    for oy in range(3):
        for ox in range(3):
            p = oy * 3 + ox
            for i in range(K2):
                for j in range(K2):
                    c0 = (i * K2 + j) * O1
                    col2_ref[p * TB:(p + 1) * TB, c0:c0 + O1] = \
                        h1_ref[:, 2 * oy + i, 2 * ox + j, :]

    # ---- conv2: ONE (9*TB, 512) x (512, 64) matmul ---------------------------
    h2_ref[...] = jnp.maximum(
        jnp.dot(col2_ref[...], w2_ref[...], preferred_element_type=f32) + b2_ref[...],
        0.0)

    # ---- conv3 im2col: (TB, 576), rows b, lanes (p, c2) ----------------------
    for p in range(9):
        h3in_ref[:, p * O2:(p + 1) * O2] = h2_ref[p * TB:(p + 1) * TB, :]

    # ---- conv3: ONE (TB, 576) x (576, 64) matmul -----------------------------
    h3 = jnp.maximum(
        jnp.dot(h3in_ref[...], w3_ref[...], preferred_element_type=f32) + b3_ref[...],
        0.0)

    # ---- merged FC + state head: ONE matmul, ONE lane-dense output store -----
    s_in = state_ref.shape[-1]
    fcin_ref[:, 0:O3] = h3
    fcin_ref[:, O3:O3 + s_in] = state_ref[...]
    y = jnp.dot(fcin_ref[...], wfs_ref[...], preferred_element_type=f32) + bfs_ref[...]
    lane = lax.broadcasted_iota(jnp.int32, y.shape, 1)
    out_ref[...] = jnp.where(lane < FEAT, jnp.maximum(y, 0.0), y)   # ReLU only on rgbd lanes


@jax.jit
def nature_cnn_forward(prep, rgbd_nchw, state):
    B, C, H, W = rgbd_nchw.shape
    oh1 = (H - K1) // S1 + 1
    ow1 = (W - K1) // S1 + 1
    oh2 = (oh1 - K2) // S2 + 1
    oh3 = (oh2 - K3) // S3 + 1
    # Kernel hard-assumes the 36x36 -> 8 -> 3 -> 1 chain of this config.
    # TODO(synk): oh3 > 1 would additionally need an fc_w row permutation
    # (NCHW flatten order) and generalized in-kernel window indexing.
    assert oh1 == 8 and ow1 == 8 and oh2 == 3 and oh3 == 1, (oh1, ow1, oh2, oh3)

    x_col = _conv1_im2col(rgbd_nchw)                  # (B*64, K1*K1*C)
    kpatch = x_col.shape[1]
    s_in = state.shape[1]
    out_dim = FEAT + STATE_OUT

    # batch tile: full batch for small B; a multiple of 8 (<=64) when B allows it
    # so larger batches tile over a "parallel" grid axis (v7x megacore / VMEM).
    TB = math.gcd(B, 64) if B % 8 == 0 else B
    grid = (B // TB,)

    weights = [prep["w1"], prep["b1"], prep["w2"], prep["b2"],
               prep["w3"], prep["b3"], prep["wfs"], prep["bfs"]]
    inputs = [x_col, state] + weights

    in_specs = [
        pl.BlockSpec((TB * oh1 * ow1, kpatch), lambda i: (i, 0)),
        pl.BlockSpec((TB, s_in), lambda i: (i, 0)),
    ] + [pl.BlockSpec(w.shape, lambda i: (0, 0)) for w in weights]

    flops = 2 * B * (oh1 * ow1 * kpatch * O1
                     + 9 * (K2 * K2 * O1) * O2
                     + (9 * O2) * O3
                     + (O3 + s_in) * out_dim)
    bytes_accessed = 4 * (x_col.size + state.size + sum(w.size for w in weights)
                          + B * out_dim)
    cost = pl.CostEstimate(flops=int(flops), transcendentals=0,
                           bytes_accessed=int(bytes_accessed))

    kernel = functools.partial(_nature_cnn_kernel, TB=TB)
    return pl.pallas_call(
        kernel,
        out_shape=jax.ShapeDtypeStruct((B, out_dim), jnp.float32),
        grid=grid,
        in_specs=in_specs,
        out_specs=pl.BlockSpec((TB, out_dim), lambda i: (i, 0)),
        scratch_shapes=[
            pltpu.VMEM((TB, 8, 8, O1), jnp.float32),           # conv1 activations (NHWC)
            pltpu.VMEM((9 * TB, K2 * K2 * O1), jnp.float32),   # conv2 im2col (9 positions only)
            pltpu.VMEM((9 * TB, O2), jnp.float32),             # conv2 output
            pltpu.VMEM((TB, 9 * O2), jnp.float32),             # conv3 im2col
            pltpu.VMEM((TB, O3 + s_in), jnp.float32),          # merged FC/state input
        ],
        compiler_params=pltpu.CompilerParams(dimension_semantics=("parallel",)),
        cost_estimate=cost,
    )(*inputs)


# ----------------------------------------------------------------------------
# Pure-JAX reference (high precision) for correctness check
# ----------------------------------------------------------------------------
def reference_forward(params, rgbd, state):
    hp = lax.Precision.HIGHEST

    def conv(x, w, b, s):
        y = lax.conv_general_dilated(
            x, w, (s, s), "VALID",
            dimension_numbers=("NCHW", "OIHW", "NCHW"), precision=hp)
        return jax.nn.relu(y + b[None, :, None, None])

    x = conv(rgbd, params["c1_w"], params["c1_b"], 4)
    x = conv(x, params["c2_w"], params["c2_b"], 2)
    x = conv(x, params["c3_w"], params["c3_b"], 1)
    flat = x.reshape(x.shape[0], -1)
    rgbd_feat = jax.nn.relu(jnp.dot(flat, params["fc_w"], precision=hp)
                            + params["fc_b"])
    state_feat = jnp.dot(state, params["st_w"], precision=hp) + params["st_b"]
    return jnp.concatenate([rgbd_feat, state_feat], axis=1)


# ----------------------------------------------------------------------------
# Deterministic synthetic parameters (shapes follow the module __init__)
# ----------------------------------------------------------------------------
def init_params(key, in_channels, state_size, n_flatten, feature_size=256):
    ks = jax.random.split(key, 10)
    scale = 0.05
    return {
        "c1_w": scale * jax.random.normal(ks[0], (32, in_channels, 8, 8), jnp.float32),
        "c1_b": scale * jax.random.normal(ks[1], (32,), jnp.float32),
        "c2_w": scale * jax.random.normal(ks[2], (64, 32, 4, 4), jnp.float32),
        "c2_b": scale * jax.random.normal(ks[3], (64,), jnp.float32),
        "c3_w": scale * jax.random.normal(ks[4], (64, 64, 3, 3), jnp.float32),
        "c3_b": scale * jax.random.normal(ks[5], (64,), jnp.float32),
        "fc_w": scale * jax.random.normal(ks[6], (n_flatten, feature_size), jnp.float32),
        "fc_b": scale * jax.random.normal(ks[7], (feature_size,), jnp.float32),
        "st_w": scale * jax.random.normal(ks[8], (state_size, 64), jnp.float32),
        "st_b": scale * jax.random.normal(ks[9], (64,), jnp.float32),
    }


if __name__ == "__main__":
    # Small shapes consistent with the module:
    #   image_size=(36, 36), in_channels=4, state_size=8, batch=2
    #   conv chain: 36 -> 8 -> 3 -> 1  => n_flatten = 64
    B, C_IN, H, W = 2, 4, 36, 36
    STATE = 8
    oh1 = (H - K1) // S1 + 1
    oh2 = (oh1 - K2) // S2 + 1
    oh3 = (oh2 - K3) // S3 + 1
    n_flatten = 64 * oh3 * oh3

    key = jax.random.PRNGKey(0)
    k_rgbd, k_state, k_params = jax.random.split(key, 3)
    rgbd = jax.random.normal(k_rgbd, (B, C_IN, H, W), jnp.float32)
    state = jax.random.normal(k_state, (B, STATE), jnp.float32)
    params = init_params(k_params, C_IN, STATE, n_flatten)

    prep = prepare_params(params)                    # one-time weight re-layout
    out = jax.block_until_ready(nature_cnn_forward(prep, rgbd, state))
    ref = jax.block_until_ready(reference_forward(params, rgbd, state))

    assert out.shape == (B, FEAT + STATE_OUT), out.shape
    err = float(jnp.max(jnp.abs(out - ref)))
    assert jnp.allclose(out, ref, atol=1e-3, rtol=1e-3), f"max|diff|={err}"

    print("KERNEL_OK")
</pallas_src>

<mosaic_0001>
module attributes {stable_mosaic.version = 11 : i64} {
  func.func @_nature_cnn_kernel(%arg0: i32, %arg1: memref<128x256xf32, #tpu.memory_space<vmem>>, %arg2: memref<2x8xf32, #tpu.memory_space<vmem>>, %arg3: memref<256x32xf32, #tpu.memory_space<vmem>>, %arg4: memref<1x32xf32, #tpu.memory_space<vmem>>, %arg5: memref<512x64xf32, #tpu.memory_space<vmem>>, %arg6: memref<1x64xf32, #tpu.memory_space<vmem>>, %arg7: memref<576x64xf32, #tpu.memory_space<vmem>>, %arg8: memref<1x64xf32, #tpu.memory_space<vmem>>, %arg9: memref<72x320xf32, #tpu.memory_space<vmem>>, %arg10: memref<1x320xf32, #tpu.memory_space<vmem>>, %arg11: memref<2x320xf32, #tpu.memory_space<vmem>>, %arg12: memref<2x8x8x32xf32, #tpu.memory_space<vmem>>, %arg13: memref<18x512xf32, #tpu.memory_space<vmem>>, %arg14: memref<18x64xf32, #tpu.memory_space<vmem>>, %arg15: memref<2x576xf32, #tpu.memory_space<vmem>>, %arg16: memref<2x72xf32, #tpu.memory_space<vmem>>) attributes {dimension_semantics = [#tpu.dimension_semantics<parallel>], iteration_bounds = array<i64: 1>, scalar_prefetch = 0 : i64, scratch_operands = 5 : i64, tpu.core_type = #tpu.core_type<tc>, window_params = [{transform_indices = @transform_0, window_bounds = array<i64: 128, 256>}, {transform_indices = @transform_1, window_bounds = array<i64: 2, 8>}, {pipeline_mode = #tpu.pipeline_mode<synchronous>, transform_indices = @transform_2, window_bounds = array<i64: 256, 32>}, {pipeline_mode = #tpu.pipeline_mode<synchronous>, transform_indices = @transform_3, window_bounds = array<i64: 1, 32>}, {pipeline_mode = #tpu.pipeline_mode<synchronous>, transform_indices = @transform_4, window_bounds = array<i64: 512, 64>}, {pipeline_mode = #tpu.pipeline_mode<synchronous>, transform_indices = @transform_5, window_bounds = array<i64: 1, 64>}, {pipeline_mode = #tpu.pipeline_mode<synchronous>, transform_indices = @transform_6, window_bounds = array<i64: 576, 64>}, {pipeline_mode = #tpu.pipeline_mode<synchronous>, transform_indices = @transform_7, window_bounds = array<i64: 1, 64>}, {pipeline_mode = #tpu.pipeline_mode<synchronous>, transform_indices = @transform_8, window_bounds = array<i64: 72, 320>}, {pipeline_mode = #tpu.pipeline_mode<synchronous>, transform_indices = @transform_9, window_bounds = array<i64: 1, 320>}, {transform_indices = @transform_10, window_bounds = array<i64: 2, 320>}]} {
    %c0 = arith.constant 0 : index
    %c0_0 = arith.constant 0 : index
    %0 = vector.load %arg1[%c0, %c0_0] : memref<128x256xf32, #tpu.memory_space<vmem>>, vector<128x256xf32>
    %c0_1 = arith.constant 0 : index
    %c0_2 = arith.constant 0 : index
    %1 = vector.load %arg3[%c0_1, %c0_2] : memref<256x32xf32, #tpu.memory_space<vmem>>, vector<256x32xf32>
    %cst = arith.constant dense<0.000000e+00> : vector<128x32xf32>
    %2 = tpu.matmul %0, %1, %cst {dimension_numbers = #tpu.dot_dimension_numbers<[1], [0], [0], [1], [0, 0, 1, 1], [], []>} : vector<128x256xf32>, vector<256x32xf32>, vector<128x32xf32> -> vector<128x32xf32>
    %c0_3 = arith.constant 0 : index
    %c0_4 = arith.constant 0 : index
    %3 = vector.load %arg4[%c0_3, %c0_4] : memref<1x32xf32, #tpu.memory_space<vmem>>, vector<1x32xf32>
    %4 = vector.broadcast %3 : vector<1x32xf32> to vector<128x32xf32>
    %5 = arith.addf %2, %4 : vector<128x32xf32>
    %cst_5 = arith.constant 0.000000e+00 : f32
    %6 = vector.broadcast %cst_5 : f32 to vector<128x32xf32>
    %7 = arith.maximumf %5, %6 : vector<128x32xf32>
    %8 = vector.shape_cast %7 : vector<128x32xf32> to vector<2x8x8x32xf32>
    %c0_6 = arith.constant 0 : index
    %c0_7 = arith.constant 0 : index
    %c0_8 = arith.constant 0 : index
    %c0_9 = arith.constant 0 : index
    %9 = vector.load %arg12[%c0_6, %c0_7, %c0_8, %c0_9] : memref<2x8x8x32xf32, #tpu.memory_space<vmem>>, vector<2x8x8x32xf32>
    tpu.vector_store %arg12[%c0_6, %c0_7, %c0_8, %c0_9], %8 {strides = array<i32>} : memref<2x8x8x32xf32, #tpu.memory_space<vmem>>, vector<2x8x8x32xf32>,
    %c0_10 = arith.constant 0 : index
    %c0_11 = arith.constant 0 : index
    %c0_12 = arith.constant 0 : index
    %c0_13 = arith.constant 0 : index
    %10 = vector.load %arg12[%c0_10, %c0_11, %c0_12, %c0_13] : memref<2x8x8x32xf32, #tpu.memory_space<vmem>>, vector<2x1x1x32xf32>
    %11 = vector.shape_cast %10 : vector<2x1x1x32xf32> to vector<2x32xf32>
    %c0_14 = arith.constant 0 : index
    %c0_15 = arith.constant 0 : index
    %12 = vector.load %arg13[%c0_14, %c0_15] : memref<18x512xf32, #tpu.memory_space<vmem>>, vector<2x32xf32>
    tpu.vector_store %arg13[%c0_14, %c0_15], %11 {strides = array<i32>} : memref<18x512xf32, #tpu.memory_space<vmem>>, vector<2x32xf32>,
    %c0_16 = arith.constant 0 : index
    %c0_17 = arith.constant 0 : index
    %c1 = arith.constant 1 : index
    %c0_18 = arith.constant 0 : index
    %13 = vector.load %arg12[%c0_16, %c0_17, %c1, %c0_18] : memref<2x8x8x32xf32, #tpu.memory_space<vmem>>, vector<2x1x1x32xf32>
    %14 = vector.shape_cast %13 : vector<2x1x1x32xf32> to vector<2x32xf32>
    %c0_19 = arith.constant 0 : index
    %c32 = arith.constant 32 : index
    %15 = vector.load %arg13[%c0_19, %c32] : memref<18x512xf32, #tpu.memory_space<vmem>>, vector<2x32xf32>
    tpu.vector_store %arg13[%c0_19, %c32], %14 {strides = array<i32>} : memref<18x512xf32, #tpu.memory_space<vmem>>, vector<2x32xf32>,
    %c0_20 = arith.constant 0 : index
    %c0_21 = arith.constant 0 : index
    %c2 = arith.constant 2 : index
    %c0_22 = arith.constant 0 : index
    %16 = vector.load %arg12[%c0_20, %c0_21, %c2, %c0_22] : memref<2x8x8x32xf32, #tpu.memory_space<vmem>>, vector<2x1x1x32xf32>
    %17 = vector.shape_cast %16 : vector<2x1x1x32xf32> to vector<2x32xf32>
    %c0_23 = arith.constant 0 : index
    %c64 = arith.constant 64 : index
    %18 = vector.load %arg13[%c0_23, %c64] : memref<18x512xf32, #tpu.memory_space<vmem>>, vector<2x32xf32>
    tpu.vector_store %arg13[%c0_23, %c64], %17 {strides = array<i32>} : memref<18x512xf32, #tpu.memory_space<vmem>>, vector<2x32xf32>,
    %c0_24 = arith.constant 0 : index
    %c0_25 = arith.constant 0 : index
    %c3 = arith.constant 3 : index
    %c0_26 = arith.constant 0 : index
    %19 = vector.load %arg12[%c0_24, %c0_25, %c3, %c0_26] : memref<2x8x8x32xf32, #tpu.memory_space<vmem>>, vector<2x1x1x32xf32>
    %20 = vector.shape_cast %19 : vector<2x1x1x32xf32> to vector<2x32xf32>
    %c0_27 = arith.constant 0 : index
    %c96 = arith.constant 96 : index
    %21 = vector.load %arg13[%c0_27, %c96] : memref<18x512xf32, #tpu.memory_space<vmem>>, vector<2x32xf32>
    tpu.vector_store %arg13[%c0_27, %c96], %20 {strides = array<i32>} : memref<18x512xf32, #tpu.memory_space<vmem>>, vector<2x32xf32>,
    %c0_28 = arith.constant 0 : index
    %c1_29 = arith.constant 1 : index
    %c0_30 = arith.constant 0 : index
    %c0_31 = arith.constant 0 : index
    %22 = vector.load %arg12[%c0_28, %c1_29, %c0_30, %c0_31] : memref<2x8x8x32xf32, #tpu.memory_space<vmem>>, vector<2x1x1x32xf32>
    %23 = vector.shape_cast %22 : vector<2x1x1x32xf32> to vector<2x32xf32>
    %c0_32 = arith.constant 0 : index
    %c128 = arith.constant 128 : index
    %24 = vector.load %arg13[%c0_32, %c128] : memref<18x512xf32, #tpu.memory_space<vmem>>, vector<2x32xf32>
    tpu.vector_store %arg13[%c0_32, %c128], %23 {strides = array<i32>} : memref<18x512xf32, #tpu.memory_space<vmem>>, vector<2x32xf32>,
    %c0_33 = arith.constant 0 : index
    %c1_34 = arith.constant 1 : index
    %c1_35 = arith.constant 1 : index
    %c0_36 = arith.constant 0 : index
    %25 = vector.load %arg12[%c0_33, %c1_34, %c1_35, %c0_36] : memref<2x8x8x32xf32, #tpu.memory_space<vmem>>, vector<2x1x1x32xf32>
    %26 = vector.shape_cast %25 : vector<2x1x1x32xf32> to vector<2x32xf32>
    %c0_37 = arith.constant 0 : index
    %c160 = arith.constant 160 : index
    %27 = vector.load %arg13[%c0_37, %c160] : memref<18x512xf32, #tpu.memory_space<vmem>>, vector<2x32xf32>
    tpu.vector_store %arg13[%c0_37, %c160], %26 {strides = array<i32>} : memref<18x512xf32, #tpu.memory_space<vmem>>, vector<2x32xf32>,
    %c0_38 = arith.constant 0 : index
    %c1_39 = arith.constant 1 : index
    %c2_40 = arith.constant 2 : index
    %c0_41 = arith.constant 0 : index
    %28 = vector.load %arg12[%c0_38, %c1_39, %c2_40, %c0_41] : memref<2x8x8x32xf32, #tpu.memory_space<vmem>>, vector<2x1x1x32xf32>
    %29 = vector.shape_cast %28 : vector<2x1x1x32xf32> to vector<2x32xf32>
    %c0_42 = arith.constant 0 : index
    %c192 = arith.constant 192 : index
    %30 = vector.load %arg13[%c0_42, %c192] : memref<18x512xf32, #tpu.memory_space<vmem>>, vector<2x32xf32>
    tpu.vector_store %arg13[%c0_42, %c192], %29 {strides = array<i32>} : memref<18x512xf32, #tpu.memory_space<vmem>>, vector<2x32xf32>,
    %c0_43 = arith.constant 0 : index
    %c1_44 = arith.constant 1 : index
    %c3_45 = arith.constant 3 : index
    %c0_46 = arith.constant 0 : index
    %31 = vector.load %arg12[%c0_43, %c1_44, %c3_45, %c0_46] : memref<2x8x8x32xf32, #tpu.memory_space<vmem>>, vector<2x1x1x32xf32>
    %32 = vector.shape_cast %31 : vector<2x1x1x32xf32> to vector<2x32xf32>
    %c0_47 = arith.constant 0 : index
    %c224 = arith.constant 224 : index
    %33 = vector.load %arg13[%c0_47, %c224] : memref<18x512xf32, #tpu.memory_space<vmem>>, vector<2x32xf32>
    tpu.vector_store %arg13[%c0_47, %c224], %32 {strides = array<i32>} : memref<18x512xf32, #tpu.memory_space<vmem>>, vector<2x32xf32>,
    %c0_48 = arith.constant 0 : index
    %c2_49 = arith.constant 2 : index
    %c0_50 = arith.constant 0 : index
    %c0_51 = arith.constant 0 : index
    %34 = vector.load %arg12[%c0_48, %c2_49, %c0_50, %c0_51] : memref<2x8x8x32xf32, #tpu.memory_space<vmem>>, vector<2x1x1x32xf32>
    %35 = vector.shape_cast %34 : vector<2x1x1x32xf32> to vector<2x32xf32>
    %c0_52 = arith.constant 0 : index
    %c256 = arith.constant 256 : index
    %36 = vector.load %arg13[%c0_52, %c256] : memref<18x512xf32, #tpu.memory_space<vmem>>, vector<2x32xf32>
    tpu.vector_store %arg13[%c0_52, %c256], %35 {strides = array<i32>} : memref<18x512xf32, #tpu.memory_space<vmem>>, vector<2x32xf32>,
    %c0_53 = arith.constant 0 : index
    %c2_54 = arith.constant 2 : index
    %c1_55 = arith.constant 1 : index
    %c0_56 = arith.constant 0 : index
    %37 = vector.load %arg12[%c0_53, %c2_54, %c1_55, %c0_56] : memref<2x8x8x32xf32, #tpu.memory_space<vmem>>, vector<2x1x1x32xf32>
    %38 = vector.shape_cast %37 : vector<2x1x1x32xf32> to vector<2x32xf32>
    %c0_57 = arith.constant 0 : index
    %c288 = arith.constant 288 : index
    %39 = vector.load %arg13[%c0_57, %c288] : memref<18x512xf32, #tpu.memory_space<vmem>>, vector<2x32xf32>
    tpu.vector_store %arg13[%c0_57, %c288], %38 {strides = array<i32>} : memref<18x512xf32, #tpu.memory_space<vmem>>, vector<2x32xf32>,
    %c0_58 = arith.constant 0 : index
    %c2_59 = arith.constant 2 : index
    %c2_60 = arith.constant 2 : index
    %c0_61 = arith.constant 0 : index
    %40 = vector.load %arg12[%c0_58, %c2_59, %c2_60, %c0_61] : memref<2x8x8x32xf32, #tpu.memory_space<vmem>>, vector<2x1x1x32xf32>
    %41 = vector.shape_cast %40 : vector<2x1x1x32xf32> to vector<2x32xf32>
    %c0_62 = arith.constant 0 : index
    %c320 = arith.constant 320 : index
    %42 = vector.load %arg13[%c0_62, %c320] : memref<18x512xf32, #tpu.memory_space<vmem>>, vector<2x32xf32>
    tpu.vector_store %arg13[%c0_62, %c320], %41 {strides = array<i32>} : memref<18x512xf32, #tpu.memory_space<vmem>>, vector<2x32xf32>,
    %c0_63 = arith.constant 0 : index
    %c2_64 = arith.constant 2 : index
    %c3_65 = arith.constant 3 : index
    %c0_66 = arith.constant 0 : index
    %43 = vector.load %arg12[%c0_63, %c2_64, %c3_65, %c0_66] : memref<2x8x8x32xf32, #tpu.memory_space<vmem>>, vector<2x1x1x32xf32>
    %44 = vector.shape_cast %43 : vector<2x1x1x32xf32> to vector<2x32xf32>
    %c0_67 = arith.constant 0 : index
    %c352 = arith.constant 352 : index
    %45 = vector.load %arg13[%c0_67, %c352] : memref<18x512xf32, #tpu.memory_space<vmem>>, vector<2x32xf32>
    tpu.vector_store %arg13[%c0_67, %c352], %44 {strides = array<i32>} : memref<18x512xf32, #tpu.memory_space<vmem>>, vector<2x32xf32>,
    %c0_68 = arith.constant 0 : index
    %c3_69 = arith.constant 3 : index
    %c0_70 = arith.constant 0 : index
    %c0_71 = arith.constant 0 : index
    %46 = vector.load %arg12[%c0_68, %c3_69, %c0_70, %c0_71] : memref<2x8x8x32xf32, #tpu.memory_space<vmem>>, vector<2x1x1x32xf32>
    %47 = vector.shape_cast %46 : vector<2x1x1x32xf32> to vector<2x32xf32>
    %c0_72 = arith.constant 0 : index
    %c384 = arith.constant 384 : index
    %48 = vector.load %arg13[%c0_72, %c384] : memref<18x512xf32, #tpu.memory_space<vmem>>, vector<2x32xf32>
    tpu.vector_store %arg13[%c0_72, %c384], %47 {strides = array<i32>} : memref<18x512xf32, #tpu.memory_space<vmem>>, vector<2x32xf32>,
    %c0_73 = arith.constant 0 : index
    %c3_74 = arith.constant 3 : index
    %c1_75 = arith.constant 1 : index
    %c0_76 = arith.constant 0 : index
    %49 = vector.load %arg12[%c0_73, %c3_74, %c1_75, %c0_76] : memref<2x8x8x32xf32, #tpu.memory_space<vmem>>, vector<2x1x1x32xf32>
    %50 = vector.shape_cast %49 : vector<2x1x1x32xf32> to vector<2x32xf32>
    %c0_77 = arith.constant 0 : index
    %c416 = arith.constant 416 : index
    %51 = vector.load %arg13[%c0_77, %c416] : memref<18x512xf32, #tpu.memory_space<vmem>>, vector<2x32xf32>
    tpu.vector_store %arg13[%c0_77, %c416], %50 {strides = array<i32>} : memref<18x512xf32, #tpu.memory_space<vmem>>, vector<2x32xf32>,
    %c0_78 = arith.constant 0 : index
    %c3_79 = arith.constant 3 : index
    %c2_80 = arith.constant 2 : index
    %c0_81 = arith.constant 0 : index
    %52 = vector.load %arg12[%c0_78, %c3_79, %c2_80, %c0_81] : memref<2x8x8x32xf32, #tpu.memory_space<vmem>>, vector<2x1x1x32xf32>
    %53 = vector.shape_cast %52 : vector<2x1x1x32xf32> to vector<2x32xf32>
    %c0_82 = arith.constant 0 : index
    %c448 = arith.constant 448 : index
    %54 = vector.load %arg13[%c0_82, %c448] : memref<18x512xf32, #tpu.memory_space<vmem>>, vector<2x32xf32>
    tpu.vector_store %arg13[%c0_82, %c448], %53 {strides = array<i32>} : memref<18x512xf32, #tpu.memory_space<vmem>>, vector<2x32xf32>,
    %c0_83 = arith.constant 0 : index
    %c3_84 = arith.constant 3 : index
    %c3_85 = arith.constant 3 : index
    %c0_86 = arith.constant 0 : index
    %55 = vector.load %arg12[%c0_83, %c3_84, %c3_85, %c0_86] : memref<2x8x8x32xf32, #tpu.memory_space<vmem>>, vector<2x1x1x32xf32>
    %56 = vector.shape_cast %55 : vector<2x1x1x32xf32> to vector<2x32xf32>
    %c0_87 = arith.constant 0 : index
    %c480 = arith.constant 480 : index
    %57 = vector.load %arg13[%c0_87, %c480] : memref<18x512xf32, #tpu.memory_space<vmem>>, vector<2x32xf32>
    tpu.vector_store %arg13[%c0_87, %c480], %56 {strides = array<i32>} : memref<18x512xf32, #tpu.memory_space<vmem>>, vector<2x32xf32>,
    %c0_88 = arith.constant 0 : index
    %c0_89 = arith.constant 0 : index
    %c2_90 = arith.constant 2 : index
    %c0_91 = arith.constant 0 : index
    %58 = vector.load %arg12[%c0_88, %c0_89, %c2_90, %c0_91] : memref<2x8x8x32xf32, #tpu.memory_space<vmem>>, vector<2x1x1x32xf32>
    %59 = vector.shape_cast %58 : vector<2x1x1x32xf32> to vector<2x32xf32>
    %c2_92 = arith.constant 2 : index
    %c0_93 = arith.constant 0 : index
    %60 = vector.load %arg13[%c2_92, %c0_93] : memref<18x512xf32, #tpu.memory_space<vmem>>, vector<2x32xf32>
    tpu.vector_store %arg13[%c2_92, %c0_93], %59 {strides = array<i32>} : memref<18x512xf32, #tpu.memory_space<vmem>>, vector<2x32xf32>,
    %c0_94 = arith.constant 0 : index
    %c0_95 = arith.constant 0 : index
    %c3_96 = arith.constant 3 : index
    %c0_97 = arith.constant 0 : index
    %61 = vector.load %arg12[%c0_94, %c0_95, %c3_96, %c0_97] : memref<2x8x8x32xf32, #tpu.memory_space<vmem>>, vector<2x1x1x32xf32>
    %62 = vector.shape_cast %61 : vector<2x1x1x32xf32> to vector<2x32xf32>
    %c2_98 = arith.constant 2 : index
    %c32_99 = arith.constant 32 : index
    %63 = vector.load %arg13[%c2_98, %c32_99] : memref<18x512xf32, #tpu.memory_space<vmem>>, vector<2x32xf32>
    tpu.vector_store %arg13[%c2_98, %c32_99], %62 {strides = array<i32>} : memref<18x512xf32, #tpu.memory_space<vmem>>, vector<2x32xf32>,
    %c0_100 = arith.constant 0 : index
    %c0_101 = arith.constant 0 : index
    %c4 = arith.constant 4 : index
    %c0_102 = arith.constant 0 : index
    %64 = vector.load %arg12[%c0_100, %c0_101, %c4, %c0_102] : memref<2x8x8x32xf32, #tpu.memory_space<vmem>>, vector<2x1x1x32xf32>
    %65 = vector.shape_cast %64 : vector<2x1x1x32xf32> to vector<2x32xf32>
    %c2_103 = arith.constant 2 : index
    %c64_104 = arith.constant 64 : index
    %66 = vector.load %arg13[%c2_103, %c64_104] : memref<18x512xf32, #tpu.memory_space<vmem>>, vector<2x32xf32>
    tpu.vector_store %arg13[%c2_103, %c64_104], %65 {strides = array<i32>} : memref<18x512xf32, #tpu.memory_space<vmem>>, vector<2x32xf32>,
    %c0_105 = arith.constant 0 : index
    %c0_106 = arith.constant 0 : index
    %c5 = arith.constant 5 : index
    %c0_107 = arith.constant 0 : index
    %67 = vector.load %arg12[%c0_105, %c0_106, %c5, %c0_107] : memref<2x8x8x32xf32, #tpu.memory_space<vmem>>, vector<2x1x1x32xf32>
    %68 = vector.shape_cast %67 : vector<2x1x1x32xf32> to vector<2x32xf32>
    %c2_108 = arith.constant 2 : index
    %c96_109 = arith.constant 96 : index
    %69 = vector.load %arg13[%c2_108, %c96_109] : memref<18x512xf32, #tpu.memory_space<vmem>>, vector<2x32xf32>
    tpu.vector_store %arg13[%c2_108, %c96_109], %68 {strides = array<i32>} : memref<18x512xf32, #tpu.memory_space<vmem>>, vector<2x32xf32>,
    %c0_110 = arith.constant 0 : index
    %c1_111 = arith.constant 1 : index
    %c2_112 = arith.constant 2 : index
    %c0_113 = arith.constant 0 : index
    %70 = vector.load %arg12[%c0_110, %c1_111, %c2_112, %c0_113] : memref<2x8x8x32xf32, #tpu.memory_space<vmem>>, vector<2x1x1x32xf32>
    %71 = vector.shape_cast %70 : vector<2x1x1x32xf32> to vector<2x32xf32>
    %c2_114 = arith.constant 2 : index
    %c128_115 = arith.constant 128 : index
    %72 = vector.load %arg13[%c2_114, %c128_115] : memref<18x512xf32, #tpu.memory_space<vmem>>, vector<2x32xf32>
    tpu.vector_store %arg13[%c2_114, %c128_115], %71 {strides = array<i32>} : memref<18x512xf32, #tpu.memory_space<vmem>>, vector<2x32xf32>,
    %c0_116 = arith.constant 0 : index
    %c1_117 = arith.constant 1 : index
    %c3_118 = arith.constant 3 : index
    %c0_119 = arith.constant 0 : index
    %73 = vector.load %arg12[%c0_116, %c1_117, %c3_118, %c0_119] : memref<2x8x8x32xf32, #tpu.memory_space<vmem>>, vector<2x1x1x32xf32>
    %74 = vector.shape_cast %73 : vector<2x1x1x32xf32> to vector<2x32xf32>
    %c2_120 = arith.constant 2 : index
    %c160_121 = arith.constant 160 : index
    %75 = vector.load %arg13[%c2_120, %c160_121] : memref<18x512xf32, #tpu.memory_space<vmem>>, vector<2x32xf32>
    tpu.vector_store %arg13[%c2_120, %c160_121], %74 {strides = array<i32>} : memref<18x512xf32, #tpu.memory_space<vmem>>, vector<2x32xf32>,
    %c0_122 = arith.constant 0 : index
    %c1_123 = arith.constant 1 : index
    %c4_124 = arith.constant 4 : index
    %c0_125 = arith.constant 0 : index
    %76 = vector.load %arg12[%c0_122, %c1_123, %c4_124, %c0_125] : memref<2x8x8x32xf32, #tpu.memory_space<vmem>>, vector<2x1x1x32xf32>
    %77 = vector.shape_cast %76 : vector<2x1x1x32xf32> to vector<2x32xf32>
    %c2_126 = arith.constant 2 : index
    %c192_127 = arith.constant 192 : index
    %78 = vector.load %arg13[%c2_126, %c192_127] : memref<18x512xf32, #tpu.memory_space<vmem>>, vector<2x32xf32>
    tpu.vector_store %arg13[%c2_126, %c192_127], %77 {strides = array<i32>} : memref<18x512xf32, #tpu.memory_space<vmem>>, vector<2x32xf32>,
    %c0_128 = arith.constant 0 : index
    %c1_129 = arith.constant 1 : index
    %c5_130 = arith.constant 5 : index
    %c0_131 = arith.constant 0 : index
    %79 = vector.load %arg12[%c0_128, %c1_129, %c5_130, %c0_131] : memref<2x8x8x32xf32, #tpu.memory_space<vmem>>, vector<2x1x1x32xf32>
    %80 = vector.shape_cast %79 : vector<2x1x1x32xf32> to vector<2x32xf32>
    %c2_132 = arith.constant 2 : index
    %c224_133 = arith.constant 224 : index
    %81 = vector.load %arg13[%c2_132, %c224_133] : memref<18x512xf32, #tpu.memory_space<vmem>>, vector<2x32xf32>
    tpu.vector_store %arg13[%c2_132, %c224_133], %80 {strides = array<i32>} : memref<18x512xf32, #tpu.memory_space<vmem>>, vector<2x32xf32>,
    %c0_134 = arith.constant 0 : index
    %c2_135 = arith.constant 2 : index
    %c2_136 = arith.constant 2 : index
    %c0_137 = arith.constant 0 : index
    %82 = vector.load %arg12[%c0_134, %c2_135, %c2_136, %c0_137] : memref<2x8x8x32xf32, #tpu.memory_space<vmem>>, vector<2x1x1x32xf32>
    %83 = vector.shape_cast %82 : vector<2x1x1x32xf32> to vector<2x32xf32>
    %c2_138 = arith.constant 2 : index
    %c256_139 = arith.constant 256 : index
    %84 = vector.load %arg13[%c2_138, %c256_139] : memref<18x512xf32, #tpu.memory_space<vmem>>, vector<2x32xf32>
    tpu.vector_store %arg13[%c2_138, %c256_139], %83 {strides = array<i32>} : memref<18x512xf32, #tpu.memory_space<vmem>>, vector<2x32xf32>,
    %c0_140 = arith.constant 0 : index
    %c2_141 = arith.constant 2 : index
    %c3_142 = arith.constant 3 : index
    %c0_143 = arith.constant 0 : index
    %85 = vector.load %arg12[%c0_140, %c2_141, %c3_142, %c0_143] : memref<2x8x8x32xf32, #tpu.memory_space<vmem>>, vector<2x1x1x32xf32>
    %86 = vector.shape_cast %85 : vector<2x1x1x32xf32> to vector<2x32xf32>
    %c2_144 = arith.constant 2 : index
    %c288_145 = arith.constant 288 : index
    %87 = vector.load %arg13[%c2_144, %c288_145] : memref<18x512xf32, #tpu.memory_space<vmem>>, vector<2x32xf32>
    tpu.vector_store %arg13[%c2_144, %c288_145], %86 {strides = array<i32>} : memref<18x512xf32, #tpu.memory_space<vmem>>, vector<2x32xf32>,
    %c0_146 = arith.constant 0 : index
    %c2_147 = arith.constant 2 : index
    %c4_148 = arith.constant 4 : index
    %c0_149 = arith.constant 0 : index
    %88 = vector.load %arg12[%c0_146, %c2_147, %c4_148, %c0_149] : memref<2x8x8x32xf32, #tpu.memory_space<vmem>>, vector<2x1x1x32xf32>
    %89 = vector.shape_cast %88 : vector<2x1x1x32xf32> to vector<2x32xf32>
    %c2_150 = arith.constant 2 : index
    %c320_151 = arith.constant 320 : index
    %90 = vector.load %arg13[%c2_150, %c320_151] : memref<18x512xf32, #tpu.memory_space<vmem>>, vector<2x32xf32>
    tpu.vector_store %arg13[%c2_150, %c320_151], %89 {strides = array<i32>} : memref<18x512xf32, #tpu.memory_space<vmem>>, vector<2x32xf32>,
    %c0_152 = arith.constant 0 : index
    %c2_153 = arith.constant 2 : index
    %c5_154 = arith.constant 5 : index
    %c0_155 = arith.constant 0 : index
    %91 = vector.load %arg12[%c0_152, %c2_153, %c5_154, %c0_155] : memref<2x8x8x32xf32, #tpu.memory_space<vmem>>, vector<2x1x1x32xf32>
    %92 = vector.shape_cast %91 : vector<2x1x1x32xf32> to vector<2x32xf32>
    %c2_156 = arith.constant 2 : index
    %c352_157 = arith.constant 352 : index
    %93 = vector.load %arg13[%c2_156, %c352_157] : memref<18x512xf32, #tpu.memory_space<vmem>>, vector<2x32xf32>
    tpu.vector_store %arg13[%c2_156, %c352_157], %92 {strides = array<i32>} : memref<18x512xf32, #tpu.memory_space<vmem>>, vector<2x32xf32>,
    %c0_158 = arith.constant 0 : index
    %c3_159 = arith.constant 3 : index
    %c2_160 = arith.constant 2 : index
    %c0_161 = arith.constant 0 : index
    %94 = vector.load %arg12[%c0_158, %c3_159, %c2_160, %c0_161] : memref<2x8x8x32xf32, #tpu.memory_space<vmem>>, vector<2x1x1x32xf32>
    %95 = vector.shape_cast %94 : vector<2x1x1x32xf32> to vector<2x32xf32>
    %c2_162 = arith.constant 2 : index
    %c384_163 = arith.constant 384 : index
    %96 = vector.load %arg13[%c2_162, %c384_163] : memref<18x512xf32, #tpu.memory_space<vmem>>, vector<2x32xf32>
    tpu.vector_store %arg13[%c2_162, %c384_163], %95 {strides = array<i32>} : memref<18x512xf32, #tpu.memory_space<vmem>>, vector<2x32xf32>,
    %c0_164 = arith.constant 0 : index
    %c3_165 = arith.constant 3 : index
    %c3_166 = arith.constant 3 : index
    %c0_167 = arith.constant 0 : index
    %97 = vector.load %arg12[%c0_164, %c3_165, %c3_166, %c0_167] : memref<2x8x8x32xf32, #tpu.memory_space<vmem>>, vector<2x1x1x32xf32>
    %98 = vector.shape_cast %97 : vector<2x1x1x32xf32> to vector<2x32xf32>
    %c2_168 = arith.constant 2 : index
    %c416_169 = arith.constant 416 : index
    %99 = vector.load %arg13[%c2_168, %c416_169] : memref<18x512xf32, #tpu.memory_space<vmem>>, vector<2x32xf32>
    tpu.vector_store %arg13[%c2_168, %c416_169], %98 {strides = array<i32>} : memref<18x512xf32, #tpu.memory_space<vmem>>, vector<2x32xf32>,
    %c0_170 = arith.constant 0 : index
    %c3_171 = arith.constant 3 : index
    %c4_172 = arith.constant 4 : index
    %c0_173 = arith.constant 0 : index
    %100 = vector.load %arg12[%c0_170, %c3_171, %c4_172, %c0_173] : memref<2x8x8x32xf32, #tpu.memory_space<vmem>>, vector<2x1x1x32xf32>
    %101 = vector.shape_cast %100 : vector<2x1x1x32xf32> to vector<2x32xf32>
    %c2_174 = arith.constant 2 : index
    %c448_175 = arith.constant 448 : index
    %102 = vector.load %arg13[%c2_174, %c448_175] : memref<18x512xf32, #tpu.memory_space<vmem>>, vector<2x32xf32>
    tpu.vector_store %arg13[%c2_174, %c448_175], %101 {strides = array<i32>} : memref<18x512xf32, #tpu.memory_space<vmem>>, vector<2x32xf32>,
    %c0_176 = arith.constant 0 : index
    %c3_177 = arith.constant 3 : index
    %c5_178 = arith.constant 5 : index
    %c0_179 = arith.constant 0 : index
    %103 = vector.load %arg12[%c0_176, %c3_177, %c5_178, %c0_179] : memref<2x8x8x32xf32, #tpu.memory_space<vmem>>, vector<2x1x1x32xf32>
    %104 = vector.shape_cast %103 : vector<2x1x1x32xf32> to vector<2x32xf32>
    %c2_180 = arith.constant 2 : index
    %c480_181 = arith.constant 480 : index
    %105 = vector.load %arg13[%c2_180, %c480_181] : memref<18x512xf32, #tpu.memory_space<vmem>>, vector<2x32xf32>
    tpu.vector_store %arg13[%c2_180, %c480_181], %104 {strides = array<i32>} : memref<18x512xf32, #tpu.memory_space<vmem>>, vector<2x32xf32>,
    %c0_182 = arith.constant 0 : index
    %c0_183 = arith.constant 0 : index
    %c4_184 = arith.constant 4 : index
    %c0_185 = arith.constant 0 : index
    %106 = vector.load %arg12[%c0_182, %c0_183, %c4_184, %c0_185] : memref<2x8x8x32xf32, #tpu.memory_space<vmem>>, vector<2x1x1x32xf32>
    %107 = vector.shape_cast %106 : vector<2x1x1x32xf32> to vector<2x32xf32>
    %c4_186 = arith.constant 4 : index
    %c0_187 = arith.constant 0 : index
    %108 = vector.load %arg13[%c4_186, %c0_187] : memref<18x512xf32, #tpu.memory_space<vmem>>, vector<2x32xf32>
    tpu.vector_store %arg13[%c4_186, %c0_187], %107 {strides = array<i32>} : memref<18x512xf32, #tpu.memory_space<vmem>>, vector<2x32xf32>,
    %c0_188 = arith.constant 0 : index
    %c0_189 = arith.constant 0 : index
    %c5_190 = arith.constant 5 : index
    %c0_191 = arith.constant 0 : index
    %109 = vector.load %arg12[%c0_188, %c0_189, %c5_190, %c0_191] : memref<2x8x8x32xf32, #tpu.memory_space<vmem>>, vector<2x1x1x32xf32>
    %110 = vector.shape_cast %109 : vector<2x1x1x32xf32> to vector<2x32xf32>
    %c4_192 = arith.constant 4 : index
    %c32_193 = arith.constant 32 : index
    %111 = vector.load %arg13[%c4_192, %c32_193] : memref<18x512xf32, #tpu.memory_space<vmem>>, vector<2x32xf32>
    tpu.vector_store %arg13[%c4_192, %c32_193], %110 {strides = array<i32>} : memref<18x512xf32, #tpu.memory_space<vmem>>, vector<2x32xf32>,
    %c0_194 = arith.constant 0 : index
    %c0_195 = arith.constant 0 : index
    %c6 = arith.constant 6 : index
    %c0_196 = arith.constant 0 : index
    %112 = vector.load %arg12[%c0_194, %c0_195, %c6, %c0_196] : memref<2x8x8x32xf32, #tpu.memory_space<vmem>>, vector<2x1x1x32xf32>
    %113 = vector.shape_cast %112 : vector<2x1x1x32xf32> to vector<2x32xf32>
    %c4_197 = arith.constant 4 : index
    %c64_198 = arith.constant 64 : index
    %114 = vector.load %arg13[%c4_197, %c64_198] : memref<18x512xf32, #tpu.memory_space<vmem>>, vector<2x32xf32>
    tpu.vector_store %arg13[%c4_197, %c64_198], %113 {strides = array<i32>} : memref<18x512xf32, #tpu.memory_space<vmem>>, vector<2x32xf32>,
    %c0_199 = arith.constant 0 : index
    %c0_200 = arith.constant 0 : index
    %c7 = arith.constant 7 : index
    %c0_201 = arith.constant 0 : index
    %115 = vector.load %arg12[%c0_199, %c0_200, %c7, %c0_201] : memref<2x8x8x32xf32, #tpu.memory_space<vmem>>, vector<2x1x1x32xf32>
    %116 = vector.shape_cast %115 : vector<2x1x1x32xf32> to vector<2x32xf32>
    %c4_202 = arith.constant 4 : index
    %c96_203 = arith.constant 96 : index
    %117 = vector.load %arg13[%c4_202, %c96_203] : memref<18x512xf32, #tpu.memory_space<vmem>>, vector<2x32xf32>
    tpu.vector_store %arg13[%c4_202, %c96_203], %116 {strides = array<i32>} : memref<18x512xf32, #tpu.memory_space<vmem>>, vector<2x32xf32>,
    %c0_204 = arith.constant 0 : index
    %c1_205 = arith.constant 1 : index
    %c4_206 = arith.constant 4 : index
    %c0_207 = arith.constant 0 : index
    %118 = vector.load %arg12[%c0_204, %c1_205, %c4_206, %c0_207] : memref<2x8x8x32xf32, #tpu.memory_space<vmem>>, vector<2x1x1x32xf32>
    %119 = vector.shape_cast %118 : vector<2x1x1x32xf32> to vector<2x32xf32>
    %c4_208 = arith.constant 4 : index
    %c128_209 = arith.constant 128 : index
    %120 = vector.load %arg13[%c4_208, %c128_209] : memref<18x512xf32, #tpu.memory_space<vmem>>, vector<2x32xf32>
    tpu.vector_store %arg13[%c4_208, %c128_209], %119 {strides = array<i32>} : memref<18x512xf32, #tpu.memory_space<vmem>>, vector<2x32xf32>,
    %c0_210 = arith.constant 0 : index
    %c1_211 = arith.constant 1 : index
    %c5_212 = arith.constant 5 : index
    %c0_213 = arith.constant 0 : index
    %121 = vector.load %arg12[%c0_210, %c1_211, %c5_212, %c0_213] : memref<2x8x8x32xf32, #tpu.memory_space<vmem>>, vector<2x1x1x32xf32>
    %122 = vector.shape_cast %121 : vector<2x1x1x32xf32> to vector<2x32xf32>
    %c4_214 = arith.constant 4 : index
    %c160_215 = arith.constant 160 : index
    %123 = vector.load %arg13[%c4_214, %c160_215] : memref<18x512xf32, #tpu.memory_space<vmem>>, vector<2x32xf32>
    tpu.vector_store %arg13[%c4_214, %c160_215], %122 {strides = array<i32>} : memref<18x512xf32, #tpu.memory_space<vmem>>, vector<2x32xf32>,
    %c0_216 = arith.constant 0 : index
    %c1_217 = arith.constant 1 : index
    %c6_218 = arith.constant 6 : index
    %c0_219 = arith.constant 0 : index
    %124 = vector.load %arg12[%c0_216, %c1_217, %c6_218, %c0_219] : memref<2x8x8x32xf32, #tpu.memory_space<vmem>>, vector<2x1x1x32xf32>
    %125 = vector.shape_cast %124 : vector<2x1x1x32xf32> to vector<2x32xf32>
    %c4_220 = arith.constant 4 : index
    %c192_221 = arith.constant 192 : index
    %126 = vector.load %arg13[%c4_220, %c192_221] : memref<18x512xf32, #tpu.memory_space<vmem>>, vector<2x32xf32>
    tpu.vector_store %arg13[%c4_220, %c192_221], %125 {strides = array<i32>} : memref<18x512xf32, #tpu.memory_space<vmem>>, vector<2x32xf32>,
    %c0_222 = arith.constant 0 : index
    %c1_223 = arith.constant 1 : index
    %c7_224 = arith.constant 7 : index
    %c0_225 = arith.constant 0 : index
    %127 = vector.load %arg12[%c0_222, %c1_223, %c7_224, %c0_225] : memref<2x8x8x32xf32, #tpu.memory_space<vmem>>, vector<2x1x1x32xf32>
    %128 = vector.shape_cast %127 : vector<2x1x1x32xf32> to vector<2x32xf32>
    %c4_226 = arith.constant 4 : index
    %c224_227 = arith.constant 224 : index
    %129 = vector.load %arg13[%c4_226, %c224_227] : memref<18x512xf32, #tpu.memory_space<vmem>>, vector<2x32xf32>
    tpu.vector_store %arg13[%c4_226, %c224_227], %128 {strides = array<i32>} : memref<18x512xf32, #tpu.memory_space<vmem>>, vector<2x32xf32>,
    %c0_228 = arith.constant 0 : index
    %c2_229 = arith.constant 2 : index
    %c4_230 = arith.constant 4 : index
    %c0_231 = arith.constant 0 : index
    %130 = vector.load %arg12[%c0_228, %c2_229, %c4_230, %c0_231] : memref<2x8x8x32xf32, #tpu.memory_space<vmem>>, vector<2x1x1x32xf32>
    %131 = vector.shape_cast %130 : vector<2x1x1x32xf32> to vector<2x32xf32>
    %c4_232 = arith.constant 4 : index
    %c256_233 = arith.constant 256 : index
    %132 = vector.load %arg13[%c4_232, %c256_233] : memref<18x512xf32, #tpu.memory_space<vmem>>, vector<2x32xf32>
    tpu.vector_store %arg13[%c4_232, %c256_233], %131 {strides = array<i32>} : memref<18x512xf32, #tpu.memory_space<vmem>>, vector<2x32xf32>,
    %c0_234 = arith.constant 0 : index
    %c2_235 = arith.constant 2 : index
    %c5_236 = arith.constant 5 : index
    %c0_237 = arith.constant 0 : index
    %133 = vector.load %arg12[%c0_234, %c2_235, %c5_236, %c0_237] : memref<2x8x8x32xf32, #tpu.memory_space<vmem>>, vector<2x1x1x32xf32>
    %134 = vector.shape_cast %133 : vector<2x1x1x32xf32> to vector<2x32xf32>
    %c4_238 = arith.constant 4 : index
    %c288_239 = arith.constant 288 : index
    %135 = vector.load %arg13[%c4_238, %c288_239] : memref<18x512xf32, #tpu.memory_space<vmem>>, vector<2x32xf32>
    tpu.vector_store %arg13[%c4_238, %c288_239], %134 {strides = array<i32>} : memref<18x512xf32, #tpu.memory_space<vmem>>, vector<2x32xf32>,
    %c0_240 = arith.constant 0 : index
    %c2_241 = arith.constant 2 : index
    %c6_242 = arith.constant 6 : index
    %c0_243 = arith.constant 0 : index
    %136 = vector.load %arg12[%c0_240, %c2_241, %c6_242, %c0_243] : memref<2x8x8x32xf32, #tpu.memory_space<vmem>>, vector<2x1x1x32xf32>
    %137 = vector.shape_cast %136 : vector<2x1x1x32xf32> to vector<2x32xf32>
    %c4_244 = arith.constant 4 : index
    %c320_245 = arith.constant 320 : index
    %138 = vector.load %arg13[%c4_244, %c320_245] : memref<18x512xf32, #tpu.memory_space<vmem>>, vector<2x32xf32>
    tpu.vector_store %arg13[%c4_244, %c320_245], %137 {strides = array<i32>} : memref<18x512xf32, #tpu.memory_space<vmem>>, vector<2x32xf32>,
    %c0_246 = arith.constant 0 : index
    %c2_247 = arith.constant 2 : index
    %c7_248 = arith.constant 7 : index
    %c0_249 = arith.constant 0 : index
    %139 = vector.load %arg12[%c0_246, %c2_247, %c7_248, %c0_249] : memref<2x8x8x32xf32, #tpu.memory_space<vmem>>, vector<2x1x1x32xf32>
    %140 = vector.shape_cast %139 : vector<2x1x1x32xf32> to vector<2x32xf32>
    %c4_250 = arith.constant 4 : index
    %c352_251 = arith.constant 352 : index
    %141 = vector.load %arg13[%c4_250, %c352_251] : memref<18x512xf32, #tpu.memory_space<vmem>>, vector<2x32xf32>
    tpu.vector_store %arg13[%c4_250, %c352_251], %140 {strides = array<i32>} : memref<18x512xf32, #tpu.memory_space<vmem>>, vector<2x32xf32>,
    %c0_252 = arith.constant 0 : index
    %c3_253 = arith.constant 3 : index
    %c4_254 = arith.constant 4 : index
    %c0_255 = arith.constant 0 : index
    %142 = vector.load %arg12[%c0_252, %c3_253, %c4_254, %c0_255] : memref<2x8x8x32xf32, #tpu.memory_space<vmem>>, vector<2x1x1x32xf32>
    %143 = vector.shape_cast %142 : vector<2x1x1x32xf32> to vector<2x32xf32>
    %c4_256 = arith.constant 4 : index
    %c384_257 = arith.constant 384 : index
    %144 = vector.load %arg13[%c4_256, %c384_257] : memref<18x512xf32, #tpu.memory_space<vmem>>, vector<2x32xf32>
    tpu.vector_store %arg13[%c4_256, %c384_257], %143 {strides = array<i32>} : memref<18x512xf32, #tpu.memory_space<vmem>>, vector<2x32xf32>,
    %c0_258 = arith.constant 0 : index
    %c3_259 = arith.constant 3 : index
    %c5_260 = arith.constant 5 : index
    %c0_261 = arith.constant 0 : index
    %145 = vector.load %arg12[%c0_258, %c3_259, %c5_260, %c0_261] : memref<2x8x8x32xf32, #tpu.memory_space<vmem>>, vector<2x1x1x32xf32>
    %146 = vector.shape_cast %145 : vector<2x1x1x32xf32> to vector<2x32xf32>
    %c4_262 = arith.constant 4 : index
    %c416_263 = arith.constant 416 : index
    %147 = vector.load %arg13[%c4_262, %c416_263] : memref<18x512xf32, #tpu.memory_space<vmem>>, vector<2x32xf32>
    tpu.vector_store %arg13[%c4_262, %c416_263], %146 {strides = array<i32>} : memref<18x512xf32, #tpu.memory_space<vmem>>, vector<2x32xf32>,
    %c0_264 = arith.constant 0 : index
    %c3_265 = arith.constant 3 : index
    %c6_266 = arith.constant 6 : index
    %c0_267 = arith.constant 0 : index
    %148 = vector.load %arg12[%c0_264, %c3_265, %c6_266, %c0_267] : memref<2x8x8x32xf32, #tpu.memory_space<vmem>>, vector<2x1x1x32xf32>
    %149 = vector.shape_cast %148 : vector<2x1x1x32xf32> to vector<2x32xf32>
    %c4_268 = arith.constant 4 : index
    %c448_269 = arith.constant 448 : index
    %150 = vector.load %arg13[%c4_268, %c448_269] : memref<18x512xf32, #tpu.memory_space<vmem>>, vector<2x32xf32>
    tpu.vector_store %arg13[%c4_268, %c448_269], %149 {strides = array<i32>} : memref<18x512xf32, #tpu.memory_space<vmem>>, vector<2x32xf32>,
    %c0_270 = arith.constant 0 : index
    %c3_271 = arith.constant 3 : index
    %c7_272 = arith.constant 7 : index
    %c0_273 = arith.constant 0 : index
    %151 = vector.load %arg12[%c0_270, %c3_271, %c7_272, %c0_273] : memref<2x8x8x32xf32, #tpu.memory_space<vmem>>, vector<2x1x1x32xf32>
    %152 = vector.shape_cast %151 : vector<2x1x1x32xf32> to vector<2x32xf32>
    %c4_274 = arith.constant 4 : index
    %c480_275 = arith.constant 480 : index
    %153 = vector.load %arg13[%c4_274, %c480_275] : memref<18x512xf32, #tpu.memory_space<vmem>>, vector<2x32xf32>
    tpu.vector_store %arg13[%c4_274, %c480_275], %152 {strides = array<i32>} : memref<18x512xf32, #tpu.memory_space<vmem>>, vector<2x32xf32>,
    %c0_276 = arith.constant 0 : index
    %c2_277 = arith.constant 2 : index
    %c0_278 = arith.constant 0 : index
    %c0_279 = arith.constant 0 : index
    %154 = vector.load %arg12[%c0_276, %c2_277, %c0_278, %c0_279] : memref<2x8x8x32xf32, #tpu.memory_space<vmem>>, vector<2x1x1x32xf32>
    %155 = vector.shape_cast %154 : vector<2x1x1x32xf32> to vector<2x32xf32>
    %c6_280 = arith.constant 6 : index
    %c0_281 = arith.constant 0 : index
    %156 = vector.load %arg13[%c6_280, %c0_281] : memref<18x512xf32, #tpu.memory_space<vmem>>, vector<2x32xf32>
    tpu.vector_store %arg13[%c6_280, %c0_281], %155 {strides = array<i32>} : memref<18x512xf32, #tpu.memory_space<vmem>>, vector<2x32xf32>,
    %c0_282 = arith.constant 0 : index
    %c2_283 = arith.constant 2 : index
    %c1_284 = arith.constant 1 : index
    %c0_285 = arith.constant 0 : index
    %157 = vector.load %arg12[%c0_282, %c2_283, %c1_284, %c0_285] : memref<2x8x8x32xf32, #tpu.memory_space<vmem>>, vector<2x1x1x32xf32>
    %158 = vector.shape_cast %157 : vector<2x1x1x32xf32> to vector<2x32xf32>
    %c6_286 = arith.constant 6 : index
    %c32_287 = arith.constant 32 : index
    %159 = vector.load %arg13[%c6_286, %c32_287] : memref<18x512xf32, #tpu.memory_space<vmem>>, vector<2x32xf32>
    tpu.vector_store %arg13[%c6_286, %c32_287], %158 {strides = array<i32>} : memref<18x512xf32, #tpu.memory_space<vmem>>, vector<2x32xf32>,
    %c0_288 = arith.constant 0 : index
    %c2_289 = arith.constant 2 : index
    %c2_290 = arith.constant 2 : index
    %c0_291 = arith.constant 0 : index
    %160 = vector.load %arg12[%c0_288, %c2_289, %c2_290, %c0_291] : memref<2x8x8x32xf32, #tpu.memory_space<vmem>>, vector<2x1x1x32xf32>
    %161 = vector.shape_cast %160 : vector<2x1x1x32xf32> to vector<2x32xf32>
    %c6_292 = arith.constant 6 : index
    %c64_293 = arith.constant 64 : index
    %162 = vector.load %arg13[%c6_292, %c64_293] : memref<18x512xf32, #tpu.memory_space<vmem>>, vector<2x32xf32>
    tpu.vector_store %arg13[%c6_292, %c64_293], %161 {strides = array<i32>} : memref<18x512xf32, #tpu.memory_space<vmem>>, vector<2x32xf32>,
    %c0_294 = arith.constant 0 : index
    %c2_295 = arith.constant 2 : index
    %c3_296 = arith.constant 3 : index
    %c0_297 = arith.constant 0 : index
    %163 = vector.load %arg12[%c0_294, %c2_295, %c3_296, %c0_297] : memref<2x8x8x32xf32, #tpu.memory_space<vmem>>, vector<2x1x1x32xf32>
    %164 = vector.shape_cast %163 : vector<2x1x1x32xf32> to vector<2x32xf32>
    %c6_298 = arith.constant 6 : index
    %c96_299 = arith.constant 96 : index
    %165 = vector.load %arg13[%c6_298, %c96_299] : memref<18x512xf32, #tpu.memory_space<vmem>>, vector<2x32xf32>
    tpu.vector_store %arg13[%c6_298, %c96_299], %164 {strides = array<i32>} : memref<18x512xf32, #tpu.memory_space<vmem>>, vector<2x32xf32>,
    %c0_300 = arith.constant 0 : index
    %c3_301 = arith.constant 3 : index
    %c0_302 = arith.constant 0 : index
    %c0_303 = arith.constant 0 : index
    %166 = vector.load %arg12[%c0_300, %c3_301, %c0_302, %c0_303] : memref<2x8x8x32xf32, #tpu.memory_space<vmem>>, vector<2x1x1x32xf32>
    %167 = vector.shape_cast %166 : vector<2x1x1x32xf32> to vector<2x32xf32>
    %c6_304 = arith.constant 6 : index
    %c128_305 = arith.constant 128 : index
    %168 = vector.load %arg13[%c6_304, %c128_305] : memref<18x512xf32, #tpu.memory_space<vmem>>, vector<2x32xf32>
    tpu.vector_store %arg13[%c6_304, %c128_305], %167 {strides = array<i32>} : memref<18x512xf32, #tpu.memory_space<vmem>>, vector<2x32xf32>,
    %c0_306 = arith.constant 0 : index
    %c3_307 = arith.constant 3 : index
    %c1_308 = arith.constant 1 : index
    %c0_309 = arith.constant 0 : index
    %169 = vector.load %arg12[%c0_306, %c3_307, %c1_308, %c0_309] : memref<2x8x8x32xf32, #tpu.memory_space<vmem>>, vector<2x1x1x32xf32>
    %170 = vector.shape_cast %169 : vector<2x1x1x32xf32> to vector<2x32xf32>
    %c6_310 = arith.constant 6 : index
    %c160_311 = arith.constant 160 : index
    %171 = vector.load %arg13[%c6_310, %c160_311] : memref<18x512xf32, #tpu.memory_space<vmem>>, vector<2x32xf32>
    tpu.vector_store %arg13[%c6_310, %c160_311], %170 {strides = array<i32>} : memref<18x512xf32, #tpu.memory_space<vmem>>, vector<2x32xf32>,
    %c0_312 = arith.constant 0 : index
    %c3_313 = arith.constant 3 : index
    %c2_314 = arith.constant 2 : index
    %c0_315 = arith.constant 0 : index
    %172 = vector.load %arg12[%c0_312, %c3_313, %c2_314, %c0_315] : memref<2x8x8x32xf32, #tpu.memory_space<vmem>>, vector<2x1x1x32xf32>
    %173 = vector.shape_cast %172 : vector<2x1x1x32xf32> to vector<2x32xf32>
    %c6_316 = arith.constant 6 : index
    %c192_317 = arith.constant 192 : index
    %174 = vector.load %arg13[%c6_316, %c192_317] : memref<18x512xf32, #tpu.memory_space<vmem>>, vector<2x32xf32>
    tpu.vector_store %arg13[%c6_316, %c192_317], %173 {strides = array<i32>} : memref<18x512xf32, #tpu.memory_space<vmem>>, vector<2x32xf32>,
    %c0_318 = arith.constant 0 : index
    %c3_319 = arith.constant 3 : index
    %c3_320 = arith.constant 3 : index
    %c0_321 = arith.constant 0 : index
    %175 = vector.load %arg12[%c0_318, %c3_319, %c3_320, %c0_321] : memref<2x8x8x32xf32, #tpu.memory_space<vmem>>, vector<2x1x1x32xf32>
    %176 = vector.shape_cast %175 : vector<2x1x1x32xf32> to vector<2x32xf32>
    %c6_322 = arith.constant 6 : index
    %c224_323 = arith.constant 224 : index
    %177 = vector.load %arg13[%c6_322, %c224_323] : memref<18x512xf32, #tpu.memory_space<vmem>>, vector<2x32xf32>
    tpu.vector_store %arg13[%c6_322, %c224_323], %176 {strides = array<i32>} : memref<18x512xf32, #tpu.memory_space<vmem>>, vector<2x32xf32>,
    %c0_324 = arith.constant 0 : index
    %c4_325 = arith.constant 4 : index
    %c0_326 = arith.constant 0 : index
    %c0_327 = arith.constant 0 : index
    %178 = vector.load %arg12[%c0_324, %c4_325, %c0_326, %c0_327] : memref<2x8x8x32xf32, #tpu.memory_space<vmem>>, vector<2x1x1x32xf32>
    %179 = vector.shape_cast %178 : vector<2x1x1x32xf32> to vector<2x32xf32>
    %c6_328 = arith.constant 6 : index
    %c256_329 = arith.constant 256 : index
    %180 = vector.load %arg13[%c6_328, %c256_329] : memref<18x512xf32, #tpu.memory_space<vmem>>, vector<2x32xf32>
    tpu.vector_store %arg13[%c6_328, %c256_329], %179 {strides = array<i32>} : memref<18x512xf32, #tpu.memory_space<vmem>>, vector<2x32xf32>,
    %c0_330 = arith.constant 0 : index
    %c4_331 = arith.constant 4 : index
    %c1_332 = arith.constant 1 : index
    %c0_333 = arith.constant 0 : index
    %181 = vector.load %arg12[%c0_330, %c4_331, %c1_332, %c0_333] : memref<2x8x8x32xf32, #tpu.memory_space<vmem>>, vector<2x1x1x32xf32>
    %182 = vector.shape_cast %181 : vector<2x1x1x32xf32> to vector<2x32xf32>
    %c6_334 = arith.constant 6 : index
    %c288_335 = arith.constant 288 : index
    %183 = vector.load %arg13[%c6_334, %c288_335] : memref<18x512xf32, #tpu.memory_space<vmem>>, vector<2x32xf32>
    tpu.vector_store %arg13[%c6_334, %c288_335], %182 {strides = array<i32>} : memref<18x512xf32, #tpu.memory_space<vmem>>, vector<2x32xf32>,
    %c0_336 = arith.constant 0 : index
    %c4_337 = arith.constant 4 : index
    %c2_338 = arith.constant 2 : index
    %c0_339 = arith.constant 0 : index
    %184 = vector.load %arg12[%c0_336, %c4_337, %c2_338, %c0_339] : memref<2x8x8x32xf32, #tpu.memory_space<vmem>>, vector<2x1x1x32xf32>
    %185 = vector.shape_cast %184 : vector<2x1x1x32xf32> to vector<2x32xf32>
    %c6_340 = arith.constant 6 : index
    %c320_341 = arith.constant 320 : index
    %186 = vector.load %arg13[%c6_340, %c320_341] : memref<18x512xf32, #tpu.memory_space<vmem>>, vector<2x32xf32>
    tpu.vector_store %arg13[%c6_340, %c320_341], %185 {strides = array<i32>} : memref<18x512xf32, #tpu.memory_space<vmem>>, vector<2x32xf32>,
    %c0_342 = arith.constant 0 : index
    %c4_343 = arith.constant 4 : index
    %c3_344 = arith.constant 3 : index
    %c0_345 = arith.constant 0 : index
    %187 = vector.load %arg12[%c0_342, %c4_343, %c3_344, %c0_345] : memref<2x8x8x32xf32, #tpu.memory_space<vmem>>, vector<2x1x1x32xf32>
    %188 = vector.shape_cast %187 : vector<2x1x1x32xf32> to vector<2x32xf32>
    %c6_346 = arith.constant 6 : index
    %c352_347 = arith.constant 352 : index
    %189 = vector.load %arg13[%c6_346, %c352_347] : memref<18x512xf32, #tpu.memory_space<vmem>>, vector<2x32xf32>
    tpu.vector_store %arg13[%c6_346, %c352_347], %188 {strides = array<i32>} : memref<18x512xf32, #tpu.memory_space<vmem>>, vector<2x32xf32>,
    %c0_348 = arith.constant 0 : index
    %c5_349 = arith.constant 5 : index
    %c0_350 = arith.constant 0 : index
    %c0_351 = arith.constant 0 : index
    %190 = vector.load %arg12[%c0_348, %c5_349, %c0_350, %c0_351] : memref<2x8x8x32xf32, #tpu.memory_space<vmem>>, vector<2x1x1x32xf32>
    %191 = vector.shape_cast %190 : vector<2x1x1x32xf32> to vector<2x32xf32>
    %c6_352 = arith.constant 6 : index
    %c384_353 = arith.constant 384 : index
    %192 = vector.load %arg13[%c6_352, %c384_353] : memref<18x512xf32, #tpu.memory_space<vmem>>, vector<2x32xf32>
    tpu.vector_store %arg13[%c6_352, %c384_353], %191 {strides = array<i32>} : memref<18x512xf32, #tpu.memory_space<vmem>>, vector<2x32xf32>,
    %c0_354 = arith.constant 0 : index
    %c5_355 = arith.constant 5 : index
    %c1_356 = arith.constant 1 : index
    %c0_357 = arith.constant 0 : index
    %193 = vector.load %arg12[%c0_354, %c5_355, %c1_356, %c0_357] : memref<2x8x8x32xf32, #tpu.memory_space<vmem>>, vector<2x1x1x32xf32>
    %194 = vector.shape_cast %193 : vector<2x1x1x32xf32> to vector<2x32xf32>
    %c6_358 = arith.constant 6 : index
    %c416_359 = arith.constant 416 : index
    %195 = vector.load %arg13[%c6_358, %c416_359] : memref<18x512xf32, #tpu.memory_space<vmem>>, vector<2x32xf32>
    tpu.vector_store %arg13[%c6_358, %c416_359], %194 {strides = array<i32>} : memref<18x512xf32, #tpu.memory_space<vmem>>, vector<2x32xf32>,
    %c0_360 = arith.constant 0 : index
    %c5_361 = arith.constant 5 : index
    %c2_362 = arith.constant 2 : index
    %c0_363 = arith.constant 0 : index
    %196 = vector.load %arg12[%c0_360, %c5_361, %c2_362, %c0_363] : memref<2x8x8x32xf32, #tpu.memory_space<vmem>>, vector<2x1x1x32xf32>
    %197 = vector.shape_cast %196 : vector<2x1x1x32xf32> to vector<2x32xf32>
    %c6_364 = arith.constant 6 : index
    %c448_365 = arith.constant 448 : index
    %198 = vector.load %arg13[%c6_364, %c448_365] : memref<18x512xf32, #tpu.memory_space<vmem>>, vector<2x32xf32>
    tpu.vector_store %arg13[%c6_364, %c448_365], %197 {strides = array<i32>} : memref<18x512xf32, #tpu.memory_space<vmem>>, vector<2x32xf32>,
    %c0_366 = arith.constant 0 : index
    %c5_367 = arith.constant 5 : index
    %c3_368 = arith.constant 3 : index
    %c0_369 = arith.constant 0 : index
    %199 = vector.load %arg12[%c0_366, %c5_367, %c3_368, %c0_369] : memref<2x8x8x32xf32, #tpu.memory_space<vmem>>, vector<2x1x1x32xf32>
    %200 = vector.shape_cast %199 : vector<2x1x1x32xf32> to vector<2x32xf32>
    %c6_370 = arith.constant 6 : index
    %c480_371 = arith.constant 480 : index
    %201 = vector.load %arg13[%c6_370, %c480_371] : memref<18x512xf32, #tpu.memory_space<vmem>>, vector<2x32xf32>
    tpu.vector_store %arg13[%c6_370, %c480_371], %200 {strides = array<i32>} : memref<18x512xf32, #tpu.memory_space<vmem>>, vector<2x32xf32>,
    %c0_372 = arith.constant 0 : index
    %c2_373 = arith.constant 2 : index
    %c2_374 = arith.constant 2 : index
    %c0_375 = arith.constant 0 : index
    %202 = vector.load %arg12[%c0_372, %c2_373, %c2_374, %c0_375] : memref<2x8x8x32xf32, #tpu.memory_space<vmem>>, vector<2x1x1x32xf32>
    %203 = vector.shape_cast %202 : vector<2x1x1x32xf32> to vector<2x32xf32>
    %c8 = arith.constant 8 : index
    %c0_376 = arith.constant 0 : index
    %204 = vector.load %arg13[%c8, %c0_376] : memref<18x512xf32, #tpu.memory_space<vmem>>, vector<2x32xf32>
    tpu.vector_store %arg13[%c8, %c0_376], %203 {strides = array<i32>} : memref<18x512xf32, #tpu.memory_space<vmem>>, vector<2x32xf32>,
    %c0_377 = arith.constant 0 : index
    %c2_378 = arith.constant 2 : index
    %c3_379 = arith.constant 3 : index
    %c0_380 = arith.constant 0 : index
    %205 = vector.load %arg12[%c0_377, %c2_378, %c3_379, %c0_380] : memref<2x8x8x32xf32, #tpu.memory_space<vmem>>, vector<2x1x1x32xf32>
    %206 = vector.shape_cast %205 : vector<2x1x1x32xf32> to vector<2x32xf32>
    %c8_381 = arith.constant 8 : index
    %c32_382 = arith.constant 32 : index
    %207 = vector.load %arg13[%c8_381, %c32_382] : memref<18x512xf32, #tpu.memory_space<vmem>>, vector<2x32xf32>
    tpu.vector_store %arg13[%c8_381, %c32_382], %206 {strides = array<i32>} : memref<18x512xf32, #tpu.memory_space<vmem>>, vector<2x32xf32>,
    %c0_383 = arith.constant 0 : index
    %c2_384 = arith.constant 2 : index
    %c4_385 = arith.constant 4 : index
    %c0_386 = arith.constant 0 : index
    %208 = vector.load %arg12[%c0_383, %c2_384, %c4_385, %c0_386] : memref<2x8x8x32xf32, #tpu.memory_space<vmem>>, vector<2x1x1x32xf32>
    %209 = vector.shape_cast %208 : vector<2x1x1x32xf32> to vector<2x32xf32>
    %c8_387 = arith.constant 8 : index
    %c64_388 = arith.constant 64 : index
    %210 = vector.load %arg13[%c8_387, %c64_388] : memref<18x512xf32, #tpu.memory_space<vmem>>, vector<2x32xf32>
    tpu.vector_store %arg13[%c8_387, %c64_388], %209 {strides = array<i32>} : memref<18x512xf32, #tpu.memory_space<vmem>>, vector<2x32xf32>,
    %c0_389 = arith.constant 0 : index
    %c2_390 = arith.constant 2 : index
    %c5_391 = arith.constant 5 : index
    %c0_392 = arith.constant 0 : index
    %211 = vector.load %arg12[%c0_389, %c2_390, %c5_391, %c0_392] : memref<2x8x8x32xf32, #tpu.memory_space<vmem>>, vector<2x1x1x32xf32>
    %212 = vector.shape_cast %211 : vector<2x1x1x32xf32> to vector<2x32xf32>
    %c8_393 = arith.constant 8 : index
    %c96_394 = arith.constant 96 : index
    %213 = vector.load %arg13[%c8_393, %c96_394] : memref<18x512xf32, #tpu.memory_space<vmem>>, vector<2x32xf32>
    tpu.vector_store %arg13[%c8_393, %c96_394], %212 {strides = array<i32>} : memref<18x512xf32, #tpu.memory_space<vmem>>, vector<2x32xf32>,
    %c0_395 = arith.constant 0 : index
    %c3_396 = arith.constant 3 : index
    %c2_397 = arith.constant 2 : index
    %c0_398 = arith.constant 0 : index
    %214 = vector.load %arg12[%c0_395, %c3_396, %c2_397, %c0_398] : memref<2x8x8x32xf32, #tpu.memory_space<vmem>>, vector<2x1x1x32xf32>
    %215 = vector.shape_cast %214 : vector<2x1x1x32xf32> to vector<2x32xf32>
    %c8_399 = arith.constant 8 : index
    %c128_400 = arith.constant 128 : index
    %216 = vector.load %arg13[%c8_399, %c128_400] : memref<18x512xf32, #tpu.memory_space<vmem>>, vector<2x32xf32>
    tpu.vector_store %arg13[%c8_399, %c128_400], %215 {strides = array<i32>} : memref<18x512xf32, #tpu.memory_space<vmem>>, vector<2x32xf32>,
    %c0_401 = arith.constant 0 : index
    %c3_402 = arith.constant 3 : index
    %c3_403 = arith.constant 3 : index
    %c0_404 = arith.constant 0 : index
    %217 = vector.load %arg12[%c0_401, %c3_402, %c3_403, %c0_404] : memref<2x8x8x32xf32, #tpu.memory_space<vmem>>, vector<2x1x1x32xf32>
    %218 = vector.shape_cast %217 : vector<2x1x1x32xf32> to vector<2x32xf32>
    %c8_405 = arith.constant 8 : index
    %c160_406 = arith.constant 160 : index
    %219 = vector.load %arg13[%c8_405, %c160_406] : memref<18x512xf32, #tpu.memory_space<vmem>>, vector<2x32xf32>
    tpu.vector_store %arg13[%c8_405, %c160_406], %218 {strides = array<i32>} : memref<18x512xf32, #tpu.memory_space<vmem>>, vector<2x32xf32>,
    %c0_407 = arith.constant 0 : index
    %c3_408 = arith.constant 3 : index
    %c4_409 = arith.constant 4 : index
    %c0_410 = arith.constant 0 : index
    %220 = vector.load %arg12[%c0_407, %c3_408, %c4_409, %c0_410] : memref<2x8x8x32xf32, #tpu.memory_space<vmem>>, vector<2x1x1x32xf32>
    %221 = vector.shape_cast %220 : vector<2x1x1x32xf32> to vector<2x32xf32>
    %c8_411 = arith.constant 8 : index
    %c192_412 = arith.constant 192 : index
    %222 = vector.load %arg13[%c8_411, %c192_412] : memref<18x512xf32, #tpu.memory_space<vmem>>, vector<2x32xf32>
    tpu.vector_store %arg13[%c8_411, %c192_412], %221 {strides = array<i32>} : memref<18x512xf32, #tpu.memory_space<vmem>>, vector<2x32xf32>,
    %c0_413 = arith.constant 0 : index
    %c3_414 = arith.constant 3 : index
    %c5_415 = arith.constant 5 : index
    %c0_416 = arith.constant 0 : index
    %223 = vector.load %arg12[%c0_413, %c3_414, %c5_415, %c0_416] : memref<2x8x8x32xf32, #tpu.memory_space<vmem>>, vector<2x1x1x32xf32>
    %224 = vector.shape_cast %223 : vector<2x1x1x32xf32> to vector<2x32xf32>
    %c8_417 = arith.constant 8 : index
    %c224_418 = arith.constant 224 : index
    %225 = vector.load %arg13[%c8_417, %c224_418] : memref<18x512xf32, #tpu.memory_space<vmem>>, vector<2x32xf32>
    tpu.vector_store %arg13[%c8_417, %c224_418], %224 {strides = array<i32>} : memref<18x512xf32, #tpu.memory_space<vmem>>, vector<2x32xf32>,
    %c0_419 = arith.constant 0 : index
    %c4_420 = arith.constant 4 : index
    %c2_421 = arith.constant 2 : index
    %c0_422 = arith.constant 0 : index
    %226 = vector.load %arg12[%c0_419, %c4_420, %c2_421, %c0_422] : memref<2x8x8x32xf32, #tpu.memory_space<vmem>>, vector<2x1x1x32xf32>
    %227 = vector.shape_cast %226 : vector<2x1x1x32xf32> to vector<2x32xf32>
    %c8_423 = arith.constant 8 : index
    %c256_424 = arith.constant 256 : index
    %228 = vector.load %arg13[%c8_423, %c256_424] : memref<18x512xf32, #tpu.memory_space<vmem>>, vector<2x32xf32>
    tpu.vector_store %arg13[%c8_423, %c256_424], %227 {strides = array<i32>} : memref<18x512xf32, #tpu.memory_space<vmem>>, vector<2x32xf32>,
    %c0_425 = arith.constant 0 : index
    %c4_426 = arith.constant 4 : index
    %c3_427 = arith.constant 3 : index
    %c0_428 = arith.constant 0 : index
    %229 = vector.load %arg12[%c0_425, %c4_426, %c3_427, %c0_428] : memref<2x8x8x32xf32, #tpu.memory_space<vmem>>, vector<2x1x1x32xf32>
    %230 = vector.shape_cast %229 : vector<2x1x1x32xf32> to vector<2x32xf32>
    %c8_429 = arith.constant 8 : index
    %c288_430 = arith.constant 288 : index
    %231 = vector.load %arg13[%c8_429, %c288_430] : memref<18x512xf32, #tpu.memory_space<vmem>>, vector<2x32xf32>
    tpu.vector_store %arg13[%c8_429, %c288_430], %230 {strides = array<i32>} : memref<18x512xf32, #tpu.memory_space<vmem>>, vector<2x32xf32>,
    %c0_431 = arith.constant 0 : index
    %c4_432 = arith.constant 4 : index
    %c4_433 = arith.constant 4 : index
    %c0_434 = arith.constant 0 : index
    %232 = vector.load %arg12[%c0_431, %c4_432, %c4_433, %c0_434] : memref<2x8x8x32xf32, #tpu.memory_space<vmem>>, vector<2x1x1x32xf32>
    %233 = vector.shape_cast %232 : vector<2x1x1x32xf32> to vector<2x32xf32>
    %c8_435 = arith.constant 8 : index
    %c320_436 = arith.constant 320 : index
    %234 = vector.load %arg13[%c8_435, %c320_436] : memref<18x512xf32, #tpu.memory_space<vmem>>, vector<2x32xf32>
    tpu.vector_store %arg13[%c8_435, %c320_436], %233 {strides = array<i32>} : memref<18x512xf32, #tpu.memory_space<vmem>>, vector<2x32xf32>,
    %c0_437 = arith.constant 0 : index
    %c4_438 = arith.constant 4 : index
    %c5_439 = arith.constant 5 : index
    %c0_440 = arith.constant 0 : index
    %235 = vector.load %arg12[%c0_437, %c4_438, %c5_439, %c0_440] : memref<2x8x8x32xf32, #tpu.memory_space<vmem>>, vector<2x1x1x32xf32>
    %236 = vector.shape_cast %235 : vector<2x1x1x32xf32> to vector<2x32xf32>
    %c8_441 = arith.constant 8 : index
    %c352_442 = arith.constant 352 : index
    %237 = vector.load %arg13[%c8_441, %c352_442] : memref<18x512xf32, #tpu.memory_space<vmem>>, vector<2x32xf32>
    tpu.vector_store %arg13[%c8_441, %c352_442], %236 {strides = array<i32>} : memref<18x512xf32, #tpu.memory_space<vmem>>, vector<2x32xf32>,
    %c0_443 = arith.constant 0 : index
    %c5_444 = arith.constant 5 : index
    %c2_445 = arith.constant 2 : index
    %c0_446 = arith.constant 0 : index
    %238 = vector.load %arg12[%c0_443, %c5_444, %c2_445, %c0_446] : memref<2x8x8x32xf32, #tpu.memory_space<vmem>>, vector<2x1x1x32xf32>
    %239 = vector.shape_cast %238 : vector<2x1x1x32xf32> to vector<2x32xf32>
    %c8_447 = arith.constant 8 : index
    %c384_448 = arith.constant 384 : index
    %240 = vector.load %arg13[%c8_447, %c384_448] : memref<18x512xf32, #tpu.memory_space<vmem>>, vector<2x32xf32>
    tpu.vector_store %arg13[%c8_447, %c384_448], %239 {strides = array<i32>} : memref<18x512xf32, #tpu.memory_space<vmem>>, vector<2x32xf32>,
    %c0_449 = arith.constant 0 : index
    %c5_450 = arith.constant 5 : index
    %c3_451 = arith.constant 3 : index
    %c0_452 = arith.constant 0 : index
    %241 = vector.load %arg12[%c0_449, %c5_450, %c3_451, %c0_452] : memref<2x8x8x32xf32, #tpu.memory_space<vmem>>, vector<2x1x1x32xf32>
    %242 = vector.shape_cast %241 : vector<2x1x1x32xf32> to vector<2x32xf32>
    %c8_453 = arith.constant 8 : index
    %c416_454 = arith.constant 416 : index
    %243 = vector.load %arg13[%c8_453, %c416_454] : memref<18x512xf32, #tpu.memory_space<vmem>>, vector<2x32xf32>
    tpu.vector_store %arg13[%c8_453, %c416_454], %242 {strides = array<i32>} : memref<18x512xf32, #tpu.memory_space<vmem>>, vector<2x32xf32>,
    %c0_455 = arith.constant 0 : index
    %c5_456 = arith.constant 5 : index
    %c4_457 = arith.constant 4 : index
    %c0_458 = arith.constant 0 : index
    %244 = vector.load %arg12[%c0_455, %c5_456, %c4_457, %c0_458] : memref<2x8x8x32xf32, #tpu.memory_space<vmem>>, vector<2x1x1x32xf32>
    %245 = vector.shape_cast %244 : vector<2x1x1x32xf32> to vector<2x32xf32>
    %c8_459 = arith.constant 8 : index
    %c448_460 = arith.constant 448 : index
    %246 = vector.load %arg13[%c8_459, %c448_460] : memref<18x512xf32, #tpu.memory_space<vmem>>, vector<2x32xf32>
    tpu.vector_store %arg13[%c8_459, %c448_460], %245 {strides = array<i32>} : memref<18x512xf32, #tpu.memory_space<vmem>>, vector<2x32xf32>,
    %c0_461 = arith.constant 0 : index
    %c5_462 = arith.constant 5 : index
    %c5_463 = arith.constant 5 : index
    %c0_464 = arith.constant 0 : index
    %247 = vector.load %arg12[%c0_461, %c5_462, %c5_463, %c0_464] : memref<2x8x8x32xf32, #tpu.memory_space<vmem>>, vector<2x1x1x32xf32>
    %248 = vector.shape_cast %247 : vector<2x1x1x32xf32> to vector<2x32xf32>
    %c8_465 = arith.constant 8 : index
    %c480_466 = arith.constant 480 : index
    %249 = vector.load %arg13[%c8_465, %c480_466] : memref<18x512xf32, #tpu.memory_space<vmem>>, vector<2x32xf32>
    tpu.vector_store %arg13[%c8_465, %c480_466], %248 {strides = array<i32>} : memref<18x512xf32, #tpu.memory_space<vmem>>, vector<2x32xf32>,
    %c0_467 = arith.constant 0 : index
    %c2_468 = arith.constant 2 : index
    %c4_469 = arith.constant 4 : index
    %c0_470 = arith.constant 0 : index
    %250 = vector.load %arg12[%c0_467, %c2_468, %c4_469, %c0_470] : memref<2x8x8x32xf32, #tpu.memory_space<vmem>>, vector<2x1x1x32xf32>
    %251 = vector.shape_cast %250 : vector<2x1x1x32xf32> to vector<2x32xf32>
    %c10 = arith.constant 10 : index
    %c0_471 = arith.constant 0 : index
    %252 = vector.load %arg13[%c10, %c0_471] : memref<18x512xf32, #tpu.memory_space<vmem>>, vector<2x32xf32>
    tpu.vector_store %arg13[%c10, %c0_471], %251 {strides = array<i32>} : memref<18x512xf32, #tpu.memory_space<vmem>>, vector<2x32xf32>,
    %c0_472 = arith.constant 0 : index
    %c2_473 = arith.constant 2 : index
    %c5_474 = arith.constant 5 : index
    %c0_475 = arith.constant 0 : index
    %253 = vector.load %arg12[%c0_472, %c2_473, %c5_474, %c0_475] : memref<2x8x8x32xf32, #tpu.memory_space<vmem>>, vector<2x1x1x32xf32>
    %254 = vector.shape_cast %253 : vector<2x1x1x32xf32> to vector<2x32xf32>
    %c10_476 = arith.constant 10 : index
    %c32_477 = arith.constant 32 : index
    %255 = vector.load %arg13[%c10_476, %c32_477] : memref<18x512xf32, #tpu.memory_space<vmem>>, vector<2x32xf32>
    tpu.vector_store %arg13[%c10_476, %c32_477], %254 {strides = array<i32>} : memref<18x512xf32, #tpu.memory_space<vmem>>, vector<2x32xf32>,
    %c0_478 = arith.constant 0 : index
    %c2_479 = arith.constant 2 : index
    %c6_480 = arith.constant 6 : index
    %c0_481 = arith.constant 0 : index
    %256 = vector.load %arg12[%c0_478, %c2_479, %c6_480, %c0_481] : memref<2x8x8x32xf32, #tpu.memory_space<vmem>>, vector<2x1x1x32xf32>
    %257 = vector.shape_cast %256 : vector<2x1x1x32xf32> to vector<2x32xf32>
    %c10_482 = arith.constant 10 : index
    %c64_483 = arith.constant 64 : index
    %258 = vector.load %arg13[%c10_482, %c64_483] : memref<18x512xf32, #tpu.memory_space<vmem>>, vector<2x32xf32>
    tpu.vector_store %arg13[%c10_482, %c64_483], %257 {strides = array<i32>} : memref<18x512xf32, #tpu.memory_space<vmem>>, vector<2x32xf32>,
    %c0_484 = arith.constant 0 : index
    %c2_485 = arith.constant 2 : index
    %c7_486 = arith.constant 7 : index
    %c0_487 = arith.constant 0 : index
    %259 = vector.load %arg12[%c0_484, %c2_485, %c7_486, %c0_487] : memref<2x8x8x32xf32, #tpu.memory_space<vmem>>, vector<2x1x1x32xf32>
    %260 = vector.shape_cast %259 : vector<2x1x1x32xf32> to vector<2x32xf32>
    %c10_488 = arith.constant 10 : index
    %c96_489 = arith.constant 96 : index
    %261 = vector.load %arg13[%c10_488, %c96_489] : memref<18x512xf32, #tpu.memory_space<vmem>>, vector<2x32xf32>
    tpu.vector_store %arg13[%c10_488, %c96_489], %260 {strides = array<i32>} : memref<18x512xf32, #tpu.memory_space<vmem>>, vector<2x32xf32>,
    %c0_490 = arith.constant 0 : index
    %c3_491 = arith.constant 3 : index
    %c4_492 = arith.constant 4 : index
    %c0_493 = arith.constant 0 : index
    %262 = vector.load %arg12[%c0_490, %c3_491, %c4_492, %c0_493] : memref<2x8x8x32xf32, #tpu.memory_space<vmem>>, vector<2x1x1x32xf32>
    %263 = vector.shape_cast %262 : vector<2x1x1x32xf32> to vector<2x32xf32>
    %c10_494 = arith.constant 10 : index
    %c128_495 = arith.constant 128 : index
    %264 = vector.load %arg13[%c10_494, %c128_495] : memref<18x512xf32, #tpu.memory_space<vmem>>, vector<2x32xf32>
    tpu.vector_store %arg13[%c10_494, %c128_495], %263 {strides = array<i32>} : memref<18x512xf32, #tpu.memory_space<vmem>>, vector<2x32xf32>,
    %c0_496 = arith.constant 0 : index
    %c3_497 = arith.constant 3 : index
    %c5_498 = arith.constant 5 : index
    %c0_499 = arith.constant 0 : index
    %265 = vector.load %arg12[%c0_496, %c3_497, %c5_498, %c0_499] : memref<2x8x8x32xf32, #tpu.memory_space<vmem>>, vector<2x1x1x32xf32>
    %266 = vector.shape_cast %265 : vector<2x1x1x32xf32> to vector<2x32xf32>
    %c10_500 = arith.constant 10 : index
    %c160_501 = arith.constant 160 : index
    %267 = vector.load %arg13[%c10_500, %c160_501] : memref<18x512xf32, #tpu.memory_space<vmem>>, vector<2x32xf32>
    tpu.vector_store %arg13[%c10_500, %c160_501], %266 {strides = array<i32>} : memref<18x512xf32, #tpu.memory_space<vmem>>, vector<2x32xf32>,
    %c0_502 = arith.constant 0 : index
    %c3_503 = arith.constant 3 : index
    %c6_504 = arith.constant 6 : index
    %c0_505 = arith.constant 0 : index
    %268 = vector.load %arg12[%c0_502, %c3_503, %c6_504, %c0_505] : memref<2x8x8x32xf32, #tpu.memory_space<vmem>>, vector<2x1x1x32xf32>
    %269 = vector.shape_cast %268 : vector<2x1x1x32xf32> to vector<2x32xf32>
    %c10_506 = arith.constant 10 : index
    %c192_507 = arith.constant 192 : index
    %270 = vector.load %arg13[%c10_506, %c192_507] : memref<18x512xf32, #tpu.memory_space<vmem>>, vector<2x32xf32>
    tpu.vector_store %arg13[%c10_506, %c192_507], %269 {strides = array<i32>} : memref<18x512xf32, #tpu.memory_space<vmem>>, vector<2x32xf32>,
    %c0_508 = arith.constant 0 : index
    %c3_509 = arith.constant 3 : index
    %c7_510 = arith.constant 7 : index
    %c0_511 = arith.constant 0 : index
    %271 = vector.load %arg12[%c0_508, %c3_509, %c7_510, %c0_511] : memref<2x8x8x32xf32, #tpu.memory_space<vmem>>, vector<2x1x1x32xf32>
    %272 = vector.shape_cast %271 : vector<2x1x1x32xf32> to vector<2x32xf32>
    %c10_512 = arith.constant 10 : index
    %c224_513 = arith.constant 224 : index
    %273 = vector.load %arg13[%c10_512, %c224_513] : memref<18x512xf32, #tpu.memory_space<vmem>>, vector<2x32xf32>
    tpu.vector_store %arg13[%c10_512, %c224_513], %272 {strides = array<i32>} : memref<18x512xf32, #tpu.memory_space<vmem>>, vector<2x32xf32>,
    %c0_514 = arith.constant 0 : index
    %c4_515 = arith.constant 4 : index
    %c4_516 = arith.constant 4 : index
    %c0_517 = arith.constant 0 : index
    %274 = vector.load %arg12[%c0_514, %c4_515, %c4_516, %c0_517] : memref<2x8x8x32xf32, #tpu.memory_space<vmem>>, vector<2x1x1x32xf32>
    %275 = vector.shape_cast %274 : vector<2x1x1x32xf32> to vector<2x32xf32>
    %c10_518 = arith.constant 10 : index
    %c256_519 = arith.constant 256 : index
    %276 = vector.load %arg13[%c10_518, %c256_519] : memref<18x512xf32, #tpu.memory_space<vmem>>, vector<2x32xf32>
    tpu.vector_store %arg13[%c10_518, %c256_519], %275 {strides = array<i32>} : memref<18x512xf32, #tpu.memory_space<vmem>>, vector<2x32xf32>,
    %c0_520 = arith.constant 0 : index
    %c4_521 = arith.constant 4 : index
    %c5_522 = arith.constant 5 : index
    %c0_523 = arith.constant 0 : index
    %277 = vector.load %arg12[%c0_520, %c4_521, %c5_522, %c0_523] : memref<2x8x8x32xf32, #tpu.memory_space<vmem>>, vector<2x1x1x32xf32>
    %278 = vector.shape_cast %277 : vector<2x1x1x32xf32> to vector<2x32xf32>
    %c10_524 = arith.constant 10 : index
    %c288_525 = arith.constant 288 : index
    %279 = vector.load %arg13[%c10_524, %c288_525] : memref<18x512xf32, #tpu.memory_space<vmem>>, vector<2x32xf32>
    tpu.vector_store %arg13[%c10_524, %c288_525], %278 {strides = array<i32>} : memref<18x512xf32, #tpu.memory_space<vmem>>, vector<2x32xf32>,
    %c0_526 = arith.constant 0 : index
    %c4_527 = arith.constant 4 : index
    %c6_528 = arith.constant 6 : index
    %c0_529 = arith.constant 0 : index
    %280 = vector.load %arg12[%c0_526, %c4_527, %c6_528, %c0_529] : memref<2x8x8x32xf32, #tpu.memory_space<vmem>>, vector<2x1x1x32xf32>
    %281 = vector.shape_cast %280 : vector<2x1x1x32xf32> to vector<2x32xf32>
    %c10_530 = arith.constant 10 : index
    %c320_531 = arith.constant 320 : index
    %282 = vector.load %arg13[%c10_530, %c320_531] : memref<18x512xf32, #tpu.memory_space<vmem>>, vector<2x32xf32>
    tpu.vector_store %arg13[%c10_530, %c320_531], %281 {strides = array<i32>} : memref<18x512xf32, #tpu.memory_space<vmem>>, vector<2x32xf32>,
    %c0_532 = arith.constant 0 : index
    %c4_533 = arith.constant 4 : index
    %c7_534 = arith.constant 7 : index
    %c0_535 = arith.constant 0 : index
    %283 = vector.load %arg12[%c0_532, %c4_533, %c7_534, %c0_535] : memref<2x8x8x32xf32, #tpu.memory_space<vmem>>, vector<2x1x1x32xf32>
    %284 = vector.shape_cast %283 : vector<2x1x1x32xf32> to vector<2x32xf32>
    %c10_536 = arith.constant 10 : index
    %c352_537 = arith.constant 352 : index
    %285 = vector.load %arg13[%c10_536, %c352_537] : memref<18x512xf32, #tpu.memory_space<vmem>>, vector<2x32xf32>
    tpu.vector_store %arg13[%c10_536, %c352_537], %284 {strides = array<i32>} : memref<18x512xf32, #tpu.memory_space<vmem>>, vector<2x32xf32>,
    %c0_538 = arith.constant 0 : index
    %c5_539 = arith.constant 5 : index
    %c4_540 = arith.constant 4 : index
    %c0_541 = arith.constant 0 : index
    %286 = vector.load %arg12[%c0_538, %c5_539, %c4_540, %c0_541] : memref<2x8x8x32xf32, #tpu.memory_space<vmem>>, vector<2x1x1x32xf32>
    %287 = vector.shape_cast %286 : vector<2x1x1x32xf32> to vector<2x32xf32>
    %c10_542 = arith.constant 10 : index
    %c384_543 = arith.constant 384 : index
    %288 = vector.load %arg13[%c10_542, %c384_543] : memref<18x512xf32, #tpu.memory_space<vmem>>, vector<2x32xf32>
    tpu.vector_store %arg13[%c10_542, %c384_543], %287 {strides = array<i32>} : memref<18x512xf32, #tpu.memory_space<vmem>>, vector<2x32xf32>,
    %c0_544 = arith.constant 0 : index
    %c5_545 = arith.constant 5 : index
    %c5_546 = arith.constant 5 : index
    %c0_547 = arith.constant 0 : index
    %289 = vector.load %arg12[%c0_544, %c5_545, %c5_546, %c0_547] : memref<2x8x8x32xf32, #tpu.memory_space<vmem>>, vector<2x1x1x32xf32>
    %290 = vector.shape_cast %289 : vector<2x1x1x32xf32> to vector<2x32xf32>
    %c10_548 = arith.constant 10 : index
    %c416_549 = arith.constant 416 : index
    %291 = vector.load %arg13[%c10_548, %c416_549] : memref<18x512xf32, #tpu.memory_space<vmem>>, vector<2x32xf32>
    tpu.vector_store %arg13[%c10_548, %c416_549], %290 {strides = array<i32>} : memref<18x512xf32, #tpu.memory_space<vmem>>, vector<2x32xf32>,
    %c0_550 = arith.constant 0 : index
    %c5_551 = arith.constant 5 : index
    %c6_552 = arith.constant 6 : index
    %c0_553 = arith.constant 0 : index
    %292 = vector.load %arg12[%c0_550, %c5_551, %c6_552, %c0_553] : memref<2x8x8x32xf32, #tpu.memory_space<vmem>>, vector<2x1x1x32xf32>
    %293 = vector.shape_cast %292 : vector<2x1x1x32xf32> to vector<2x32xf32>
    %c10_554 = arith.constant 10 : index
    %c448_555 = arith.constant 448 : index
    %294 = vector.load %arg13[%c10_554, %c448_555] : memref<18x512xf32, #tpu.memory_space<vmem>>, vector<2x32xf32>
    tpu.vector_store %arg13[%c10_554, %c448_555], %293 {strides = array<i32>} : memref<18x512xf32, #tpu.memory_space<vmem>>, vector<2x32xf32>,
    %c0_556 = arith.constant 0 : index
    %c5_557 = arith.constant 5 : index
    %c7_558 = arith.constant 7 : index
    %c0_559 = arith.constant 0 : index
    %295 = vector.load %arg12[%c0_556, %c5_557, %c7_558, %c0_559] : memref<2x8x8x32xf32, #tpu.memory_space<vmem>>, vector<2x1x1x32xf32>
    %296 = vector.shape_cast %295 : vector<2x1x1x32xf32> to vector<2x32xf32>
    %c10_560 = arith.constant 10 : index
    %c480_561 = arith.constant 480 : index
    %297 = vector.load %arg13[%c10_560, %c480_561] : memref<18x512xf32, #tpu.memory_space<vmem>>, vector<2x32xf32>
    tpu.vector_store %arg13[%c10_560, %c480_561], %296 {strides = array<i32>} : memref<18x512xf32, #tpu.memory_space<vmem>>, vector<2x32xf32>,
    %c0_562 = arith.constant 0 : index
    %c4_563 = arith.constant 4 : index
    %c0_564 = arith.constant 0 : index
    %c0_565 = arith.constant 0 : index
    %298 = vector.load %arg12[%c0_562, %c4_563, %c0_564, %c0_565] : memref<2x8x8x32xf32, #tpu.memory_space<vmem>>, vector<2x1x1x32xf32>
    %299 = vector.shape_cast %298 : vector<2x1x1x32xf32> to vector<2x32xf32>
    %c12 = arith.constant 12 : index
    %c0_566 = arith.constant 0 : index
    %300 = vector.load %arg13[%c12, %c0_566] : memref<18x512xf32, #tpu.memory_space<vmem>>, vector<2x32xf32>
    tpu.vector_store %arg13[%c12, %c0_566], %299 {strides = array<i32>} : memref<18x512xf32, #tpu.memory_space<vmem>>, vector<2x32xf32>,
    %c0_567 = arith.constant 0 : index
    %c4_568 = arith.constant 4 : index
    %c1_569 = arith.constant 1 : index
    %c0_570 = arith.constant 0 : index
    %301 = vector.load %arg12[%c0_567, %c4_568, %c1_569, %c0_570] : memref<2x8x8x32xf32, #tpu.memory_space<vmem>>, vector<2x1x1x32xf32>
    %302 = vector.shape_cast %301 : vector<2x1x1x32xf32> to vector<2x32xf32>
    %c12_571 = arith.constant 12 : index
    %c32_572 = arith.constant 32 : index
    %303 = vector.load %arg13[%c12_571, %c32_572] : memref<18x512xf32, #tpu.memory_space<vmem>>, vector<2x32xf32>
    tpu.vector_store %arg13[%c12_571, %c32_572], %302 {strides = array<i32>} : memref<18x512xf32, #tpu.memory_space<vmem>>, vector<2x32xf32>,
    %c0_573 = arith.constant 0 : index
    %c4_574 = arith.constant 4 : index
    %c2_575 = arith.constant 2 : index
    %c0_576 = arith.constant 0 : index
    %304 = vector.load %arg12[%c0_573, %c4_574, %c2_575, %c0_576] : memref<2x8x8x32xf32, #tpu.memory_space<vmem>>, vector<2x1x1x32xf32>
    %305 = vector.shape_cast %304 : vector<2x1x1x32xf32> to vector<2x32xf32>
    %c12_577 = arith.constant 12 : index
    %c64_578 = arith.constant 64 : index
    %306 = vector.load %arg13[%c12_577, %c64_578] : memref<18x512xf32, #tpu.memory_space<vmem>>, vector<2x32xf32>
    tpu.vector_store %arg13[%c12_577, %c64_578], %305 {strides = array<i32>} : memref<18x512xf32, #tpu.memory_space<vmem>>, vector<2x32xf32>,
    %c0_579 = arith.constant 0 : index
    %c4_580 = arith.constant 4 : index
    %c3_581 = arith.constant 3 : index
    %c0_582 = arith.constant 0 : index
    %307 = vector.load %arg12[%c0_579, %c4_580, %c3_581, %c0_582] : memref<2x8x8x32xf32, #tpu.memory_space<vmem>>, vector<2x1x1x32xf32>
    %308 = vector.shape_cast %307 : vector<2x1x1x32xf32> to vector<2x32xf32>
    %c12_583 = arith.constant 12 : index
    %c96_584 = arith.constant 96 : index
    %309 = vector.load %arg13[%c12_583, %c96_584] : memref<18x512xf32, #tpu.memory_space<vmem>>, vector<2x32xf32>
    tpu.vector_store %arg13[%c12_583, %c96_584], %308 {strides = array<i32>} : memref<18x512xf32, #tpu.memory_space<vmem>>, vector<2x32xf32>,
    %c0_585 = arith.constant 0 : index
    %c5_586 = arith.constant 5 : index
    %c0_587 = arith.constant 0 : index
    %c0_588 = arith.constant 0 : index
    %310 = vector.load %arg12[%c0_585, %c5_586, %c0_587, %c0_588] : memref<2x8x8x32xf32, #tpu.memory_space<vmem>>, vector<2x1x1x32xf32>
    %311 = vector.shape_cast %310 : vector<2x1x1x32xf32> to vector<2x32xf32>
    %c12_589 = arith.constant 12 : index
    %c128_590 = arith.constant 128 : index
    %312 = vector.load %arg13[%c12_589, %c128_590] : memref<18x512xf32, #tpu.memory_space<vmem>>, vector<2x32xf32>
    tpu.vector_store %arg13[%c12_589, %c128_590], %311 {strides = array<i32>} : memref<18x512xf32, #tpu.memory_space<vmem>>, vector<2x32xf32>,
    %c0_591 = arith.constant 0 : index
    %c5_592 = arith.constant 5 : index
    %c1_593 = arith.constant 1 : index
    %c0_594 = arith.constant 0 : index
    %313 = vector.load %arg12[%c0_591, %c5_592, %c1_593, %c0_594] : memref<2x8x8x32xf32, #tpu.memory_space<vmem>>, vector<2x1x1x32xf32>
    %314 = vector.shape_cast %313 : vector<2x1x1x32xf32> to vector<2x32xf32>
    %c12_595 = arith.constant 12 : index
    %c160_596 = arith.constant 160 : index
    %315 = vector.load %arg13[%c12_595, %c160_596] : memref<18x512xf32, #tpu.memory_space<vmem>>, vector<2x32xf32>
    tpu.vector_store %arg13[%c12_595, %c160_596], %314 {strides = array<i32>} : memref<18x512xf32, #tpu.memory_space<vmem>>, vector<2x32xf32>,
    %c0_597 = arith.constant 0 : index
    %c5_598 = arith.constant 5 : index
    %c2_599 = arith.constant 2 : index
    %c0_600 = arith.constant 0 : index
    %316 = vector.load %arg12[%c0_597, %c5_598, %c2_599, %c0_600] : memref<2x8x8x32xf32, #tpu.memory_space<vmem>>, vector<2x1x1x32xf32>
    %317 = vector.shape_cast %316 : vector<2x1x1x32xf32> to vector<2x32xf32>
    %c12_601 = arith.constant 12 : index
    %c192_602 = arith.constant 192 : index
    %318 = vector.load %arg13[%c12_601, %c192_602] : memref<18x512xf32, #tpu.memory_space<vmem>>, vector<2x32xf32>
    tpu.vector_store %arg13[%c12_601, %c192_602], %317 {strides = array<i32>} : memref<18x512xf32, #tpu.memory_space<vmem>>, vector<2x32xf32>,
    %c0_603 = arith.constant 0 : index
    %c5_604 = arith.constant 5 : index
    %c3_605 = arith.constant 3 : index
    %c0_606 = arith.constant 0 : index
    %319 = vector.load %arg12[%c0_603, %c5_604, %c3_605, %c0_606] : memref<2x8x8x32xf32, #tpu.memory_space<vmem>>, vector<2x1x1x32xf32>
    %320 = vector.shape_cast %319 : vector<2x1x1x32xf32> to vector<2x32xf32>
    %c12_607 = arith.constant 12 : index
    %c224_608 = arith.constant 224 : index
    %321 = vector.load %arg13[%c12_607, %c224_608] : memref<18x512xf32, #tpu.memory_space<vmem>>, vector<2x32xf32>
    tpu.vector_store %arg13[%c12_607, %c224_608], %320 {strides = array<i32>} : memref<18x512xf32, #tpu.memory_space<vmem>>, vector<2x32xf32>,
    %c0_609 = arith.constant 0 : index
    %c6_610 = arith.constant 6 : index
    %c0_611 = arith.constant 0 : index
    %c0_612 = arith.constant 0 : index
    %322 = vector.load %arg12[%c0_609, %c6_610, %c0_611, %c0_612] : memref<2x8x8x32xf32, #tpu.memory_space<vmem>>, vector<2x1x1x32xf32>
    %323 = vector.shape_cast %322 : vector<2x1x1x32xf32> to vector<2x32xf32>
    %c12_613 = arith.constant 12 : index
    %c256_614 = arith.constant 256 : index
    %324 = vector.load %arg13[%c12_613, %c256_614] : memref<18x512xf32, #tpu.memory_space<vmem>>, vector<2x32xf32>
    tpu.vector_store %arg13[%c12_613, %c256_614], %323 {strides = array<i32>} : memref<18x512xf32, #tpu.memory_space<vmem>>, vector<2x32xf32>,
    %c0_615 = arith.constant 0 : index
    %c6_616 = arith.constant 6 : index
    %c1_617 = arith.constant 1 : index
    %c0_618 = arith.constant 0 : index
    %325 = vector.load %arg12[%c0_615, %c6_616, %c1_617, %c0_618] : memref<2x8x8x32xf32, #tpu.memory_space<vmem>>, vector<2x1x1x32xf32>
    %326 = vector.shape_cast %325 : vector<2x1x1x32xf32> to vector<2x32xf32>
    %c12_619 = arith.constant 12 : index
    %c288_620 = arith.constant 288 : index
    %327 = vector.load %arg13[%c12_619, %c288_620] : memref<18x512xf32, #tpu.memory_space<vmem>>, vector<2x32xf32>
    tpu.vector_store %arg13[%c12_619, %c288_620], %326 {strides = array<i32>} : memref<18x512xf32, #tpu.memory_space<vmem>>, vector<2x32xf32>,
    %c0_621 = arith.constant 0 : index
    %c6_622 = arith.constant 6 : index
    %c2_623 = arith.constant 2 : index
    %c0_624 = arith.constant 0 : index
    %328 = vector.load %arg12[%c0_621, %c6_622, %c2_623, %c0_624] : memref<2x8x8x32xf32, #tpu.memory_space<vmem>>, vector<2x1x1x32xf32>
    %329 = vector.shape_cast %328 : vector<2x1x1x32xf32> to vector<2x32xf32>
    %c12_625 = arith.constant 12 : index
    %c320_626 = arith.constant 320 : index
    %330 = vector.load %arg13[%c12_625, %c320_626] : memref<18x512xf32, #tpu.memory_space<vmem>>, vector<2x32xf32>
    tpu.vector_store %arg13[%c12_625, %c320_626], %329 {strides = array<i32>} : memref<18x512xf32, #tpu.memory_space<vmem>>, vector<2x32xf32>,
    %c0_627 = arith.constant 0 : index
    %c6_628 = arith.constant 6 : index
    %c3_629 = arith.constant 3 : index
    %c0_630 = arith.constant 0 : index
    %331 = vector.load %arg12[%c0_627, %c6_628, %c3_629, %c0_630] : memref<2x8x8x32xf32, #tpu.memory_space<vmem>>, vector<2x1x1x32xf32>
    %332 = vector.shape_cast %331 : vector<2x1x1x32xf32> to vector<2x32xf32>
    %c12_631 = arith.constant 12 : index
    %c352_632 = arith.constant 352 : index
    %333 = vector.load %arg13[%c12_631, %c352_632] : memref<18x512xf32, #tpu.memory_space<vmem>>, vector<2x32xf32>
    tpu.vector_store %arg13[%c12_631, %c352_632], %332 {strides = array<i32>} : memref<18x512xf32, #tpu.memory_space<vmem>>, vector<2x32xf32>,
    %c0_633 = arith.constant 0 : index
    %c7_634 = arith.constant 7 : index
    %c0_635 = arith.constant 0 : index
    %c0_636 = arith.constant 0 : index
    %334 = vector.load %arg12[%c0_633, %c7_634, %c0_635, %c0_636] : memref<2x8x8x32xf32, #tpu.memory_space<vmem>>, vector<2x1x1x32xf32>
    %335 = vector.shape_cast %334 : vector<2x1x1x32xf32> to vector<2x32xf32>
    %c12_637 = arith.constant 12 : index
    %c384_638 = arith.constant 384 : index
    %336 = vector.load %arg13[%c12_637, %c384_638] : memref<18x512xf32, #tpu.memory_space<vmem>>, vector<2x32xf32>
    tpu.vector_store %arg13[%c12_637, %c384_638], %335 {strides = array<i32>} : memref<18x512xf32, #tpu.memory_space<vmem>>, vector<2x32xf32>,
    %c0_639 = arith.constant 0 : index
    %c7_640 = arith.constant 7 : index
    %c1_641 = arith.constant 1 : index
    %c0_642 = arith.constant 0 : index
    %337 = vector.load %arg12[%c0_639, %c7_640, %c1_641, %c0_642] : memref<2x8x8x32xf32, #tpu.memory_space<vmem>>, vector<2x1x1x32xf32>
    %338 = vector.shape_cast %337 : vector<2x1x1x32xf32> to vector<2x32xf32>
    %c12_643 = arith.constant 12 : index
    %c416_644 = arith.constant 416 : index
    %339 = vector.load %arg13[%c12_643, %c416_644] : memref<18x512xf32, #tpu.memory_space<vmem>>, vector<2x32xf32>
    tpu.vector_store %arg13[%c12_643, %c416_644], %338 {strides = array<i32>} : memref<18x512xf32, #tpu.memory_space<vmem>>, vector<2x32xf32>,
    %c0_645 = arith.constant 0 : index
    %c7_646 = arith.constant 7 : index
    %c2_647 = arith.constant 2 : index
    %c0_648 = arith.constant 0 : index
    %340 = vector.load %arg12[%c0_645, %c7_646, %c2_647, %c0_648] : memref<2x8x8x32xf32, #tpu.memory_space<vmem>>, vector<2x1x1x32xf32>
    %341 = vector.shape_cast %340 : vector<2x1x1x32xf32> to vector<2x32xf32>
    %c12_649 = arith.constant 12 : index
    %c448_650 = arith.constant 448 : index
    %342 = vector.load %arg13[%c12_649, %c448_650] : memref<18x512xf32, #tpu.memory_space<vmem>>, vector<2x32xf32>
    tpu.vector_store %arg13[%c12_649, %c448_650], %341 {strides = array<i32>} : memref<18x512xf32, #tpu.memory_space<vmem>>, vector<2x32xf32>,
    %c0_651 = arith.constant 0 : index
    %c7_652 = arith.constant 7 : index
    %c3_653 = arith.constant 3 : index
    %c0_654 = arith.constant 0 : index
    %343 = vector.load %arg12[%c0_651, %c7_652, %c3_653, %c0_654] : memref<2x8x8x32xf32, #tpu.memory_space<vmem>>, vector<2x1x1x32xf32>
    %344 = vector.shape_cast %343 : vector<2x1x1x32xf32> to vector<2x32xf32>
    %c12_655 = arith.constant 12 : index
    %c480_656 = arith.constant 480 : index
    %345 = vector.load %arg13[%c12_655, %c480_656] : memref<18x512xf32, #tpu.memory_space<vmem>>, vector<2x32xf32>
    tpu.vector_store %arg13[%c12_655, %c480_656], %344 {strides = array<i32>} : memref<18x512xf32, #tpu.memory_space<vmem>>, vector<2x32xf32>,
    %c0_657 = arith.constant 0 : index
    %c4_658 = arith.constant 4 : index
    %c2_659 = arith.constant 2 : index
    %c0_660 = arith.constant 0 : index
    %346 = vector.load %arg12[%c0_657, %c4_658, %c2_659, %c0_660] : memref<2x8x8x32xf32, #tpu.memory_space<vmem>>, vector<2x1x1x32xf32>
    %347 = vector.shape_cast %346 : vector<2x1x1x32xf32> to vector<2x32xf32>
    %c14 = arith.constant 14 : index
    %c0_661 = arith.constant 0 : index
    %348 = vector.load %arg13[%c14, %c0_661] : memref<18x512xf32, #tpu.memory_space<vmem>>, vector<2x32xf32>
    tpu.vector_store %arg13[%c14, %c0_661], %347 {strides = array<i32>} : memref<18x512xf32, #tpu.memory_space<vmem>>, vector<2x32xf32>,
    %c0_662 = arith.constant 0 : index
    %c4_663 = arith.constant 4 : index
    %c3_664 = arith.constant 3 : index
    %c0_665 = arith.constant 0 : index
    %349 = vector.load %arg12[%c0_662, %c4_663, %c3_664, %c0_665] : memref<2x8x8x32xf32, #tpu.memory_space<vmem>>, vector<2x1x1x32xf32>
    %350 = vector.shape_cast %349 : vector<2x1x1x32xf32> to vector<2x32xf32>
    %c14_666 = arith.constant 14 : index
    %c32_667 = arith.constant 32 : index
    %351 = vector.load %arg13[%c14_666, %c32_667] : memref<18x512xf32, #tpu.memory_space<vmem>>, vector<2x32xf32>
    tpu.vector_store %arg13[%c14_666, %c32_667], %350 {strides = array<i32>} : memref<18x512xf32, #tpu.memory_space<vmem>>, vector<2x32xf32>,
    %c0_668 = arith.constant 0 : index
    %c4_669 = arith.constant 4 : index
    %c4_670 = arith.constant 4 : index
    %c0_671 = arith.constant 0 : index
    %352 = vector.load %arg12[%c0_668, %c4_669, %c4_670, %c0_671] : memref<2x8x8x32xf32, #tpu.memory_space<vmem>>, vector<2x1x1x32xf32>
    %353 = vector.shape_cast %352 : vector<2x1x1x32xf32> to vector<2x32xf32>
    %c14_672 = arith.constant 14 : index
    %c64_673 = arith.constant 64 : index
    %354 = vector.load %arg13[%c14_672, %c64_673] : memref<18x512xf32, #tpu.memory_space<vmem>>, vector<2x32xf32>
    tpu.vector_store %arg13[%c14_672, %c64_673], %353 {strides = array<i32>} : memref<18x512xf32, #tpu.memory_space<vmem>>, vector<2x32xf32>,
    %c0_674 = arith.constant 0 : index
    %c4_675 = arith.constant 4 : index
    %c5_676 = arith.constant 5 : index
    %c0_677 = arith.constant 0 : index
    %355 = vector.load %arg12[%c0_674, %c4_675, %c5_676, %c0_677] : memref<2x8x8x32xf32, #tpu.memory_space<vmem>>, vector<2x1x1x32xf32>
    %356 = vector.shape_cast %355 : vector<2x1x1x32xf32> to vector<2x32xf32>
    %c14_678 = arith.constant 14 : index
    %c96_679 = arith.constant 96 : index
    %357 = vector.load %arg13[%c14_678, %c96_679] : memref<18x512xf32, #tpu.memory_space<vmem>>, vector<2x32xf32>
    tpu.vector_store %arg13[%c14_678, %c96_679], %356 {strides = array<i32>} : memref<18x512xf32, #tpu.memory_space<vmem>>, vector<2x32xf32>,
    %c0_680 = arith.constant 0 : index
    %c5_681 = arith.constant 5 : index
    %c2_682 = arith.constant 2 : index
    %c0_683 = arith.constant 0 : index
    %358 = vector.load %arg12[%c0_680, %c5_681, %c2_682, %c0_683] : memref<2x8x8x32xf32, #tpu.memory_space<vmem>>, vector<2x1x1x32xf32>
    %359 = vector.shape_cast %358 : vector<2x1x1x32xf32> to vector<2x32xf32>
    %c14_684 = arith.constant 14 : index
    %c128_685 = arith.constant 128 : index
    %360 = vector.load %arg13[%c14_684, %c128_685] : memref<18x512xf32, #tpu.memory_space<vmem>>, vector<2x32xf32>
    tpu.vector_store %arg13[%c14_684, %c128_685], %359 {strides = array<i32>} : memref<18x512xf32, #tpu.memory_space<vmem>>, vector<2x32xf32>,
    %c0_686 = arith.constant 0 : index
    %c5_687 = arith.constant 5 : index
    %c3_688 = arith.constant 3 : index
    %c0_689 = arith.constant 0 : index
    %361 = vector.load %arg12[%c0_686, %c5_687, %c3_688, %c0_689] : memref<2x8x8x32xf32, #tpu.memory_space<vmem>>, vector<2x1x1x32xf32>
    %362 = vector.shape_cast %361 : vector<2x1x1x32xf32> to vector<2x32xf32>
    %c14_690 = arith.constant 14 : index
    %c160_691 = arith.constant 160 : index
    %363 = vector.load %arg13[%c14_690, %c160_691] : memref<18x512xf32, #tpu.memory_space<vmem>>, vector<2x32xf32>
    tpu.vector_store %arg13[%c14_690, %c160_691], %362 {strides = array<i32>} : memref<18x512xf32, #tpu.memory_space<vmem>>, vector<2x32xf32>,
    %c0_692 = arith.constant 0 : index
    %c5_693 = arith.constant 5 : index
    %c4_694 = arith.constant 4 : index
    %c0_695 = arith.constant 0 : index
    %364 = vector.load %arg12[%c0_692, %c5_693, %c4_694, %c0_695] : memref<2x8x8x32xf32, #tpu.memory_space<vmem>>, vector<2x1x1x32xf32>
    %365 = vector.shape_cast %364 : vector<2x1x1x32xf32> to vector<2x32xf32>
    %c14_696 = arith.constant 14 : index
    %c192_697 = arith.constant 192 : index
    %366 = vector.load %arg13[%c14_696, %c192_697] : memref<18x512xf32, #tpu.memory_space<vmem>>, vector<2x32xf32>
    tpu.vector_store %arg13[%c14_696, %c192_697], %365 {strides = array<i32>} : memref<18x512xf32, #tpu.memory_space<vmem>>, vector<2x32xf32>,
    %c0_698 = arith.constant 0 : index
    %c5_699 = arith.constant 5 : index
    %c5_700 = arith.constant 5 : index
    %c0_701 = arith.constant 0 : index
    %367 = vector.load %arg12[%c0_698, %c5_699, %c5_700, %c0_701] : memref<2x8x8x32xf32, #tpu.memory_space<vmem>>, vector<2x1x1x32xf32>
    %368 = vector.shape_cast %367 : vector<2x1x1x32xf32> to vector<2x32xf32>
    %c14_702 = arith.constant 14 : index
    %c224_703 = arith.constant 224 : index
    %369 = vector.load %arg13[%c14_702, %c224_703] : memref<18x512xf32, #tpu.memory_space<vmem>>, vector<2x32xf32>
    tpu.vector_store %arg13[%c14_702, %c224_703], %368 {strides = array<i32>} : memref<18x512xf32, #tpu.memory_space<vmem>>, vector<2x32xf32>,
    %c0_704 = arith.constant 0 : index
    %c6_705 = arith.constant 6 : index
    %c2_706 = arith.constant 2 : index
    %c0_707 = arith.constant 0 : index
    %370 = vector.load %arg12[%c0_704, %c6_705, %c2_706, %c0_707] : memref<2x8x8x32xf32, #tpu.memory_space<vmem>>, vector<2x1x1x32xf32>
    %371 = vector.shape_cast %370 : vector<2x1x1x32xf32> to vector<2x32xf32>
    %c14_708 = arith.constant 14 : index
    %c256_709 = arith.constant 256 : index
    %372 = vector.load %arg13[%c14_708, %c256_709] : memref<18x512xf32, #tpu.memory_space<vmem>>, vector<2x32xf32>
    tpu.vector_store %arg13[%c14_708, %c256_709], %371 {strides = array<i32>} : memref<18x512xf32, #tpu.memory_space<vmem>>, vector<2x32xf32>,
    %c0_710 = arith.constant 0 : index
    %c6_711 = arith.constant 6 : index
    %c3_712 = arith.constant 3 : index
    %c0_713 = arith.constant 0 : index
    %373 = vector.load %arg12[%c0_710, %c6_711, %c3_712, %c0_713] : memref<2x8x8x32xf32, #tpu.memory_space<vmem>>, vector<2x1x1x32xf32>
    %374 = vector.shape_cast %373 : vector<2x1x1x32xf32> to vector<2x32xf32>
    %c14_714 = arith.constant 14 : index
    %c288_715 = arith.constant 288 : index
    %375 = vector.load %arg13[%c14_714, %c288_715] : memref<18x512xf32, #tpu.memory_space<vmem>>, vector<2x32xf32>
    tpu.vector_store %arg13[%c14_714, %c288_715], %374 {strides = array<i32>} : memref<18x512xf32, #tpu.memory_space<vmem>>, vector<2x32xf32>,
    %c0_716 = arith.constant 0 : index
    %c6_717 = arith.constant 6 : index
    %c4_718 = arith.constant 4 : index
    %c0_719 = arith.constant 0 : index
    %376 = vector.load %arg12[%c0_716, %c6_717, %c4_718, %c0_719] : memref<2x8x8x32xf32, #tpu.memory_space<vmem>>, vector<2x1x1x32xf32>
    %377 = vector.shape_cast %376 : vector<2x1x1x32xf32> to vector<2x32xf32>
    %c14_720 = arith.constant 14 : index
    %c320_721 = arith.constant 320 : index
    %378 = vector.load %arg13[%c14_720, %c320_721] : memref<18x512xf32, #tpu.memory_space<vmem>>, vector<2x32xf32>
    tpu.vector_store %arg13[%c14_720, %c320_721], %377 {strides = array<i32>} : memref<18x512xf32, #tpu.memory_space<vmem>>, vector<2x32xf32>,
    %c0_722 = arith.constant 0 : index
    %c6_723 = arith.constant 6 : index
    %c5_724 = arith.constant 5 : index
    %c0_725 = arith.constant 0 : index
    %379 = vector.load %arg12[%c0_722, %c6_723, %c5_724, %c0_725] : memref<2x8x8x32xf32, #tpu.memory_space<vmem>>, vector<2x1x1x32xf32>
    %380 = vector.shape_cast %379 : vector<2x1x1x32xf32> to vector<2x32xf32>
    %c14_726 = arith.constant 14 : index
    %c352_727 = arith.constant 352 : index
    %381 = vector.load %arg13[%c14_726, %c352_727] : memref<18x512xf32, #tpu.memory_space<vmem>>, vector<2x32xf32>
    tpu.vector_store %arg13[%c14_726, %c352_727], %380 {strides = array<i32>} : memref<18x512xf32, #tpu.memory_space<vmem>>, vector<2x32xf32>,
    %c0_728 = arith.constant 0 : index
    %c7_729 = arith.constant 7 : index
    %c2_730 = arith.constant 2 : index
    %c0_731 = arith.constant 0 : index
    %382 = vector.load %arg12[%c0_728, %c7_729, %c2_730, %c0_731] : memref<2x8x8x32xf32, #tpu.memory_space<vmem>>, vector<2x1x1x32xf32>
    %383 = vector.shape_cast %382 : vector<2x1x1x32xf32> to vector<2x32xf32>
    %c14_732 = arith.constant 14 : index
    %c384_733 = arith.constant 384 : index
    %384 = vector.load %arg13[%c14_732, %c384_733] : memref<18x512xf32, #tpu.memory_space<vmem>>, vector<2x32xf32>
    tpu.vector_store %arg13[%c14_732, %c384_733], %383 {strides = array<i32>} : memref<18x512xf32, #tpu.memory_space<vmem>>, vector<2x32xf32>,
    %c0_734 = arith.constant 0 : index
    %c7_735 = arith.constant 7 : index
    %c3_736 = arith.constant 3 : index
    %c0_737 = arith.constant 0 : index
    %385 = vector.load %arg12[%c0_734, %c7_735, %c3_736, %c0_737] : memref<2x8x8x32xf32, #tpu.memory_space<vmem>>, vector<2x1x1x32xf32>
    %386 = vector.shape_cast %385 : vector<2x1x1x32xf32> to vector<2x32xf32>
    %c14_738 = arith.constant 14 : index
    %c416_739 = arith.constant 416 : index
    %387 = vector.load %arg13[%c14_738, %c416_739] : memref<18x512xf32, #tpu.memory_space<vmem>>, vector<2x32xf32>
    tpu.vector_store %arg13[%c14_738, %c416_739], %386 {strides = array<i32>} : memref<18x512xf32, #tpu.memory_space<vmem>>, vector<2x32xf32>,
    %c0_740 = arith.constant 0 : index
    %c7_741 = arith.constant 7 : index
    %c4_742 = arith.constant 4 : index
    %c0_743 = arith.constant 0 : index
    %388 = vector.load %arg12[%c0_740, %c7_741, %c4_742, %c0_743] : memref<2x8x8x32xf32, #tpu.memory_space<vmem>>, vector<2x1x1x32xf32>
    %389 = vector.shape_cast %388 : vector<2x1x1x32xf32> to vector<2x32xf32>
    %c14_744 = arith.constant 14 : index
    %c448_745 = arith.constant 448 : index
    %390 = vector.load %arg13[%c14_744, %c448_745] : memref<18x512xf32, #tpu.memory_space<vmem>>, vector<2x32xf32>
    tpu.vector_store %arg13[%c14_744, %c448_745], %389 {strides = array<i32>} : memref<18x512xf32, #tpu.memory_space<vmem>>, vector<2x32xf32>,
    %c0_746 = arith.constant 0 : index
    %c7_747 = arith.constant 7 : index
    %c5_748 = arith.constant 5 : index
    %c0_749 = arith.constant 0 : index
    %391 = vector.load %arg12[%c0_746, %c7_747, %c5_748, %c0_749] : memref<2x8x8x32xf32, #tpu.memory_space<vmem>>, vector<2x1x1x32xf32>
    %392 = vector.shape_cast %391 : vector<2x1x1x32xf32> to vector<2x32xf32>
    %c14_750 = arith.constant 14 : index
    %c480_751 = arith.constant 480 : index
    %393 = vector.load %arg13[%c14_750, %c480_751] : memref<18x512xf32, #tpu.memory_space<vmem>>, vector<2x32xf32>
    tpu.vector_store %arg13[%c14_750, %c480_751], %392 {strides = array<i32>} : memref<18x512xf32, #tpu.memory_space<vmem>>, vector<2x32xf32>,
    %c0_752 = arith.constant 0 : index
    %c4_753 = arith.constant 4 : index
    %c4_754 = arith.constant 4 : index
    %c0_755 = arith.constant 0 : index
    %394 = vector.load %arg12[%c0_752, %c4_753, %c4_754, %c0_755] : memref<2x8x8x32xf32, #tpu.memory_space<vmem>>, vector<2x1x1x32xf32>
    %395 = vector.shape_cast %394 : vector<2x1x1x32xf32> to vector<2x32xf32>
    %c16 = arith.constant 16 : index
    %c0_756 = arith.constant 0 : index
    %396 = vector.load %arg13[%c16, %c0_756] : memref<18x512xf32, #tpu.memory_space<vmem>>, vector<2x32xf32>
    tpu.vector_store %arg13[%c16, %c0_756], %395 {strides = array<i32>} : memref<18x512xf32, #tpu.memory_space<vmem>>, vector<2x32xf32>,
    %c0_757 = arith.constant 0 : index
    %c4_758 = arith.constant 4 : index
    %c5_759 = arith.constant 5 : index
    %c0_760 = arith.constant 0 : index
    %397 = vector.load %arg12[%c0_757, %c4_758, %c5_759, %c0_760] : memref<2x8x8x32xf32, #tpu.memory_space<vmem>>, vector<2x1x1x32xf32>
    %398 = vector.shape_cast %397 : vector<2x1x1x32xf32> to vector<2x32xf32>
    %c16_761 = arith.constant 16 : index
    %c32_762 = arith.constant 32 : index
    %399 = vector.load %arg13[%c16_761, %c32_762] : memref<18x512xf32, #tpu.memory_space<vmem>>, vector<2x32xf32>
    tpu.vector_store %arg13[%c16_761, %c32_762], %398 {strides = array<i32>} : memref<18x512xf32, #tpu.memory_space<vmem>>, vector<2x32xf32>,
    %c0_763 = arith.constant 0 : index
    %c4_764 = arith.constant 4 : index
    %c6_765 = arith.constant 6 : index
    %c0_766 = arith.constant 0 : index
    %400 = vector.load %arg12[%c0_763, %c4_764, %c6_765, %c0_766] : memref<2x8x8x32xf32, #tpu.memory_space<vmem>>, vector<2x1x1x32xf32>
    %401 = vector.shape_cast %400 : vector<2x1x1x32xf32> to vector<2x32xf32>
    %c16_767 = arith.constant 16 : index
    %c64_768 = arith.constant 64 : index
    %402 = vector.load %arg13[%c16_767, %c64_768] : memref<18x512xf32, #tpu.memory_space<vmem>>, vector<2x32xf32>
    tpu.vector_store %arg13[%c16_767, %c64_768], %401 {strides = array<i32>} : memref<18x512xf32, #tpu.memory_space<vmem>>, vector<2x32xf32>,
    %c0_769 = arith.constant 0 : index
    %c4_770 = arith.constant 4 : index
    %c7_771 = arith.constant 7 : index
    %c0_772 = arith.constant 0 : index
    %403 = vector.load %arg12[%c0_769, %c4_770, %c7_771, %c0_772] : memref<2x8x8x32xf32, #tpu.memory_space<vmem>>, vector<2x1x1x32xf32>
    %404 = vector.shape_cast %403 : vector<2x1x1x32xf32> to vector<2x32xf32>
    %c16_773 = arith.constant 16 : index
    %c96_774 = arith.constant 96 : index
    %405 = vector.load %arg13[%c16_773, %c96_774] : memref<18x512xf32, #tpu.memory_space<vmem>>, vector<2x32xf32>
    tpu.vector_store %arg13[%c16_773, %c96_774], %404 {strides = array<i32>} : memref<18x512xf32, #tpu.memory_space<vmem>>, vector<2x32xf32>,
    %c0_775 = arith.constant 0 : index
    %c5_776 = arith.constant 5 : index
    %c4_777 = arith.constant 4 : index
    %c0_778 = arith.constant 0 : index
    %406 = vector.load %arg12[%c0_775, %c5_776, %c4_777, %c0_778] : memref<2x8x8x32xf32, #tpu.memory_space<vmem>>, vector<2x1x1x32xf32>
    %407 = vector.shape_cast %406 : vector<2x1x1x32xf32> to vector<2x32xf32>
    %c16_779 = arith.constant 16 : index
    %c128_780 = arith.constant 128 : index
    %408 = vector.load %arg13[%c16_779, %c128_780] : memref<18x512xf32, #tpu.memory_space<vmem>>, vector<2x32xf32>
    tpu.vector_store %arg13[%c16_779, %c128_780], %407 {strides = array<i32>} : memref<18x512xf32, #tpu.memory_space<vmem>>, vector<2x32xf32>,
    %c0_781 = arith.constant 0 : index
    %c5_782 = arith.constant 5 : index
    %c5_783 = arith.constant 5 : index
    %c0_784 = arith.constant 0 : index
    %409 = vector.load %arg12[%c0_781, %c5_782, %c5_783, %c0_784] : memref<2x8x8x32xf32, #tpu.memory_space<vmem>>, vector<2x1x1x32xf32>
    %410 = vector.shape_cast %409 : vector<2x1x1x32xf32> to vector<2x32xf32>
    %c16_785 = arith.constant 16 : index
    %c160_786 = arith.constant 160 : index
    %411 = vector.load %arg13[%c16_785, %c160_786] : memref<18x512xf32, #tpu.memory_space<vmem>>, vector<2x32xf32>
    tpu.vector_store %arg13[%c16_785, %c160_786], %410 {strides = array<i32>} : memref<18x512xf32, #tpu.memory_space<vmem>>, vector<2x32xf32>,
    %c0_787 = arith.constant 0 : index
    %c5_788 = arith.constant 5 : index
    %c6_789 = arith.constant 6 : index
    %c0_790 = arith.constant 0 : index
    %412 = vector.load %arg12[%c0_787, %c5_788, %c6_789, %c0_790] : memref<2x8x8x32xf32, #tpu.memory_space<vmem>>, vector<2x1x1x32xf32>
    %413 = vector.shape_cast %412 : vector<2x1x1x32xf32> to vector<2x32xf32>
    %c16_791 = arith.constant 16 : index
    %c192_792 = arith.constant 192 : index
    %414 = vector.load %arg13[%c16_791, %c192_792] : memref<18x512xf32, #tpu.memory_space<vmem>>, vector<2x32xf32>
    tpu.vector_store %arg13[%c16_791, %c192_792], %413 {strides = array<i32>} : memref<18x512xf32, #tpu.memory_space<vmem>>, vector<2x32xf32>,
    %c0_793 = arith.constant 0 : index
    %c5_794 = arith.constant 5 : index
    %c7_795 = arith.constant 7 : index
    %c0_796 = arith.constant 0 : index
    %415 = vector.load %arg12[%c0_793, %c5_794, %c7_795, %c0_796] : memref<2x8x8x32xf32, #tpu.memory_space<vmem>>, vector<2x1x1x32xf32>
    %416 = vector.shape_cast %415 : vector<2x1x1x32xf32> to vector<2x32xf32>
    %c16_797 = arith.constant 16 : index
    %c224_798 = arith.constant 224 : index
    %417 = vector.load %arg13[%c16_797, %c224_798] : memref<18x512xf32, #tpu.memory_space<vmem>>, vector<2x32xf32>
    tpu.vector_store %arg13[%c16_797, %c224_798], %416 {strides = array<i32>} : memref<18x512xf32, #tpu.memory_space<vmem>>, vector<2x32xf32>,
    %c0_799 = arith.constant 0 : index
    %c6_800 = arith.constant 6 : index
    %c4_801 = arith.constant 4 : index
    %c0_802 = arith.constant 0 : index
    %418 = vector.load %arg12[%c0_799, %c6_800, %c4_801, %c0_802] : memref<2x8x8x32xf32, #tpu.memory_space<vmem>>, vector<2x1x1x32xf32>
    %419 = vector.shape_cast %418 : vector<2x1x1x32xf32> to vector<2x32xf32>
    %c16_803 = arith.constant 16 : index
    %c256_804 = arith.constant 256 : index
    %420 = vector.load %arg13[%c16_803, %c256_804] : memref<18x512xf32, #tpu.memory_space<vmem>>, vector<2x32xf32>
    tpu.vector_store %arg13[%c16_803, %c256_804], %419 {strides = array<i32>} : memref<18x512xf32, #tpu.memory_space<vmem>>, vector<2x32xf32>,
    %c0_805 = arith.constant 0 : index
    %c6_806 = arith.constant 6 : index
    %c5_807 = arith.constant 5 : index
    %c0_808 = arith.constant 0 : index
    %421 = vector.load %arg12[%c0_805, %c6_806, %c5_807, %c0_808] : memref<2x8x8x32xf32, #tpu.memory_space<vmem>>, vector<2x1x1x32xf32>
    %422 = vector.shape_cast %421 : vector<2x1x1x32xf32> to vector<2x32xf32>
    %c16_809 = arith.constant 16 : index
    %c288_810 = arith.constant 288 : index
    %423 = vector.load %arg13[%c16_809, %c288_810] : memref<18x512xf32, #tpu.memory_space<vmem>>, vector<2x32xf32>
    tpu.vector_store %arg13[%c16_809, %c288_810], %422 {strides = array<i32>} : memref<18x512xf32, #tpu.memory_space<vmem>>, vector<2x32xf32>,
    %c0_811 = arith.constant 0 : index
    %c6_812 = arith.constant 6 : index
    %c6_813 = arith.constant 6 : index
    %c0_814 = arith.constant 0 : index
    %424 = vector.load %arg12[%c0_811, %c6_812, %c6_813, %c0_814] : memref<2x8x8x32xf32, #tpu.memory_space<vmem>>, vector<2x1x1x32xf32>
    %425 = vector.shape_cast %424 : vector<2x1x1x32xf32> to vector<2x32xf32>
    %c16_815 = arith.constant 16 : index
    %c320_816 = arith.constant 320 : index
    %426 = vector.load %arg13[%c16_815, %c320_816] : memref<18x512xf32, #tpu.memory_space<vmem>>, vector<2x32xf32>
    tpu.vector_store %arg13[%c16_815, %c320_816], %425 {strides = array<i32>} : memref<18x512xf32, #tpu.memory_space<vmem>>, vector<2x32xf32>,
    %c0_817 = arith.constant 0 : index
    %c6_818 = arith.constant 6 : index
    %c7_819 = arith.constant 7 : index
    %c0_820 = arith.constant 0 : index
    %427 = vector.load %arg12[%c0_817, %c6_818, %c7_819, %c0_820] : memref<2x8x8x32xf32, #tpu.memory_space<vmem>>, vector<2x1x1x32xf32>
    %428 = vector.shape_cast %427 : vector<2x1x1x32xf32> to vector<2x32xf32>
    %c16_821 = arith.constant 16 : index
    %c352_822 = arith.constant 352 : index
    %429 = vector.load %arg13[%c16_821, %c352_822] : memref<18x512xf32, #tpu.memory_space<vmem>>, vector<2x32xf32>
    tpu.vector_store %arg13[%c16_821, %c352_822], %428 {strides = array<i32>} : memref<18x512xf32, #tpu.memory_space<vmem>>, vector<2x32xf32>,
    %c0_823 = arith.constant 0 : index
    %c7_824 = arith.constant 7 : index
    %c4_825 = arith.constant 4 : index
    %c0_826 = arith.constant 0 : index
    %430 = vector.load %arg12[%c0_823, %c7_824, %c4_825, %c0_826] : memref<2x8x8x32xf32, #tpu.memory_space<vmem>>, vector<2x1x1x32xf32>
    %431 = vector.shape_cast %430 : vector<2x1x1x32xf32> to vector<2x32xf32>
    %c16_827 = arith.constant 16 : index
    %c384_828 = arith.constant 384 : index
    %432 = vector.load %arg13[%c16_827, %c384_828] : memref<18x512xf32, #tpu.memory_space<vmem>>, vector<2x32xf32>
    tpu.vector_store %arg13[%c16_827, %c384_828], %431 {strides = array<i32>} : memref<18x512xf32, #tpu.memory_space<vmem>>, vector<2x32xf32>,
    %c0_829 = arith.constant 0 : index
    %c7_830 = arith.constant 7 : index
    %c5_831 = arith.constant 5 : index
    %c0_832 = arith.constant 0 : index
    %433 = vector.load %arg12[%c0_829, %c7_830, %c5_831, %c0_832] : memref<2x8x8x32xf32, #tpu.memory_space<vmem>>, vector<2x1x1x32xf32>
    %434 = vector.shape_cast %433 : vector<2x1x1x32xf32> to vector<2x32xf32>
    %c16_833 = arith.constant 16 : index
    %c416_834 = arith.constant 416 : index
    %435 = vector.load %arg13[%c16_833, %c416_834] : memref<18x512xf32, #tpu.memory_space<vmem>>, vector<2x32xf32>
    tpu.vector_store %arg13[%c16_833, %c416_834], %434 {strides = array<i32>} : memref<18x512xf32, #tpu.memory_space<vmem>>, vector<2x32xf32>,
    %c0_835 = arith.constant 0 : index
    %c7_836 = arith.constant 7 : index
    %c6_837 = arith.constant 6 : index
    %c0_838 = arith.constant 0 : index
    %436 = vector.load %arg12[%c0_835, %c7_836, %c6_837, %c0_838] : memref<2x8x8x32xf32, #tpu.memory_space<vmem>>, vector<2x1x1x32xf32>
    %437 = vector.shape_cast %436 : vector<2x1x1x32xf32> to vector<2x32xf32>
    %c16_839 = arith.constant 16 : index
    %c448_840 = arith.constant 448 : index
    %438 = vector.load %arg13[%c16_839, %c448_840] : memref<18x512xf32, #tpu.memory_space<vmem>>, vector<2x32xf32>
    tpu.vector_store %arg13[%c16_839, %c448_840], %437 {strides = array<i32>} : memref<18x512xf32, #tpu.memory_space<vmem>>, vector<2x32xf32>,
    %c0_841 = arith.constant 0 : index
    %c7_842 = arith.constant 7 : index
    %c7_843 = arith.constant 7 : index
    %c0_844 = arith.constant 0 : index
    %439 = vector.load %arg12[%c0_841, %c7_842, %c7_843, %c0_844] : memref<2x8x8x32xf32, #tpu.memory_space<vmem>>, vector<2x1x1x32xf32>
    %440 = vector.shape_cast %439 : vector<2x1x1x32xf32> to vector<2x32xf32>
    %c16_845 = arith.constant 16 : index
    %c480_846 = arith.constant 480 : index
    %441 = vector.load %arg13[%c16_845, %c480_846] : memref<18x512xf32, #tpu.memory_space<vmem>>, vector<2x32xf32>
    tpu.vector_store %arg13[%c16_845, %c480_846], %440 {strides = array<i32>} : memref<18x512xf32, #tpu.memory_space<vmem>>, vector<2x32xf32>,
    %c0_847 = arith.constant 0 : index
    %c0_848 = arith.constant 0 : index
    %442 = vector.load %arg13[%c0_847, %c0_848] : memref<18x512xf32, #tpu.memory_space<vmem>>, vector<18x512xf32>
    %c0_849 = arith.constant 0 : index
    %c0_850 = arith.constant 0 : index
    %443 = vector.load %arg5[%c0_849, %c0_850] : memref<512x64xf32, #tpu.memory_space<vmem>>, vector<512x64xf32>
    %cst_851 = arith.constant dense<0.000000e+00> : vector<18x64xf32>
    %444 = tpu.matmul %442, %443, %cst_851 {dimension_numbers = #tpu.dot_dimension_numbers<[1], [0], [0], [1], [0, 0, 1, 1], [], []>} : vector<18x512xf32>, vector<512x64xf32>, vector<18x64xf32> -> vector<18x64xf32>
    %c0_852 = arith.constant 0 : index
    %c0_853 = arith.constant 0 : index
    %445 = vector.load %arg6[%c0_852, %c0_853] : memref<1x64xf32, #tpu.memory_space<vmem>>, vector<1x64xf32>
    %446 = vector.broadcast %445 : vector<1x64xf32> to vector<18x64xf32>
    %447 = arith.addf %444, %446 : vector<18x64xf32>
    %cst_854 = arith.constant 0.000000e+00 : f32
    %448 = vector.broadcast %cst_854 : f32 to vector<18x64xf32>
    %449 = arith.maximumf %447, %448 : vector<18x64xf32>
    %c0_855 = arith.constant 0 : index
    %c0_856 = arith.constant 0 : index
    %450 = vector.load %arg14[%c0_855, %c0_856] : memref<18x64xf32, #tpu.memory_space<vmem>>, vector<18x64xf32>
    tpu.vector_store %arg14[%c0_855, %c0_856], %449 {strides = array<i32>} : memref<18x64xf32, #tpu.memory_space<vmem>>, vector<18x64xf32>,
    %c0_857 = arith.constant 0 : index
    %c0_858 = arith.constant 0 : index
    %451 = vector.load %arg14[%c0_857, %c0_858] : memref<18x64xf32, #tpu.memory_space<vmem>>, vector<2x64xf32>
    %c0_859 = arith.constant 0 : index
    %c0_860 = arith.constant 0 : index
    %452 = vector.load %arg15[%c0_859, %c0_860] : memref<2x576xf32, #tpu.memory_space<vmem>>, vector<2x64xf32>
    tpu.vector_store %arg15[%c0_859, %c0_860], %451 {strides = array<i32>} : memref<2x576xf32, #tpu.memory_space<vmem>>, vector<2x64xf32>,
    %c2_861 = arith.constant 2 : index
    %c0_862 = arith.constant 0 : index
    %453 = vector.load %arg14[%c2_861, %c0_862] : memref<18x64xf32, #tpu.memory_space<vmem>>, vector<2x64xf32>
    %c0_863 = arith.constant 0 : index
    %c64_864 = arith.constant 64 : index
    %454 = vector.load %arg15[%c0_863, %c64_864] : memref<2x576xf32, #tpu.memory_space<vmem>>, vector<2x64xf32>
    tpu.vector_store %arg15[%c0_863, %c64_864], %453 {strides = array<i32>} : memref<2x576xf32, #tpu.memory_space<vmem>>, vector<2x64xf32>,
    %c4_865 = arith.constant 4 : index
    %c0_866 = arith.constant 0 : index
    %455 = vector.load %arg14[%c4_865, %c0_866] : memref<18x64xf32, #tpu.memory_space<vmem>>, vector<2x64xf32>
    %c0_867 = arith.constant 0 : index
    %c128_868 = arith.constant 128 : index
    %456 = vector.load %arg15[%c0_867, %c128_868] : memref<2x576xf32, #tpu.memory_space<vmem>>, vector<2x64xf32>
    tpu.vector_store %arg15[%c0_867, %c128_868], %455 {strides = array<i32>} : memref<2x576xf32, #tpu.memory_space<vmem>>, vector<2x64xf32>,
    %c6_869 = arith.constant 6 : index
    %c0_870 = arith.constant 0 : index
    %457 = vector.load %arg14[%c6_869, %c0_870] : memref<18x64xf32, #tpu.memory_space<vmem>>, vector<2x64xf32>
    %c0_871 = arith.constant 0 : index
    %c192_872 = arith.constant 192 : index
    %458 = vector.load %arg15[%c0_871, %c192_872] : memref<2x576xf32, #tpu.memory_space<vmem>>, vector<2x64xf32>
    tpu.vector_store %arg15[%c0_871, %c192_872], %457 {strides = array<i32>} : memref<2x576xf32, #tpu.memory_space<vmem>>, vector<2x64xf32>,
    %c8_873 = arith.constant 8 : index
    %c0_874 = arith.constant 0 : index
    %459 = vector.load %arg14[%c8_873, %c0_874] : memref<18x64xf32, #tpu.memory_space<vmem>>, vector<2x64xf32>
    %c0_875 = arith.constant 0 : index
    %c256_876 = arith.constant 256 : index
    %460 = vector.load %arg15[%c0_875, %c256_876] : memref<2x576xf32, #tpu.memory_space<vmem>>, vector<2x64xf32>
    tpu.vector_store %arg15[%c0_875, %c256_876], %459 {strides = array<i32>} : memref<2x576xf32, #tpu.memory_space<vmem>>, vector<2x64xf32>,
    %c10_877 = arith.constant 10 : index
    %c0_878 = arith.constant 0 : index
    %461 = vector.load %arg14[%c10_877, %c0_878] : memref<18x64xf32, #tpu.memory_space<vmem>>, vector<2x64xf32>
    %c0_879 = arith.constant 0 : index
    %c320_880 = arith.constant 320 : index
    %462 = vector.load %arg15[%c0_879, %c320_880] : memref<2x576xf32, #tpu.memory_space<vmem>>, vector<2x64xf32>
    tpu.vector_store %arg15[%c0_879, %c320_880], %461 {strides = array<i32>} : memref<2x576xf32, #tpu.memory_space<vmem>>, vector<2x64xf32>,
    %c12_881 = arith.constant 12 : index
    %c0_882 = arith.constant 0 : index
    %463 = vector.load %arg14[%c12_881, %c0_882] : memref<18x64xf32, #tpu.memory_space<vmem>>, vector<2x64xf32>
    %c0_883 = arith.constant 0 : index
    %c384_884 = arith.constant 384 : index
    %464 = vector.load %arg15[%c0_883, %c384_884] : memref<2x576xf32, #tpu.memory_space<vmem>>, vector<2x64xf32>
    tpu.vector_store %arg15[%c0_883, %c384_884], %463 {strides = array<i32>} : memref<2x576xf32, #tpu.memory_space<vmem>>, vector<2x64xf32>,
    %c14_885 = arith.constant 14 : index
    %c0_886 = arith.constant 0 : index
    %465 = vector.load %arg14[%c14_885, %c0_886] : memref<18x64xf32, #tpu.memory_space<vmem>>, vector<2x64xf32>
    %c0_887 = arith.constant 0 : index
    %c448_888 = arith.constant 448 : index
    %466 = vector.load %arg15[%c0_887, %c448_888] : memref<2x576xf32, #tpu.memory_space<vmem>>, vector<2x64xf32>
    tpu.vector_store %arg15[%c0_887, %c448_888], %465 {strides = array<i32>} : memref<2x576xf32, #tpu.memory_space<vmem>>, vector<2x64xf32>,
    %c16_889 = arith.constant 16 : index
    %c0_890 = arith.constant 0 : index
    %467 = vector.load %arg14[%c16_889, %c0_890] : memref<18x64xf32, #tpu.memory_space<vmem>>, vector<2x64xf32>
    %c0_891 = arith.constant 0 : index
    %c512 = arith.constant 512 : index
    %468 = vector.load %arg15[%c0_891, %c512] : memref<2x576xf32, #tpu.memory_space<vmem>>, vector<2x64xf32>
    tpu.vector_store %arg15[%c0_891, %c512], %467 {strides = array<i32>} : memref<2x576xf32, #tpu.memory_space<vmem>>, vector<2x64xf32>,
    %c0_892 = arith.constant 0 : index
    %c0_893 = arith.constant 0 : index
    %469 = vector.load %arg15[%c0_892, %c0_893] : memref<2x576xf32, #tpu.memory_space<vmem>>, vector<2x576xf32>
    %c0_894 = arith.constant 0 : index
    %c0_895 = arith.constant 0 : index
    %470 = vector.load %arg7[%c0_894, %c0_895] : memref<576x64xf32, #tpu.memory_space<vmem>>, vector<576x64xf32>
    %cst_896 = arith.constant dense<0.000000e+00> : vector<2x64xf32>
    %471 = tpu.matmul %469, %470, %cst_896 {dimension_numbers = #tpu.dot_dimension_numbers<[1], [0], [0], [1], [0, 0, 1, 1], [], []>} : vector<2x576xf32>, vector<576x64xf32>, vector<2x64xf32> -> vector<2x64xf32>
    %c0_897 = arith.constant 0 : index
    %c0_898 = arith.constant 0 : index
    %472 = vector.load %arg8[%c0_897, %c0_898] : memref<1x64xf32, #tpu.memory_space<vmem>>, vector<1x64xf32>
    %473 = vector.broadcast %472 : vector<1x64xf32> to vector<2x64xf32>
    %474 = arith.addf %471, %473 : vector<2x64xf32>
    %cst_899 = arith.constant 0.000000e+00 : f32
    %475 = vector.broadcast %cst_899 : f32 to vector<2x64xf32>
    %476 = arith.maximumf %474, %475 : vector<2x64xf32>
    %c0_900 = arith.constant 0 : index
    %c0_901 = arith.constant 0 : index
    %477 = vector.load %arg16[%c0_900, %c0_901] : memref<2x72xf32, #tpu.memory_space<vmem>>, vector<2x64xf32>
    tpu.vector_store %arg16[%c0_900, %c0_901], %476 {strides = array<i32>} : memref<2x72xf32, #tpu.memory_space<vmem>>, vector<2x64xf32>,
    %c0_902 = arith.constant 0 : index
    %c0_903 = arith.constant 0 : index
    %478 = vector.load %arg2[%c0_902, %c0_903] : memref<2x8xf32, #tpu.memory_space<vmem>>, vector<2x8xf32>
    %c0_904 = arith.constant 0 : index
    %c64_905 = arith.constant 64 : index
    %479 = vector.load %arg16[%c0_904, %c64_905] : memref<2x72xf32, #tpu.memory_space<vmem>>, vector<2x8xf32>
    tpu.vector_store %arg16[%c0_904, %c64_905], %478 {strides = array<i32>} : memref<2x72xf32, #tpu.memory_space<vmem>>, vector<2x8xf32>,
    %c0_906 = arith.constant 0 : index
    %c0_907 = arith.constant 0 : index
    %480 = vector.load %arg16[%c0_906, %c0_907] : memref<2x72xf32, #tpu.memory_space<vmem>>, vector<2x72xf32>
    %c0_908 = arith.constant 0 : index
    %c0_909 = arith.constant 0 : index
    %481 = vector.load %arg9[%c0_908, %c0_909] : memref<72x320xf32, #tpu.memory_space<vmem>>, vector<72x320xf32>
    %cst_910 = arith.constant dense<0.000000e+00> : vector<2x320xf32>
    %482 = tpu.matmul %480, %481, %cst_910 {dimension_numbers = #tpu.dot_dimension_numbers<[1], [0], [0], [1], [0, 0, 1, 1], [], []>} : vector<2x72xf32>, vector<72x320xf32>, vector<2x320xf32> -> vector<2x320xf32>
    %c0_911 = arith.constant 0 : index
    %c0_912 = arith.constant 0 : index
    %483 = vector.load %arg10[%c0_911, %c0_912] : memref<1x320xf32, #tpu.memory_space<vmem>>, vector<1x320xf32>
    %484 = vector.broadcast %483 : vector<1x320xf32> to vector<2x320xf32>
    %485 = arith.addf %482, %484 : vector<2x320xf32>
    %486 = tpu.iota {dimensions = array<i32: 1>} : vector<2x320xi32>
    %c256_i32 = arith.constant 256 : i32
    %487 = vector.broadcast %c256_i32 : i32 to vector<2x320xi32>
    %488 = arith.cmpi slt, %486, %487 : vector<2x320xi32>
    %cst_913 = arith.constant 0.000000e+00 : f32
    %489 = vector.broadcast %cst_913 : f32 to vector<2x320xf32>
    %490 = arith.maximumf %485, %489 : vector<2x320xf32>
    %491 = arith.select %488, %490, %485 : vector<2x320xi1>, vector<2x320xf32>
    %c0_914 = arith.constant 0 : index
    %c0_915 = arith.constant 0 : index
    %492 = vector.load %arg11[%c0_914, %c0_915] : memref<2x320xf32, #tpu.memory_space<vmem>>, vector<2x320xf32>
    tpu.vector_store %arg11[%c0_914, %c0_915], %491 {strides = array<i32>} : memref<2x320xf32, #tpu.memory_space<vmem>>, vector<2x320xf32>,
    return
  }
  func.func @transform_0(%arg0: i32) -> (i32, i32) {
    %c0_i32 = arith.constant 0 : i32
    %c0_i32_0 = arith.constant 0 : i32
    return %arg0, %c0_i32 : i32, i32
  }
  func.func @transform_1(%arg0: i32) -> (i32, i32) {
    %c0_i32 = arith.constant 0 : i32
    %c0_i32_0 = arith.constant 0 : i32
    return %arg0, %c0_i32 : i32, i32
  }
  func.func @transform_2(%arg0: i32) -> (i32, i32) {
    %c0_i32 = arith.constant 0 : i32
    %c0_i32_0 = arith.constant 0 : i32
    %c0_i32_1 = arith.constant 0 : i32
    return %c0_i32, %c0_i32_0 : i32, i32
  }
  func.func @transform_3(%arg0: i32) -> (i32, i32) {
    %c0_i32 = arith.constant 0 : i32
    %c0_i32_0 = arith.constant 0 : i32
    %c0_i32_1 = arith.constant 0 : i32
    return %c0_i32, %c0_i32_0 : i32, i32
  }
  func.func @transform_4(%arg0: i32) -> (i32, i32) {
    %c0_i32 = arith.constant 0 : i32
    %c0_i32_0 = arith.constant 0 : i32
    %c0_i32_1 = arith.constant 0 : i32
    return %c0_i32, %c0_i32_0 : i32, i32
  }
  func.func @transform_5(%arg0: i32) -> (i32, i32) {
    %c0_i32 = arith.constant 0 : i32
    %c0_i32_0 = arith.constant 0 : i32
    %c0_i32_1 = arith.constant 0 : i32
    return %c0_i32, %c0_i32_0 : i32, i32
  }
  func.func @transform_6(%arg0: i32) -> (i32, i32) {
    %c0_i32 = arith.constant 0 : i32
    %c0_i32_0 = arith.constant 0 : i32
    %c0_i32_1 = arith.constant 0 : i32
    return %c0_i32, %c0_i32_0 : i32, i32
  }
  func.func @transform_7(%arg0: i32) -> (i32, i32) {
    %c0_i32 = arith.constant 0 : i32
    %c0_i32_0 = arith.constant 0 : i32
    %c0_i32_1 = arith.constant 0 : i32
    return %c0_i32, %c0_i32_0 : i32, i32
  }
  func.func @transform_8(%arg0: i32) -> (i32, i32) {
    %c0_i32 = arith.constant 0 : i32
    %c0_i32_0 = arith.constant 0 : i32
    %c0_i32_1 = arith.constant 0 : i32
    return %c0_i32, %c0_i32_0 : i32, i32
  }
  func.func @transform_9(%arg0: i32) -> (i32, i32) {
    %c0_i32 = arith.constant 0 : i32
    %c0_i32_0 = arith.constant 0 : i32
    %c0_i32_1 = arith.constant 0 : i32
    return %c0_i32, %c0_i32_0 : i32, i32
  }
  func.func @transform_10(%arg0: i32) -> (i32, i32) {
    %c0_i32 = arith.constant 0 : i32
    %c0_i32_0 = arith.constant 0 : i32
    return %arg0, %c0_i32 : i32, i32
  }
}

</mosaic_0001>

<llo_original>
// kernel: nature_cnn_forward.1
$region0: #{nature_cnn_forward.1}
  #allocation0 [shape = 'u32[]', space=smem, size = 0x4, offset = 0x4, fixed_abs, tag = 'smem constant byte address 0x4 - core index']
  #allocation1 [shape = 'u32[144,128]{1,0:T(1,128)}', space=vmem, size = 0x12000, scoped, tag = 'internal scratch']
  #allocation2 [shape = 'f32[2,8,8,32]{3,2,1,0:T(8,128)}', space=vmem, size = 0x10000, scoped, tag = 'scratch operand']
  #allocation3 [shape = 'f32[18,512]{1,0:T(8,128)}', space=vmem, size = 0xc000, scoped, tag = 'scratch operand']
  #allocation4 [shape = 'f32[18,64]{1,0:T(8,128)}', space=vmem, size = 0x3000, scoped, tag = 'scratch operand']
  #allocation5 [shape = 'f32[2,576]{1,0:T(2,128)}', space=vmem, size = 0x1400, scoped, tag = 'scratch operand']
  #allocation6 [shape = 'f32[2,72]{1,0:T(2,128)}', space=vmem, size = 0x400, scoped, tag = 'scratch operand']
  %s0 = inlined_call_operand.vmem [shape: f32[128,256], index: 0, kind: input, shape index: {}]
  %s1 = inlined_call_operand.vmem [shape: f32[2,8], index: 1, kind: input, shape index: {}]
  %s2 = inlined_call_operand.vmem [shape: f32[256,32], index: 2, kind: input, shape index: {}]
  %s3 = inlined_call_operand.vmem [shape: f32[1,32], index: 3, kind: input, shape index: {}]
  %s4 = inlined_call_operand.vmem [shape: f32[512,64], index: 4, kind: input, shape index: {}]
  %s5 = inlined_call_operand.vmem [shape: f32[1,64], index: 5, kind: input, shape index: {}]
  %s6 = inlined_call_operand.vmem [shape: f32[576,64], index: 6, kind: input, shape index: {}]
  %s7 = inlined_call_operand.vmem [shape: f32[1,64], index: 7, kind: input, shape index: {}]
  %s8 = inlined_call_operand.vmem [shape: f32[72,320], index: 8, kind: input, shape index: {}]
  %s9 = inlined_call_operand.vmem [shape: f32[1,320], index: 9, kind: input, shape index: {}]
  %s10 = inlined_call_operand.hbm [shape: f32[2,320], index: 10, kind: output, shape index: {}]
  %s11 = sld [smem:[#allocation0]]
  $region50: #{nature_cnn_forward.1} parent=0
    _
  %s13 = ssub.s32 1, %s11
  %s14 = scalar_select 0, %s13, %s11
  $region1: #{nature_cnn_forward.1} parent=0
    #allocation7 [shape = 'u8[3072]{0}', space=vmem, size = 0xc00, scoped, tag = 'output window, operand 0, single buffered']
    #allocation8 [shape = 's32[1]{0}', space=sflag, size = 0x4, scoped, tag = 'scoped memory for nature_cnn_forward.1']
    %15 = vsyncpa [#allocation8], 0
    // Predicated region
    $region2: #{nature_cnn_forward.1} parent=1 // pred_check
      _
    $region3: #{nature_cnn_forward.1} parent=1 // pred_check_branch
      %17 = sbr.rel (0) target = $region5
    $region4: #{nature_cnn_forward.1} parent=1 // pred_region
      _
    $region5: #{nature_cnn_forward.1} parent=1 // pred_fallthru
      _
    // Predicated region
    $region6: #{nature_cnn_forward.1} parent=1 // pred_check
      _
    $region7: #{nature_cnn_forward.1} parent=1 // pred_check_branch
      %19 = sbr.rel (0) target = $region9
    $region8: #{nature_cnn_forward.1} parent=1 // pred_region
      _
    $region9: #{nature_cnn_forward.1} parent=1 // pred_fallthru
      _
    // Predicated region
    $region10: #{nature_cnn_forward.1} parent=1 // pred_check
      _
    $region11: #{nature_cnn_forward.1} parent=1 // pred_check_branch
      %21 = sbr.rel (0) target = $region13
    $region12: #{nature_cnn_forward.1} parent=1 // pred_region
      _
    $region13: #{nature_cnn_forward.1} parent=1 // pred_fallthru
      _
    // Predicated region
    $region14: #{nature_cnn_forward.1} parent=1 // pred_check
      _
    $region15: #{nature_cnn_forward.1} parent=1 // pred_check_branch
      %23 = sbr.rel (0) target = $region17
    $region16: #{nature_cnn_forward.1} parent=1 // pred_region
      _
    $region17: #{nature_cnn_forward.1} parent=1 // pred_fallthru
      _
    // Predicated region
    $region18: #{nature_cnn_forward.1} parent=1 // pred_check
      _
    $region19: #{nature_cnn_forward.1} parent=1 // pred_check_branch
      %25 = sbr.rel (0) target = $region21
    $region20: #{nature_cnn_forward.1} parent=1 // pred_region
      _
    $region21: #{nature_cnn_forward.1} parent=1 // pred_fallthru
      _
    // Predicated region
    $region22: #{nature_cnn_forward.1} parent=1 // pred_check
      _
    $region23: #{nature_cnn_forward.1} parent=1 // pred_check_branch
      %27 = sbr.rel (0) target = $region25
    $region24: #{nature_cnn_forward.1} parent=1 // pred_region
      _
    $region25: #{nature_cnn_forward.1} parent=1 // pred_fallthru
      _
    // Predicated region
    $region26: #{nature_cnn_forward.1} parent=1 // pred_check
      _
    $region27: #{nature_cnn_forward.1} parent=1 // pred_check_branch
      %29 = sbr.rel (0) target = $region29
    $region28: #{nature_cnn_forward.1} parent=1 // pred_region
      _
    $region29: #{nature_cnn_forward.1} parent=1 // pred_fallthru
      _
    // Predicated region
    $region30: #{nature_cnn_forward.1} parent=1 // pred_check
      _
    $region31: #{nature_cnn_forward.1} parent=1 // pred_check_branch
      %31 = sbr.rel (0) target = $region33
    $region32: #{nature_cnn_forward.1} parent=1 // pred_region
      _
    $region33: #{nature_cnn_forward.1} parent=1 // pred_fallthru
      _
    // Predicated region
    $region34: #{nature_cnn_forward.1} parent=1 // pred_check
      _
    $region35: #{nature_cnn_forward.1} parent=1 // pred_check_branch
      %33 = sbr.rel (0) target = $region37
    $region36: #{nature_cnn_forward.1} parent=1 // pred_region
      _
    $region37: #{nature_cnn_forward.1} parent=1 // pred_fallthru
      _
    // Predicated region
    $region38: #{nature_cnn_forward.1} parent=1 // pred_check
      _
    $region39: #{nature_cnn_forward.1} parent=1 // pred_check_branch
      %35 = sbr.rel (0) target = $region41
    $region40: #{nature_cnn_forward.1} parent=1 // pred_region
      _
    $region41: #{nature_cnn_forward.1} parent=1 // pred_fallthru
      _
    %v36 = vld [vmem:[%s0] sm:$0xff]
    %v37 = vld [vmem:[%s0 + $0x8] sm:$0xff]
    %v38 = vld [vmem:[%s0 + $0x10] sm:$0xff]
    %v39 = vld [vmem:[%s0 + $0x18] sm:$0xff]
    %v40 = vld [vmem:[%s0 + $0x20] sm:$0xff]
    %v41 = vld [vmem:[%s0 + $0x28] sm:$0xff]
    %v42 = vld [vmem:[%s0 + $0x30] sm:$0xff]
    %v43 = vld [vmem:[%s0 + $0x38] sm:$0xff]
    %v44 = vld [vmem:[%s0 + $0x40] sm:$0xff]
    %v45 = vld [vmem:[%s0 + $0x48] sm:$0xff]
    %v46 = vld [vmem:[%s0 + $0x50] sm:$0xff]
    %v47 = vld [vmem:[%s0 + $0x58] sm:$0xff]
    %v48 = vld [vmem:[%s0 + $0x60] sm:$0xff]
    %v49 = vld [vmem:[%s0 + $0x68] sm:$0xff]
    %v50 = vld [vmem:[%s0 + $0x70] sm:$0xff]
    %v51 = vld [vmem:[%s0 + $0x78] sm:$0xff]
    %v52 = vld [vmem:[%s0 + $0x80] sm:$0xff]
    %v53 = vld [vmem:[%s0 + $0x88] sm:$0xff]
    %v54 = vld [vmem:[%s0 + $0x90] sm:$0xff]
    %v55 = vld [vmem:[%s0 + $0x98] sm:$0xff]
    %v56 = vld [vmem:[%s0 + $0xa0] sm:$0xff]
    %v57 = vld [vmem:[%s0 + $0xa8] sm:$0xff]
    %v58 = vld [vmem:[%s0 + $0xb0] sm:$0xff]
    %v59 = vld [vmem:[%s0 + $0xb8] sm:$0xff]
    %v60 = vld [vmem:[%s0 + $0xc0] sm:$0xff]
    %v61 = vld [vmem:[%s0 + $0xc8] sm:$0xff]
    %v62 = vld [vmem:[%s0 + $0xd0] sm:$0xff]
    %v63 = vld [vmem:[%s0 + $0xd8] sm:$0xff]
    %v64 = vld [vmem:[%s0 + $0xe0] sm:$0xff]
    %v65 = vld [vmem:[%s0 + $0xe8] sm:$0xff]
    %v66 = vld [vmem:[%s0 + $0xf0] sm:$0xff]
    %v67 = vld [vmem:[%s0 + $0xf8] sm:$0xff]
    %v68 = vld [vmem:[%s2] sm:$0xff]
    %v69 = vld [vmem:[%s2 + $0x8] sm:$0xff]
    %v70 = vld [vmem:[%s2 + $0x10] sm:$0xff]
    %v71 = vld [vmem:[%s2 + $0x18] sm:$0xff]
    %v72 = vld [vmem:[%s2 + $0x20] sm:$0xff]
    %v73 = vld [vmem:[%s2 + $0x28] sm:$0xff]
    %v74 = vld [vmem:[%s2 + $0x30] sm:$0xff]
    %v75 = vld [vmem:[%s2 + $0x38] sm:$0xff]
    %v76 = vld [vmem:[%s2 + $0x40] sm:$0xff]
    %v77 = vld [vmem:[%s2 + $0x48] sm:$0xff]
    %v78 = vld [vmem:[%s2 + $0x50] sm:$0xff]
    %v79 = vld [vmem:[%s2 + $0x58] sm:$0xff]
    %v80 = vld [vmem:[%s2 + $0x60] sm:$0xff]
    %v81 = vld [vmem:[%s2 + $0x68] sm:$0xff]
    %v82 = vld [vmem:[%s2 + $0x70] sm:$0xff]
    %v83 = vld [vmem:[%s2 + $0x78] sm:$0xff]
    %v84 = vld [vmem:[%s2 + $0x80] sm:$0xff]
    %v85 = vld [vmem:[%s2 + $0x88] sm:$0xff]
    %v86 = vld [vmem:[%s2 + $0x90] sm:$0xff]
    %v87 = vld [vmem:[%s2 + $0x98] sm:$0xff]
    %v88 = vld [vmem:[%s2 + $0xa0] sm:$0xff]
    %v89 = vld [vmem:[%s2 + $0xa8] sm:$0xff]
    %v90 = vld [vmem:[%s2 + $0xb0] sm:$0xff]
    %v91 = vld [vmem:[%s2 + $0xb8] sm:$0xff]
    %v92 = vld [vmem:[%s2 + $0xc0] sm:$0xff]
    %v93 = vld [vmem:[%s2 + $0xc8] sm:$0xff]
    %v94 = vld [vmem:[%s2 + $0xd0] sm:$0xff]
    %v95 = vld [vmem:[%s2 + $0xd8] sm:$0xff]
    %v96 = vld [vmem:[%s2 + $0xe0] sm:$0xff]
    %v97 = vld [vmem:[%s2 + $0xe8] sm:$0xff]
    %v98 = vld [vmem:[%s2 + $0xf0] sm:$0xff]
    %v99 = vld [vmem:[%s2 + $0xf8] sm:$0xff]
    %v100 = vld [vmem:[%s3] sm:$0x1]
    %v102 = vlaneseq
    %v103 = vshrl.u32 %v102, 7
    %v104 = vsub.s32 0, %v103
    %v105 = vrot.slane %v100, %v104
    %107 = vmatprep.subr.mxu0 0.0
    %108 = vmatpush1.msra.mxu0 %v83
    %109 = vmatprep.subr.mxu0 0.0
    %110 = vmatpush1.msra.mxu0 %v82
    %111 = vmatprep.subr.mxu0 0.0
    %112 = vmatpush1.msra.mxu0 %v81
    %113 = vmatprep.subr.mxu0 0.0
    %114 = vmatpush1.msra.mxu0 %v80
    %115 = vmatprep.subr.mxu0 0.0
    %116 = vmatpush1.msra.mxu0 %v79
    %117 = vmatprep.subr.mxu0 0.0
    %118 = vmatpush1.msra.mxu0 %v78
    %119 = vmatprep.subr.mxu0 0.0
    %120 = vmatpush1.msra.mxu0 %v77
    %121 = vmatprep.subr.mxu0 0.0
    %122 = vmatpush1.msra.mxu0 %v76
    %123 = vmatprep.subr.mxu0 0.0
    %124 = vmatpush1.msra.mxu0 %v75
    %125 = vmatprep.subr.mxu0 0.0
    %126 = vmatpush1.msra.mxu0 %v74
    %127 = vmatprep.subr.mxu0 0.0
    %128 = vmatpush1.msra.mxu0 %v73
    %129 = vmatprep.subr.mxu0 0.0
    %130 = vmatpush1.msra.mxu0 %v72
    %131 = vmatprep.subr.mxu0 0.0
    %132 = vmatpush1.msra.mxu0 %v71
    %133 = vmatprep.subr.mxu0 0.0
    %134 = vmatpush1.msra.mxu0 %v70
    %135 = vmatprep.subr.mxu0 0.0
    %136 = vmatpush1.msra.mxu0 %v69
    %137 = vmatprep.subr.mxu0 0.0
    %138 = vmatpush1.msra.mxu0 %v68
    %139 = vmatprep.subr.mxu0 0.0
    %140 = vmatpush2.msra.mxu0 %v99
    %141 = vmatprep.subr.mxu0 0.0
    %142 = vmatpush2.msra.mxu0 %v98
    %143 = vmatprep.subr.mxu0 0.0
    %144 = vmatpush2.msra.mxu0 %v97
    %145 = vmatprep.subr.mxu0 0.0
    %146 = vmatpush2.msra.mxu0 %v96
    %147 = vmatprep.subr.mxu0 0.0
    %148 = vmatpush2.msra.mxu0 %v95
    %149 = vmatprep.subr.mxu0 0.0
    %150 = vmatpush2.msra.mxu0 %v94
    %151 = vmatprep.subr.mxu0 0.0
    %152 = vmatpush2.msra.mxu0 %v93
    %153 = vmatprep.subr.mxu0 0.0
    %154 = vmatpush2.msra.mxu0 %v92
    %155 = vmatprep.subr.mxu0 0.0
    %156 = vmatpush2.msra.mxu0 %v91
    %157 = vmatprep.subr.mxu0 0.0
    %158 = vmatpush2.msra.mxu0 %v90
    %159 = vmatprep.subr.mxu0 0.0
    %160 = vmatpush2.msra.mxu0 %v89
    %161 = vmatprep.subr.mxu0 0.0
    %162 = vmatpush2.msra.mxu0 %v88
    %163 = vmatprep.subr.mxu0 0.0
    %164 = vmatpush2.msra.mxu0 %v87
    %165 = vmatprep.subr.mxu0 0.0
    %166 = vmatpush2.msra.mxu0 %v86
    %167 = vmatprep.subr.mxu0 0.0
    %168 = vmatpush2.msra.mxu0 %v85
    %169 = vmatprep.subr.mxu0 0.0
    %170 = vmatpush2.msra.mxu0 %v84
    %171 = vmatprep.mubr.f32.mxu0 %v37
    %172 = vmatmul.mubr.f32.gmra.mxu0 %v36
    %v173 = vpop.f32.mrf.mxu0
    %v174 = vadd.f32 %v105, %v173
    %v175 = vpop.f32.mrf.mxu0
    %176 = vmatprep.mubr.f32.mxu0 %v39
    %177 = vmatmul.mubr.f32.gmra.mxu0 %v38
    %v178 = vpop.f32.mrf.mxu0
    %v179 = vadd.f32 %v105, %v178
    %v180 = vpop.f32.mrf.mxu0
    %181 = vmatprep.mubr.f32.mxu0 %v41
    %182 = vmatmul.mubr.f32.gmra.mxu0 %v40
    %v183 = vpop.f32.mrf.mxu0
    %v184 = vadd.f32 %v105, %v183
    %v185 = vpop.f32.mrf.mxu0
    %186 = vmatprep.mubr.f32.mxu0 %v43
    %187 = vmatmul.mubr.f32.gmra.mxu0 %v42
    %v188 = vpop.f32.mrf.mxu0
    %v189 = vadd.f32 %v105, %v188
    %v190 = vpop.f32.mrf.mxu0
    %191 = vmatprep.mubr.f32.mxu0 %v45
    %192 = vmatmul.mubr.f32.gmra.mxu0 %v44
    %v193 = vpop.f32.mrf.mxu0
    %v194 = vadd.f32 %v105, %v193
    %v195 = vpop.f32.mrf.mxu0
    %196 = vmatprep.mubr.f32.mxu0 %v47
    %197 = vmatmul.mubr.f32.gmra.mxu0 %v46
    %v198 = vpop.f32.mrf.mxu0
    %v199 = vadd.f32 %v105, %v198
    %v200 = vpop.f32.mrf.mxu0
    %201 = vmatprep.mubr.f32.mxu0 %v49
    %202 = vmatmul.mubr.f32.gmra.mxu0 %v48
    %v203 = vpop.f32.mrf.mxu0
    %v204 = vadd.f32 %v105, %v203
    %v205 = vpop.f32.mrf.mxu0
    %206 = vmatprep.mubr.f32.mxu0 %v51
    %207 = vmatmul.mubr.f32.gmra.mxu0 %v50
    %v208 = vpop.f32.mrf.mxu0
    %v209 = vadd.f32 %v105, %v208
    %v210 = vpop.f32.mrf.mxu0
    %211 = vmatprep.mubr.f32.mxu0 %v53
    %212 = vmatmul.mubr.f32.gmra.mxu0 %v52
    %v213 = vpop.f32.mrf.mxu0
    %v214 = vadd.f32 %v105, %v213
    %v215 = vpop.f32.mrf.mxu0
    %216 = vmatprep.mubr.f32.mxu0 %v55
    %217 = vmatmul.mubr.f32.gmra.mxu0 %v54
    %v218 = vpop.f32.mrf.mxu0
    %v219 = vadd.f32 %v105, %v218
    %v220 = vpop.f32.mrf.mxu0
    %221 = vmatprep.mubr.f32.mxu0 %v57
    %222 = vmatmul.mubr.f32.gmra.mxu0 %v56
    %v223 = vpop.f32.mrf.mxu0
    %v224 = vadd.f32 %v105, %v223
    %v225 = vpop.f32.mrf.mxu0
    %226 = vmatprep.mubr.f32.mxu0 %v59
    %227 = vmatmul.mubr.f32.gmra.mxu0 %v58
    %v228 = vpop.f32.mrf.mxu0
    %v229 = vadd.f32 %v105, %v228
    %v230 = vpop.f32.mrf.mxu0
    %231 = vmatprep.mubr.f32.mxu0 %v61
    %232 = vmatmul.mubr.f32.gmra.mxu0 %v60
    %v233 = vpop.f32.mrf.mxu0
    %v234 = vadd.f32 %v105, %v233
    %v235 = vpop.f32.mrf.mxu0
    %236 = vmatprep.mubr.f32.mxu0 %v63
    %237 = vmatmul.mubr.f32.gmra.mxu0 %v62
    %v238 = vpop.f32.mrf.mxu0
    %v239 = vadd.f32 %v105, %v238
    %v240 = vpop.f32.mrf.mxu0
    %241 = vmatprep.mubr.f32.mxu0 %v65
    %242 = vmatmul.mubr.f32.gmra.mxu0 %v64
    %v243 = vpop.f32.mrf.mxu0
    %v244 = vadd.f32 %v105, %v243
    %v245 = vpop.f32.mrf.mxu0
    %246 = vmatprep.mubr.f32.mxu0 %v67
    %247 = vmatmul.mubr.f32.gmra.mxu0 %v66
    %v248 = vpop.f32.mrf.mxu0
    %v249 = vadd.f32 %v105, %v248
    %v250 = vpop.f32.mrf.mxu0
    %251 = vdwg.mxu0
    %v252 = vmax.f32 %v174, 0.0
    %v253 = vmax.f32 %v179, 0.0
    %v254 = vmax.f32 %v184, 0.0
    %v255 = vmax.f32 %v189, 0.0
    %v256 = vmax.f32 %v194, 0.0
    %v257 = vmax.f32 %v199, 0.0
    %v258 = vmax.f32 %v204, 0.0
    %v259 = vmax.f32 %v209, 0.0
    %v260 = vmax.f32 %v214, 0.0
    %v261 = vmax.f32 %v219, 0.0
    %v262 = vmax.f32 %v224, 0.0
    %v263 = vmax.f32 %v229, 0.0
    %v264 = vmax.f32 %v234, 0.0
    %v265 = vmax.f32 %v239, 0.0
    %v266 = vmax.f32 %v244, 0.0
    %v267 = vmax.f32 %v249, 0.0
    %vm268 = vcmask 261120
    %269 = vst.msk [vmem:[#allocation2] sm:$0xff] %vm268, %v252
    %270 = vst.msk [vmem:[#allocation2 + $0x8] sm:$0xff] %vm268, %v253
    %271 = vst.msk [vmem:[#allocation2 + $0x10] sm:$0xff] %vm268, %v254
    %272 = vst.msk [vmem:[#allocation2 + $0x18] sm:$0xff] %vm268, %v255
    %273 = vst.msk [vmem:[#allocation2 + $0x20] sm:$0xff] %vm268, %v256
    %274 = vst.msk [vmem:[#allocation2 + $0x28] sm:$0xff] %vm268, %v257
    %275 = vst.msk [vmem:[#allocation2 + $0x30] sm:$0xff] %vm268, %v258
    %276 = vst.msk [vmem:[#allocation2 + $0x38] sm:$0xff] %vm268, %v259
    %277 = vst.msk [vmem:[#allocation2 + $0x40] sm:$0xff] %vm268, %v260
    %278 = vst.msk [vmem:[#allocation2 + $0x48] sm:$0xff] %vm268, %v261
    %279 = vst.msk [vmem:[#allocation2 + $0x50] sm:$0xff] %vm268, %v262
    %280 = vst.msk [vmem:[#allocation2 + $0x58] sm:$0xff] %vm268, %v263
    %281 = vst.msk [vmem:[#allocation2 + $0x60] sm:$0xff] %vm268, %v264
    %282 = vst.msk [vmem:[#allocation2 + $0x68] sm:$0xff] %vm268, %v265
    %283 = vst.msk [vmem:[#allocation2 + $0x70] sm:$0xff] %vm268, %v266
    %284 = vst.msk [vmem:[#allocation2 + $0x78] sm:$0xff] %vm268, %v267
    %v285 = vld [vmem:[#allocation2] sm:$0x1]
    %v286 = vld [vmem:[#allocation2 + $0x40] sm:$0x1]
    %v289 = vrot.slane %v286, 7
    %vm290 = vcmask 1041409
    %v291 = vsel %vm290, %v289, %v285
    %vm293 = vcmask 254976
    %294 = vst.msk [vmem:[#allocation3] sm:$0x3] %vm293, %v291
    %v295 = vld [vmem:[#allocation2 + $0x1] sm:$0x1]
    %v296 = vld [vmem:[#allocation2 + $0x41] sm:$0x1]
    %v299 = vrot.slane %v296, 7
    %v300 = vsel %vm290, %v299, %v295
    %301 = vrot.lane.b32.xlu0 %v300, 32
    %v302 = vpop.permute.xlu0 %301
    %vm304 = vcmask 517376
    %305 = vst.msk [vmem:[#allocation3] sm:$0x3] %vm304, %v302
    %v306 = vld [vmem:[#allocation2 + $0x2] sm:$0x1]
    %v307 = vld [vmem:[#allocation2 + $0x42] sm:$0x1]
    %v310 = vrot.slane %v307, 7
    %v311 = vsel %vm290, %v310, %v306
    %312 = vrot.lane.b32.xlu0 %v311, 64
    %v313 = vpop.permute.xlu0 %312
    %vm315 = vcmask 779776
    %316 = vst.msk [vmem:[#allocation3] sm:$0x3] %vm315, %v313
    %v317 = vld [vmem:[#allocation2 + $0x3] sm:$0x1]
    %v318 = vld [vmem:[#allocation2 + $0x43] sm:$0x1]
    %v321 = vrot.slane %v318, 7
    %v322 = vsel %vm290, %v321, %v317
    %323 = vrot.lane.b32.xlu0 %v322, 96
    %v324 = vpop.permute.xlu0 %323
    %vm326 = vcmask 1042176
    %327 = vst.msk [vmem:[#allocation3] sm:$0x3] %vm326, %v324
    %s328 = scalar_lea.vmem [#allocation2], 8
    %v329 = vld [vmem:[%s328] sm:$0x1]
    %v330 = vld [vmem:[%s328 + $0x40] sm:$0x1]
    %v333 = vrot.slane %v330, 7
    %v334 = vsel %vm290, %v333, %v329
    %336 = vst.msk [vmem:[#allocation3 + $0x8] sm:$0x3] %vm293, %v334
    %v337 = vld [vmem:[%s328 + $0x1] sm:$0x1]
    %v338 = vld [vmem:[%s328 + $0x41] sm:$0x1]
    %v341 = vrot.slane %v338, 7
    %v342 = vsel %vm290, %v341, %v337
    %343 = vrot.lane.b32.xlu0 %v342, 32
    %v344 = vpop.permute.xlu0 %343
    %346 = vst.msk [vmem:[#allocation3 + $0x8] sm:$0x3] %vm304, %v344
    %v347 = vld [vmem:[%s328 + $0x2] sm:$0x1]
    %v348 = vld [vmem:[%s328 + $0x42] sm:$0x1]
    %v351 = vrot.slane %v348, 7
    %v352 = vsel %vm290, %v351, %v347
    %353 = vrot.lane.b32.xlu0 %v352, 64
    %v354 = vpop.permute.xlu0 %353
    %356 = vst.msk [vmem:[#allocation3 + $0x8] sm:$0x3] %vm315, %v354
    %v357 = vld [vmem:[%s328 + $0x3] sm:$0x1]
    %v358 = vld [vmem:[%s328 + $0x43] sm:$0x1]
    %v361 = vrot.slane %v358, 7
    %v362 = vsel %vm290, %v361, %v357
    %363 = vrot.lane.b32.xlu0 %v362, 96
    %v364 = vpop.permute.xlu0 %363
    %366 = vst.msk [vmem:[#allocation3 + $0x8] sm:$0x3] %vm326, %v364
    %s367 = scalar_lea.vmem [#allocation2], 16
    %v368 = vld [vmem:[%s367] sm:$0x1]
    %v369 = vld [vmem:[%s367 + $0x40] sm:$0x1]
    %v372 = vrot.slane %v369, 7
    %v373 = vsel %vm290, %v372, %v368
    %375 = vst.msk [vmem:[#allocation3 + $0x10] sm:$0x3] %vm293, %v373
    %v376 = vld [vmem:[%s367 + $0x1] sm:$0x1]
    %v377 = vld [vmem:[%s367 + $0x41] sm:$0x1]
    %v380 = vrot.slane %v377, 7
    %v381 = vsel %vm290, %v380, %v376
    %382 = vrot.lane.b32.xlu0 %v381, 32
    %v383 = vpop.permute.xlu0 %382
    %385 = vst.msk [vmem:[#allocation3 + $0x10] sm:$0x3] %vm304, %v383
    %v386 = vld [vmem:[%s367 + $0x2] sm:$0x1]
    %v387 = vld [vmem:[%s367 + $0x42] sm:$0x1]
    %v390 = vrot.slane %v387, 7
    %v391 = vsel %vm290, %v390, %v386
    %392 = vrot.lane.b32.xlu0 %v391, 64
    %v393 = vpop.permute.xlu0 %392
    %395 = vst.msk [vmem:[#allocation3 + $0x10] sm:$0x3] %vm315, %v393
    %v396 = vld [vmem:[%s367 + $0x3] sm:$0x1]
    %v397 = vld [vmem:[%s367 + $0x43] sm:$0x1]
    %v400 = vrot.slane %v397, 7
    %v401 = vsel %vm290, %v400, %v396
    %402 = vrot.lane.b32.xlu0 %v401, 96
    %v403 = vpop.permute.xlu0 %402
    %405 = vst.msk [vmem:[#allocation3 + $0x10] sm:$0x3] %vm326, %v403
    %s406 = scalar_lea.vmem [#allocation2], 24
    %v407 = vld [vmem:[%s406] sm:$0x1]
    %v408 = vld [vmem:[%s406 + $0x40] sm:$0x1]
    %v411 = vrot.slane %v408, 7
    %v412 = vsel %vm290, %v411, %v407
    %414 = vst.msk [vmem:[#allocation3 + $0x18] sm:$0x3] %vm293, %v412
    %v415 = vld [vmem:[%s406 + $0x1] sm:$0x1]
    %v416 = vld [vmem:[%s406 + $0x41] sm:$0x1]
    %v419 = vrot.slane %v416, 7
    %v420 = vsel %vm290, %v419, %v415
    %421 = vrot.lane.b32.xlu0 %v420, 32
    %v422 = vpop.permute.xlu0 %421
    %424 = vst.msk [vmem:[#allocation3 + $0x18] sm:$0x3] %vm304, %v422
    %v425 = vld [vmem:[%s406 + $0x2] sm:$0x1]
    %v426 = vld [vmem:[%s406 + $0x42] sm:$0x1]
    %v429 = vrot.slane %v426, 7
    %v430 = vsel %vm290, %v429, %v425
    %431 = vrot.lane.b32.xlu0 %v430, 64
    %v432 = vpop.permute.xlu0 %431
    %434 = vst.msk [vmem:[#allocation3 + $0x18] sm:$0x3] %vm315, %v432
    %v435 = vld [vmem:[%s406 + $0x3] sm:$0x1]
    %v436 = vld [vmem:[%s406 + $0x43] sm:$0x1]
    %v439 = vrot.slane %v436, 7
    %v440 = vsel %vm290, %v439, %v435
    %441 = vrot.lane.b32.xlu0 %v440, 96
    %v442 = vpop.permute.xlu0 %441
    %444 = vst.msk [vmem:[#allocation3 + $0x18] sm:$0x3] %vm326, %v442
    %v445 = vld [vmem:[#allocation2 + $0x2] sm:$0x1]
    %v446 = vld [vmem:[#allocation2 + $0x42] sm:$0x1]
    %v449 = vrot.slane %v445, 6
    %v450 = vrot.slane %v446, 5
    %vm451 = vcmask 1043459
    %v452 = vsel %vm451, %v450, %v449
    %vm454 = vcmask 257026
    %455 = vst.msk [vmem:[#allocation3] sm:$0xc] %vm454, %v452
    %v456 = vld [vmem:[#allocation2 + $0x3] sm:$0x1]
    %v457 = vld [vmem:[#allocation2 + $0x43] sm:$0x1]
    %v460 = vrot.slane %v456, 6
    %v461 = vrot.slane %v457, 5
    %v462 = vsel %vm451, %v461, %v460
    %463 = vrot.lane.b32.xlu0 %v462, 32
    %v464 = vpop.permute.xlu0 %463
    %vm466 = vcmask 519426
    %467 = vst.msk [vmem:[#allocation3] sm:$0xc] %vm466, %v464
    %v468 = vld [vmem:[#allocation2 + $0x4] sm:$0x1]
    %v469 = vld [vmem:[#allocation2 + $0x44] sm:$0x1]
    %v472 = vrot.slane %v468, 6
    %v473 = vrot.slane %v469, 5
    %v474 = vsel %vm451, %v473, %v472
    %475 = vrot.lane.b32.xlu0 %v474, 64
    %v476 = vpop.permute.xlu0 %475
    %vm478 = vcmask 781826
    %479 = vst.msk [vmem:[#allocation3] sm:$0xc] %vm478, %v476
    %v480 = vld [vmem:[#allocation2 + $0x5] sm:$0x1]
    %v481 = vld [vmem:[#allocation2 + $0x45] sm:$0x1]
    %v484 = vrot.slane %v480, 6
    %v485 = vrot.slane %v481, 5
    %v486 = vsel %vm451, %v485, %v484
    %487 = vrot.lane.b32.xlu0 %v486, 96
    %v488 = vpop.permute.xlu0 %487
    %vm490 = vcmask 1044226
    %491 = vst.msk [vmem:[#allocation3] sm:$0xc] %vm490, %v488
    %v492 = vld [vmem:[%s328 + $0x2] sm:$0x1]
    %v493 = vld [vmem:[%s328 + $0x42] sm:$0x1]
    %v496 = vrot.slane %v492, 6
    %v497 = vrot.slane %v493, 5
    %v498 = vsel %vm451, %v497, %v496
    %500 = vst.msk [vmem:[#allocation3 + $0x8] sm:$0xc] %vm454, %v498
    %v501 = vld [vmem:[%s328 + $0x3] sm:$0x1]
    %v502 = vld [vmem:[%s328 + $0x43] sm:$0x1]
    %v505 = vrot.slane %v501, 6
    %v506 = vrot.slane %v502, 5
    %v507 = vsel %vm451, %v506, %v505
    %508 = vrot.lane.b32.xlu0 %v507, 32
    %v509 = vpop.permute.xlu0 %508
    %511 = vst.msk [vmem:[#allocation3 + $0x8] sm:$0xc] %vm466, %v509
    %v512 = vld [vmem:[%s328 + $0x4] sm:$0x1]
    %v513 = vld [vmem:[%s328 + $0x44] sm:$0x1]
    %v516 = vrot.slane %v512, 6
    %v517 = vrot.slane %v513, 5
    %v518 = vsel %vm451, %v517, %v516
    %519 = vrot.lane.b32.xlu0 %v518, 64
    %v520 = vpop.permute.xlu0 %519
    %522 = vst.msk [vmem:[#allocation3 + $0x8] sm:$0xc] %vm478, %v520
    %v523 = vld [vmem:[%s328 + $0x5] sm:$0x1]
    %v524 = vld [vmem:[%s328 + $0x45] sm:$0x1]
    %v527 = vrot.slane %v523, 6
    %v528 = vrot.slane %v524, 5
    %v529 = vsel %vm451, %v528, %v527
    %530 = vrot.lane.b32.xlu0 %v529, 96
    %v531 = vpop.permute.xlu0 %530
    %533 = vst.msk [vmem:[#allocation3 + $0x8] sm:$0xc] %vm490, %v531
    %v534 = vld [vmem:[%s367 + $0x2] sm:$0x1]
    %v535 = vld [vmem:[%s367 + $0x42] sm:$0x1]
    %v538 = vrot.slane %v534, 6
    %v539 = vrot.slane %v535, 5
    %v540 = vsel %vm451, %v539, %v538
    %542 = vst.msk [vmem:[#allocation3 + $0x10] sm:$0xc] %vm454, %v540
    %v543 = vld [vmem:[%s367 + $0x3] sm:$0x1]
    %v544 = vld [vmem:[%s367 + $0x43] sm:$0x1]
    %v547 = vrot.slane %v543, 6
    %v548 = vrot.slane %v544, 5
    %v549 = vsel %vm451, %v548, %v547
    %550 = vrot.lane.b32.xlu0 %v549, 32
    %v551 = vpop.permute.xlu0 %550
    %553 = vst.msk [vmem:[#allocation3 + $0x10] sm:$0xc] %vm466, %v551
    %v554 = vld [vmem:[%s367 + $0x4] sm:$0x1]
    %v555 = vld [vmem:[%s367 + $0x44] sm:$0x1]
    %v558 = vrot.slane %v554, 6
    %v559 = vrot.slane %v555, 5
    %v560 = vsel %vm451, %v559, %v558
    %561 = vrot.lane.b32.xlu0 %v560, 64
    %v562 = vpop.permute.xlu0 %561
    %564 = vst.msk [vmem:[#allocation3 + $0x10] sm:$0xc] %vm478, %v562
    %v565 = vld [vmem:[%s367 + $0x5] sm:$0x1]
    %v566 = vld [vmem:[%s367 + $0x45] sm:$0x1]
    %v569 = vrot.slane %v565, 6
    %v570 = vrot.slane %v566, 5
    %v571 = vsel %vm451, %v570, %v569
    %572 = vrot.lane.b32.xlu0 %v571, 96
    %v573 = vpop.permute.xlu0 %572
    %575 = vst.msk [vmem:[#allocation3 + $0x10] sm:$0xc] %vm490, %v573
    %v576 = vld [vmem:[%s406 + $0x2] sm:$0x1]
    %v577 = vld [vmem:[%s406 + $0x42] sm:$0x1]
    %v580 = vrot.slane %v576, 6
    %v581 = vrot.slane %v577, 5
    %v582 = vsel %vm451, %v581, %v580
    %584 = vst.msk [vmem:[#allocation3 + $0x18] sm:$0xc] %vm454, %v582
    %v585 = vld [vmem:[%s406 + $0x3] sm:$0x1]
    %v586 = vld [vmem:[%s406 + $0x43] sm:$0x1]
    %v589 = vrot.slane %v585, 6
    %v590 = vrot.slane %v586, 5
    %v591 = vsel %vm451, %v590, %v589
    %592 = vrot.lane.b32.xlu0 %v591, 32
    %v593 = vpop.permute.xlu0 %592
    %595 = vst.msk [vmem:[#allocation3 + $0x18] sm:$0xc] %vm466, %v593
    %v596 = vld [vmem:[%s406 + $0x4] sm:$0x1]
    %v597 = vld [vmem:[%s406 + $0x44] sm:$0x1]
    %v600 = vrot.slane %v596, 6
    %v601 = vrot.slane %v597, 5
    %v602 = vsel %vm451, %v601, %v600
    %603 = vrot.lane.b32.xlu0 %v602, 64
    %v604 = vpop.permute.xlu0 %603
    %606 = vst.msk [vmem:[#allocation3 + $0x18] sm:$0xc] %vm478, %v604
    %v607 = vld [vmem:[%s406 + $0x5] sm:$0x1]
    %v608 = vld [vmem:[%s406 + $0x45] sm:$0x1]
    %v611 = vrot.slane %v607, 6
    %v612 = vrot.slane %v608, 5
    %v613 = vsel %vm451, %v612, %v611
    %614 = vrot.lane.b32.xlu0 %v613, 96
    %v615 = vpop.permute.xlu0 %614
    %617 = vst.msk [vmem:[#allocation3 + $0x18] sm:$0xc] %vm490, %v615
    %v618 = vld [vmem:[#allocation2 + $0x4] sm:$0x1]
    %v619 = vld [vmem:[#allocation2 + $0x44] sm:$0x1]
    %v622 = vrot.slane %v618, 4
    %v623 = vrot.slane %v619, 3
    %vm624 = vcmask 1045509
    %v625 = vsel %vm624, %v623, %v622
    %vm627 = vcmask 259076
    %628 = vst.msk [vmem:[#allocation3] sm:$0x30] %vm627, %v625
    %v629 = vld [vmem:[#allocation2 + $0x5] sm:$0x1]
    %v630 = vld [vmem:[#allocation2 + $0x45] sm:$0x1]
    %v633 = vrot.slane %v629, 4
    %v634 = vrot.slane %v630, 3
    %v635 = vsel %vm624, %v634, %v633
    %636 = vrot.lane.b32.xlu0 %v635, 32
    %v637 = vpop.permute.xlu0 %636
    %vm639 = vcmask 521476
    %640 = vst.msk [vmem:[#allocation3] sm:$0x30] %vm639, %v637
    %v641 = vld [vmem:[#allocation2 + $0x6] sm:$0x1]
    %v642 = vld [vmem:[#allocation2 + $0x46] sm:$0x1]
    %v645 = vrot.slane %v641, 4
    %v646 = vrot.slane %v642, 3
    %v647 = vsel %vm624, %v646, %v645
    %648 = vrot.lane.b32.xlu0 %v647, 64
    %v649 = vpop.permute.xlu0 %648
    %vm651 = vcmask 783876
    %652 = vst.msk [vmem:[#allocation3] sm:$0x30] %vm651, %v649
    %v653 = vld [vmem:[#allocation2 + $0x7] sm:$0x1]
    %v654 = vld [vmem:[#allocation2 + $0x47] sm:$0x1]
    %v657 = vrot.slane %v653, 4
    %v658 = vrot.slane %v654, 3
    %v659 = vsel %vm624, %v658, %v657
    %660 = vrot.lane.b32.xlu0 %v659, 96
    %v661 = vpop.permute.xlu0 %660
    %vm663 = vcmask 1046276
    %664 = vst.msk [vmem:[#allocation3] sm:$0x30] %vm663, %v661
    %v665 = vld [vmem:[%s328 + $0x4] sm:$0x1]
    %v666 = vld [vmem:[%s328 + $0x44] sm:$0x1]
    %v669 = vrot.slane %v665, 4
    %v670 = vrot.slane %v666, 3
    %v671 = vsel %vm624, %v670, %v669
    %673 = vst.msk [vmem:[#allocation3 + $0x8] sm:$0x30] %vm627, %v671
    %v674 = vld [vmem:[%s328 + $0x5] sm:$0x1]
    %v675 = vld [vmem:[%s328 + $0x45] sm:$0x1]
    %v678 = vrot.slane %v674, 4
    %v679 = vrot.slane %v675, 3
    %v680 = vsel %vm624, %v679, %v678
    %681 = vrot.lane.b32.xlu0 %v680, 32
    %v682 = vpop.permute.xlu0 %681
    %684 = vst.msk [vmem:[#allocation3 + $0x8] sm:$0x30] %vm639, %v682
    %v685 = vld [vmem:[%s328 + $0x6] sm:$0x1]
    %v686 = vld [vmem:[%s328 + $0x46] sm:$0x1]
    %v689 = vrot.slane %v685, 4
    %v690 = vrot.slane %v686, 3
    %v691 = vsel %vm624, %v690, %v689
    %692 = vrot.lane.b32.xlu0 %v691, 64
    %v693 = vpop.permute.xlu0 %692
    %695 = vst.msk [vmem:[#allocation3 + $0x8] sm:$0x30] %vm651, %v693
    %v696 = vld [vmem:[%s328 + $0x7] sm:$0x1]
    %v697 = vld [vmem:[%s328 + $0x47] sm:$0x1]
    %v700 = vrot.slane %v696, 4
    %v701 = vrot.slane %v697, 3
    %v702 = vsel %vm624, %v701, %v700
    %703 = vrot.lane.b32.xlu0 %v702, 96
    %v704 = vpop.permute.xlu0 %703
    %706 = vst.msk [vmem:[#allocation3 + $0x8] sm:$0x30] %vm663, %v704
    %v707 = vld [vmem:[%s367 + $0x4] sm:$0x1]
    %v708 = vld [vmem:[%s367 + $0x44] sm:$0x1]
    %v711 = vrot.slane %v707, 4
    %v712 = vrot.slane %v708, 3
    %v713 = vsel %vm624, %v712, %v711
    %715 = vst.msk [vmem:[#allocation3 + $0x10] sm:$0x30] %vm627, %v713
    %v716 = vld [vmem:[%s367 + $0x5] sm:$0x1]
    %v717 = vld [vmem:[%s367 + $0x45] sm:$0x1]
    %v720 = vrot.slane %v716, 4
    %v721 = vrot.slane %v717, 3
    %v722 = vsel %vm624, %v721, %v720
    %723 = vrot.lane.b32.xlu0 %v722, 32
    %v724 = vpop.permute.xlu0 %723
    %726 = vst.msk [vmem:[#allocation3 + $0x10] sm:$0x30] %vm639, %v724
    %v727 = vld [vmem:[%s367 + $0x6] sm:$0x1]
    %v728 = vld [vmem:[%s367 + $0x46] sm:$0x1]
    %v731 = vrot.slane %v727, 4
    %v732 = vrot.slane %v728, 3
    %v733 = vsel %vm624, %v732, %v731
    %734 = vrot.lane.b32.xlu0 %v733, 64
    %v735 = vpop.permute.xlu0 %734
    %737 = vst.msk [vmem:[#allocation3 + $0x10] sm:$0x30] %vm651, %v735
    %v738 = vld [vmem:[%s367 + $0x7] sm:$0x1]
    %v739 = vld [vmem:[%s367 + $0x47] sm:$0x1]
    %v742 = vrot.slane %v738, 4
    %v743 = vrot.slane %v739, 3
    %v744 = vsel %vm624, %v743, %v742
    %745 = vrot.lane.b32.xlu0 %v744, 96
    %v746 = vpop.permute.xlu0 %745
    %748 = vst.msk [vmem:[#allocation3 + $0x10] sm:$0x30] %vm663, %v746
    %v749 = vld [vmem:[%s406 + $0x4] sm:$0x1]
    %v750 = vld [vmem:[%s406 + $0x44] sm:$0x1]
    %v753 = vrot.slane %v749, 4
    %v754 = vrot.slane %v750, 3
    %v755 = vsel %vm624, %v754, %v753
    %757 = vst.msk [vmem:[#allocation3 + $0x18] sm:$0x30] %vm627, %v755
    %v758 = vld [vmem:[%s406 + $0x5] sm:$0x1]
    %v759 = vld [vmem:[%s406 + $0x45] sm:$0x1]
    %v762 = vrot.slane %v758, 4
    %v763 = vrot.slane %v759, 3
    %v764 = vsel %vm624, %v763, %v762
    %765 = vrot.lane.b32.xlu0 %v764, 32
    %v766 = vpop.permute.xlu0 %765
    %768 = vst.msk [vmem:[#allocation3 + $0x18] sm:$0x30] %vm639, %v766
    %v769 = vld [vmem:[%s406 + $0x6] sm:$0x1]
    %v770 = vld [vmem:[%s406 + $0x46] sm:$0x1]
    %v773 = vrot.slane %v769, 4
    %v774 = vrot.slane %v770, 3
    %v775 = vsel %vm624, %v774, %v773
    %776 = vrot.lane.b32.xlu0 %v775, 64
    %v777 = vpop.permute.xlu0 %776
    %779 = vst.msk [vmem:[#allocation3 + $0x18] sm:$0x30] %vm651, %v777
    %v780 = vld [vmem:[%s406 + $0x7] sm:$0x1]
    %v781 = vld [vmem:[%s406 + $0x47] sm:$0x1]
    %v784 = vrot.slane %v780, 4
    %v785 = vrot.slane %v781, 3
    %v786 = vsel %vm624, %v785, %v784
    %787 = vrot.lane.b32.xlu0 %v786, 96
    %v788 = vpop.permute.xlu0 %787
    %790 = vst.msk [vmem:[#allocation3 + $0x18] sm:$0x30] %vm663, %v788
    %v791 = vld [vmem:[%s367] sm:$0x1]
    %v792 = vld [vmem:[%s367 + $0x40] sm:$0x1]
    %v795 = vrot.slane %v791, 2
    %v796 = vrot.slane %v792, 1
    %vm797 = vcmask 1047559
    %v798 = vsel %vm797, %v796, %v795
    %vm800 = vcmask 261126
    %801 = vst.msk [vmem:[#allocation3] sm:$0xc0] %vm800, %v798
    %v802 = vld [vmem:[%s367 + $0x1] sm:$0x1]
    %v803 = vld [vmem:[%s367 + $0x41] sm:$0x1]
    %v806 = vrot.slane %v802, 2
    %v807 = vrot.slane %v803, 1
    %v808 = vsel %vm797, %v807, %v806
    %809 = vrot.lane.b32.xlu0 %v808, 32
    %v810 = vpop.permute.xlu0 %809
    %vm812 = vcmask 523526
    %813 = vst.msk [vmem:[#allocation3] sm:$0xc0] %vm812, %v810
    %v814 = vld [vmem:[%s367 + $0x2] sm:$0x1]
    %v815 = vld [vmem:[%s367 + $0x42] sm:$0x1]
    %v818 = vrot.slane %v814, 2
    %v819 = vrot.slane %v815, 1
    %v820 = vsel %vm797, %v819, %v818
    %821 = vrot.lane.b32.xlu0 %v820, 64
    %v822 = vpop.permute.xlu0 %821
    %vm824 = vcmask 785926
    %825 = vst.msk [vmem:[#allocation3] sm:$0xc0] %vm824, %v822
    %v826 = vld [vmem:[%s367 + $0x3] sm:$0x1]
    %v827 = vld [vmem:[%s367 + $0x43] sm:$0x1]
    %v830 = vrot.slane %v826, 2
    %v831 = vrot.slane %v827, 1
    %v832 = vsel %vm797, %v831, %v830
    %833 = vrot.lane.b32.xlu0 %v832, 96
    %v834 = vpop.permute.xlu0 %833
    %vm836 = vcmask 1048326
    %837 = vst.msk [vmem:[#allocation3] sm:$0xc0] %vm836, %v834
    %v838 = vld [vmem:[%s406] sm:$0x1]
    %v839 = vld [vmem:[%s406 + $0x40] sm:$0x1]
    %v842 = vrot.slane %v838, 2
    %v843 = vrot.slane %v839, 1
    %v844 = vsel %vm797, %v843, %v842
    %846 = vst.msk [vmem:[#allocation3 + $0x8] sm:$0xc0] %vm800, %v844
    %v847 = vld [vmem:[%s406 + $0x1] sm:$0x1]
    %v848 = vld [vmem:[%s406 + $0x41] sm:$0x1]
    %v851 = vrot.slane %v847, 2
    %v852 = vrot.slane %v848, 1
    %v853 = vsel %vm797, %v852, %v851
    %854 = vrot.lane.b32.xlu0 %v853, 32
    %v855 = vpop.permute.xlu0 %854
    %857 = vst.msk [vmem:[#allocation3 + $0x8] sm:$0xc0] %vm812, %v855
    %v858 = vld [vmem:[%s406 + $0x2] sm:$0x1]
    %v859 = vld [vmem:[%s406 + $0x42] sm:$0x1]
    %v862 = vrot.slane %v858, 2
    %v863 = vrot.slane %v859, 1
    %v864 = vsel %vm797, %v863, %v862
    %865 = vrot.lane.b32.xlu0 %v864, 64
    %v866 = vpop.permute.xlu0 %865
    %868 = vst.msk [vmem:[#allocation3 + $0x8] sm:$0xc0] %vm824, %v866
    %v869 = vld [vmem:[%s406 + $0x3] sm:$0x1]
    %v870 = vld [vmem:[%s406 + $0x43] sm:$0x1]
    %v873 = vrot.slane %v869, 2
    %v874 = vrot.slane %v870, 1
    %v875 = vsel %vm797, %v874, %v873
    %876 = vrot.lane.b32.xlu0 %v875, 96
    %v877 = vpop.permute.xlu0 %876
    %879 = vst.msk [vmem:[#allocation3 + $0x8] sm:$0xc0] %vm836, %v877
    %s880 = scalar_lea.vmem [#allocation2], 32
    %v881 = vld [vmem:[%s880] sm:$0x1]
    %v882 = vld [vmem:[%s880 + $0x40] sm:$0x1]
    %v885 = vrot.slane %v881, 2
    %v886 = vrot.slane %v882, 1
    %v887 = vsel %vm797, %v886, %v885
    %889 = vst.msk [vmem:[#allocation3 + $0x10] sm:$0xc0] %vm800, %v887
    %v890 = vld [vmem:[%s880 + $0x1] sm:$0x1]
    %v891 = vld [vmem:[%s880 + $0x41] sm:$0x1]
    %v894 = vrot.slane %v890, 2
    %v895 = vrot.slane %v891, 1
    %v896 = vsel %vm797, %v895, %v894
    %897 = vrot.lane.b32.xlu0 %v896, 32
    %v898 = vpop.permute.xlu0 %897
    %900 = vst.msk [vmem:[#allocation3 + $0x10] sm:$0xc0] %vm812, %v898
    %v901 = vld [vmem:[%s880 + $0x2] sm:$0x1]
    %v902 = vld [vmem:[%s880 + $0x42] sm:$0x1]
    %v905 = vrot.slane %v901, 2
    %v906 = vrot.slane %v902, 1
    %v907 = vsel %vm797, %v906, %v905
    %908 = vrot.lane.b32.xlu0 %v907, 64
    %v909 = vpop.permute.xlu0 %908
    %911 = vst.msk [vmem:[#allocation3 + $0x10] sm:$0xc0] %vm824, %v909
    %v912 = vld [vmem:[%s880 + $0x3] sm:$0x1]
    %v913 = vld [vmem:[%s880 + $0x43] sm:$0x1]
    %v916 = vrot.slane %v912, 2
    %v917 = vrot.slane %v913, 1
    %v918 = vsel %vm797, %v917, %v916
    %919 = vrot.lane.b32.xlu0 %v918, 96
    %v920 = vpop.permute.xlu0 %919
    %922 = vst.msk [vmem:[#allocation3 + $0x10] sm:$0xc0] %vm836, %v920
    %s923 = scalar_lea.vmem [#allocation2], 40
    %v924 = vld [vmem:[%s923] sm:$0x1]
    %v925 = vld [vmem:[%s923 + $0x40] sm:$0x1]
    %v928 = vrot.slane %v924, 2
    %v929 = vrot.slane %v925, 1
    %v930 = vsel %vm797, %v929, %v928
    %932 = vst.msk [vmem:[#allocation3 + $0x18] sm:$0xc0] %vm800, %v930
    %v933 = vld [vmem:[%s923 + $0x1] sm:$0x1]
    %v934 = vld [vmem:[%s923 + $0x41] sm:$0x1]
    %v937 = vrot.slane %v933, 2
    %v938 = vrot.slane %v934, 1
    %v939 = vsel %vm797, %v938, %v937
    %940 = vrot.lane.b32.xlu0 %v939, 32
    %v941 = vpop.permute.xlu0 %940
    %943 = vst.msk [vmem:[#allocation3 + $0x18] sm:$0xc0] %vm812, %v941
    %v944 = vld [vmem:[%s923 + $0x2] sm:$0x1]
    %v945 = vld [vmem:[%s923 + $0x42] sm:$0x1]
    %v948 = vrot.slane %v944, 2
    %v949 = vrot.slane %v945, 1
    %v950 = vsel %vm797, %v949, %v948
    %951 = vrot.lane.b32.xlu0 %v950, 64
    %v952 = vpop.permute.xlu0 %951
    %954 = vst.msk [vmem:[#allocation3 + $0x18] sm:$0xc0] %vm824, %v952
    %v955 = vld [vmem:[%s923 + $0x3] sm:$0x1]
    %v956 = vld [vmem:[%s923 + $0x43] sm:$0x1]
    %v959 = vrot.slane %v955, 2
    %v960 = vrot.slane %v956, 1
    %v961 = vsel %vm797, %v960, %v959
    %962 = vrot.lane.b32.xlu0 %v961, 96
    %v963 = vpop.permute.xlu0 %962
    %965 = vst.msk [vmem:[#allocation3 + $0x18] sm:$0xc0] %vm836, %v963
    %v966 = vld [vmem:[%s367 + $0x2] sm:$0x1]
    %v967 = vld [vmem:[%s367 + $0x42] sm:$0x1]
    %v970 = vrot.slane %v967, 7
    %v971 = vsel %vm290, %v970, %v966
    %973 = vst.msk [vmem:[#allocation3 + $0x20] sm:$0x3] %vm293, %v971
    %v974 = vld [vmem:[%s367 + $0x3] sm:$0x1]
    %v975 = vld [vmem:[%s367 + $0x43] sm:$0x1]
    %v978 = vrot.slane %v975, 7
    %v979 = vsel %vm290, %v978, %v974
    %980 = vrot.lane.b32.xlu0 %v979, 32
    %v981 = vpop.permute.xlu0 %980
    %983 = vst.msk [vmem:[#allocation3 + $0x20] sm:$0x3] %vm304, %v981
    %v984 = vld [vmem:[%s367 + $0x4] sm:$0x1]
    %v985 = vld [vmem:[%s367 + $0x44] sm:$0x1]
    %v988 = vrot.slane %v985, 7
    %v989 = vsel %vm290, %v988, %v984
    %990 = vrot.lane.b32.xlu0 %v989, 64
    %v991 = vpop.permute.xlu0 %990
    %993 = vst.msk [vmem:[#allocation3 + $0x20] sm:$0x3] %vm315, %v991
    %v994 = vld [vmem:[%s367 + $0x5] sm:$0x1]
    %v995 = vld [vmem:[%s367 + $0x45] sm:$0x1]
    %v998 = vrot.slane %v995, 7
    %v999 = vsel %vm290, %v998, %v994
    %1000 = vrot.lane.b32.xlu0 %v999, 96
    %v1001 = vpop.permute.xlu0 %1000
    %1003 = vst.msk [vmem:[#allocation3 + $0x20] sm:$0x3] %vm326, %v1001
    %v1004 = vld [vmem:[%s406 + $0x2] sm:$0x1]
    %v1005 = vld [vmem:[%s406 + $0x42] sm:$0x1]
    %v1008 = vrot.slane %v1005, 7
    %v1009 = vsel %vm290, %v1008, %v1004
    %1011 = vst.msk [vmem:[#allocation3 + $0x28] sm:$0x3] %vm293, %v1009
    %v1012 = vld [vmem:[%s406 + $0x3] sm:$0x1]
    %v1013 = vld [vmem:[%s406 + $0x43] sm:$0x1]
    %v1016 = vrot.slane %v1013, 7
    %v1017 = vsel %vm290, %v1016, %v1012
    %1018 = vrot.lane.b32.xlu0 %v1017, 32
    %v1019 = vpop.permute.xlu0 %1018
    %1021 = vst.msk [vmem:[#allocation3 + $0x28] sm:$0x3] %vm304, %v1019
    %v1022 = vld [vmem:[%s406 + $0x4] sm:$0x1]
    %v1023 = vld [vmem:[%s406 + $0x44] sm:$0x1]
    %v1026 = vrot.slane %v1023, 7
    %v1027 = vsel %vm290, %v1026, %v1022
    %1028 = vrot.lane.b32.xlu0 %v1027, 64
    %v1029 = vpop.permute.xlu0 %1028
    %1031 = vst.msk [vmem:[#allocation3 + $0x28] sm:$0x3] %vm315, %v1029
    %v1032 = vld [vmem:[%s406 + $0x5] sm:$0x1]
    %v1033 = vld [vmem:[%s406 + $0x45] sm:$0x1]
    %v1036 = vrot.slane %v1033, 7
    %v1037 = vsel %vm290, %v1036, %v1032
    %1038 = vrot.lane.b32.xlu0 %v1037, 96
    %v1039 = vpop.permute.xlu0 %1038
    %1041 = vst.msk [vmem:[#allocation3 + $0x28] sm:$0x3] %vm326, %v1039
    %v1042 = vld [vmem:[%s880 + $0x2] sm:$0x1]
    %v1043 = vld [vmem:[%s880 + $0x42] sm:$0x1]
    %v1046 = vrot.slane %v1043, 7
    %v1047 = vsel %vm290, %v1046, %v1042
    %1049 = vst.msk [vmem:[#allocation3 + $0x30] sm:$0x3] %vm293, %v1047
    %v1050 = vld [vmem:[%s880 + $0x3] sm:$0x1]
    %v1051 = vld [vmem:[%s880 + $0x43] sm:$0x1]
    %v1054 = vrot.slane %v1051, 7
    %v1055 = vsel %vm290, %v1054, %v1050
    %1056 = vrot.lane.b32.xlu0 %v1055, 32
    %v1057 = vpop.permute.xlu0 %1056
    %1059 = vst.msk [vmem:[#allocation3 + $0x30] sm:$0x3] %vm304, %v1057
    %v1060 = vld [vmem:[%s880 + $0x4] sm:$0x1]
    %v1061 = vld [vmem:[%s880 + $0x44] sm:$0x1]
    %v1064 = vrot.slane %v1061, 7
    %v1065 = vsel %vm290, %v1064, %v1060
    %1066 = vrot.lane.b32.xlu0 %v1065, 64
    %v1067 = vpop.permute.xlu0 %1066
    %1069 = vst.msk [vmem:[#allocation3 + $0x30] sm:$0x3] %vm315, %v1067
    %v1070 = vld [vmem:[%s880 + $0x5] sm:$0x1]
    %v1071 = vld [vmem:[%s880 + $0x45] sm:$0x1]
    %v1074 = vrot.slane %v1071, 7
    %v1075 = vsel %vm290, %v1074, %v1070
    %1076 = vrot.lane.b32.xlu0 %v1075, 96
    %v1077 = vpop.permute.xlu0 %1076
    %1079 = vst.msk [vmem:[#allocation3 + $0x30] sm:$0x3] %vm326, %v1077
    %v1080 = vld [vmem:[%s923 + $0x2] sm:$0x1]
    %v1081 = vld [vmem:[%s923 + $0x42] sm:$0x1]
    %v1084 = vrot.slane %v1081, 7
    %v1085 = vsel %vm290, %v1084, %v1080
    %1087 = vst.msk [vmem:[#allocation3 + $0x38] sm:$0x3] %vm293, %v1085
    %v1088 = vld [vmem:[%s923 + $0x3] sm:$0x1]
    %v1089 = vld [vmem:[%s923 + $0x43] sm:$0x1]
    %v1092 = vrot.slane %v1089, 7
    %v1093 = vsel %vm290, %v1092, %v1088
    %1094 = vrot.lane.b32.xlu0 %v1093, 32
    %v1095 = vpop.permute.xlu0 %1094
    %1097 = vst.msk [vmem:[#allocation3 + $0x38] sm:$0x3] %vm304, %v1095
    %v1098 = vld [vmem:[%s923 + $0x4] sm:$0x1]
    %v1099 = vld [vmem:[%s923 + $0x44] sm:$0x1]
    %v1102 = vrot.slane %v1099, 7
    %v1103 = vsel %vm290, %v1102, %v1098
    %1104 = vrot.lane.b32.xlu0 %v1103, 64
    %v1105 = vpop.permute.xlu0 %1104
    %1107 = vst.msk [vmem:[#allocation3 + $0x38] sm:$0x3] %vm315, %v1105
    %v1108 = vld [vmem:[%s923 + $0x5] sm:$0x1]
    %v1109 = vld [vmem:[%s923 + $0x45] sm:$0x1]
    %v1112 = vrot.slane %v1109, 7
    %v1113 = vsel %vm290, %v1112, %v1108
    %1114 = vrot.lane.b32.xlu0 %v1113, 96
    %v1115 = vpop.permute.xlu0 %1114
    %1117 = vst.msk [vmem:[#allocation3 + $0x38] sm:$0x3] %vm326, %v1115
    %v1118 = vld [vmem:[%s367 + $0x4] sm:$0x1]
    %v1119 = vld [vmem:[%s367 + $0x44] sm:$0x1]
    %v1122 = vrot.slane %v1118, 6
    %v1123 = vrot.slane %v1119, 5
    %v1124 = vsel %vm451, %v1123, %v1122
    %1126 = vst.msk [vmem:[#allocation3 + $0x20] sm:$0xc] %vm454, %v1124
    %v1127 = vld [vmem:[%s367 + $0x5] sm:$0x1]
    %v1128 = vld [vmem:[%s367 + $0x45] sm:$0x1]
    %v1131 = vrot.slane %v1127, 6
    %v1132 = vrot.slane %v1128, 5
    %v1133 = vsel %vm451, %v1132, %v1131
    %1134 = vrot.lane.b32.xlu0 %v1133, 32
    %v1135 = vpop.permute.xlu0 %1134
    %1137 = vst.msk [vmem:[#allocation3 + $0x20] sm:$0xc] %vm466, %v1135
    %v1138 = vld [vmem:[%s367 + $0x6] sm:$0x1]
    %v1139 = vld [vmem:[%s367 + $0x46] sm:$0x1]
    %v1142 = vrot.slane %v1138, 6
    %v1143 = vrot.slane %v1139, 5
    %v1144 = vsel %vm451, %v1143, %v1142
    %1145 = vrot.lane.b32.xlu0 %v1144, 64
    %v1146 = vpop.permute.xlu0 %1145
    %1148 = vst.msk [vmem:[#allocation3 + $0x20] sm:$0xc] %vm478, %v1146
    %v1149 = vld [vmem:[%s367 + $0x7] sm:$0x1]
    %v1150 = vld [vmem:[%s367 + $0x47] sm:$0x1]
    %v1153 = vrot.slane %v1149, 6
    %v1154 = vrot.slane %v1150, 5
    %v1155 = vsel %vm451, %v1154, %v1153
    %1156 = vrot.lane.b32.xlu0 %v1155, 96
    %v1157 = vpop.permute.xlu0 %1156
    %1159 = vst.msk [vmem:[#allocation3 + $0x20] sm:$0xc] %vm490, %v1157
    %v1160 = vld [vmem:[%s406 + $0x4] sm:$0x1]
    %v1161 = vld [vmem:[%s406 + $0x44] sm:$0x1]
    %v1164 = vrot.slane %v1160, 6
    %v1165 = vrot.slane %v1161, 5
    %v1166 = vsel %vm451, %v1165, %v1164
    %1168 = vst.msk [vmem:[#allocation3 + $0x28] sm:$0xc] %vm454, %v1166
    %v1169 = vld [vmem:[%s406 + $0x5] sm:$0x1]
    %v1170 = vld [vmem:[%s406 + $0x45] sm:$0x1]
    %v1173 = vrot.slane %v1169, 6
    %v1174 = vrot.slane %v1170, 5
    %v1175 = vsel %vm451, %v1174, %v1173
    %1176 = vrot.lane.b32.xlu0 %v1175, 32
    %v1177 = vpop.permute.xlu0 %1176
    %1179 = vst.msk [vmem:[#allocation3 + $0x28] sm:$0xc] %vm466, %v1177
    %v1180 = vld [vmem:[%s406 + $0x6] sm:$0x1]
    %v1181 = vld [vmem:[%s406 + $0x46] sm:$0x1]
    %v1184 = vrot.slane %v1180, 6
    %v1185 = vrot.slane %v1181, 5
    %v1186 = vsel %vm451, %v1185, %v1184
    %1187 = vrot.lane.b32.xlu0 %v1186, 64
    %v1188 = vpop.permute.xlu0 %1187
    %1190 = vst.msk [vmem:[#allocation3 + $0x28] sm:$0xc] %vm478, %v1188
    %v1191 = vld [vmem:[%s406 + $0x7] sm:$0x1]
    %v1192 = vld [vmem:[%s406 + $0x47] sm:$0x1]
    %v1195 = vrot.slane %v1191, 6
    %v1196 = vrot.slane %v1192, 5
    %v1197 = vsel %vm451, %v1196, %v1195
    %1198 = vrot.lane.b32.xlu0 %v1197, 96
    %v1199 = vpop.permute.xlu0 %1198
    %1201 = vst.msk [vmem:[#allocation3 + $0x28] sm:$0xc] %vm490, %v1199
    %v1202 = vld [vmem:[%s880 + $0x4] sm:$0x1]
    %v1203 = vld [vmem:[%s880 + $0x44] sm:$0x1]
    %v1206 = vrot.slane %v1202, 6
    %v1207 = vrot.slane %v1203, 5
    %v1208 = vsel %vm451, %v1207, %v1206
    %1210 = vst.msk [vmem:[#allocation3 + $0x30] sm:$0xc] %vm454, %v1208
    %v1211 = vld [vmem:[%s880 + $0x5] sm:$0x1]
    %v1212 = vld [vmem:[%s880 + $0x45] sm:$0x1]
    %v1215 = vrot.slane %v1211, 6
    %v1216 = vrot.slane %v1212, 5
    %v1217 = vsel %vm451, %v1216, %v1215
    %1218 = vrot.lane.b32.xlu0 %v1217, 32
    %v1219 = vpop.permute.xlu0 %1218
    %1221 = vst.msk [vmem:[#allocation3 + $0x30] sm:$0xc] %vm466, %v1219
    %v1222 = vld [vmem:[%s880 + $0x6] sm:$0x1]
    %v1223 = vld [vmem:[%s880 + $0x46] sm:$0x1]
    %v1226 = vrot.slane %v1222, 6
    %v1227 = vrot.slane %v1223, 5
    %v1228 = vsel %vm451, %v1227, %v1226
    %1229 = vrot.lane.b32.xlu0 %v1228, 64
    %v1230 = vpop.permute.xlu0 %1229
    %1232 = vst.msk [vmem:[#allocation3 + $0x30] sm:$0xc] %vm478, %v1230
    %v1233 = vld [vmem:[%s880 + $0x7] sm:$0x1]
    %v1234 = vld [vmem:[%s880 + $0x47] sm:$0x1]
    %v1237 = vrot.slane %v1233, 6
    %v1238 = vrot.slane %v1234, 5
    %v1239 = vsel %vm451, %v1238, %v1237
    %1240 = vrot.lane.b32.xlu0 %v1239, 96
    %v1241 = vpop.permute.xlu0 %1240
    %1243 = vst.msk [vmem:[#allocation3 + $0x30] sm:$0xc] %vm490, %v1241
    %v1244 = vld [vmem:[%s923 + $0x4] sm:$0x1]
    %v1245 = vld [vmem:[%s923 + $0x44] sm:$0x1]
    %v1248 = vrot.slane %v1244, 6
    %v1249 = vrot.slane %v1245, 5
    %v1250 = vsel %vm451, %v1249, %v1248
    %1252 = vst.msk [vmem:[#allocation3 + $0x38] sm:$0xc] %vm454, %v1250
    %v1253 = vld [vmem:[%s923 + $0x5] sm:$0x1]
    %v1254 = vld [vmem:[%s923 + $0x45] sm:$0x1]
    %v1257 = vrot.slane %v1253, 6
    %v1258 = vrot.slane %v1254, 5
    %v1259 = vsel %vm451, %v1258, %v1257
    %1260 = vrot.lane.b32.xlu0 %v1259, 32
    %v1261 = vpop.permute.xlu0 %1260
    %1263 = vst.msk [vmem:[#allocation3 + $0x38] sm:$0xc] %vm466, %v1261
    %v1264 = vld [vmem:[%s923 + $0x6] sm:$0x1]
    %v1265 = vld [vmem:[%s923 + $0x46] sm:$0x1]
    %v1268 = vrot.slane %v1264, 6
    %v1269 = vrot.slane %v1265, 5
    %v1270 = vsel %vm451, %v1269, %v1268
    %1271 = vrot.lane.b32.xlu0 %v1270, 64
    %v1272 = vpop.permute.xlu0 %1271
    %1274 = vst.msk [vmem:[#allocation3 + $0x38] sm:$0xc] %vm478, %v1272
    %v1275 = vld [vmem:[%s923 + $0x7] sm:$0x1]
    %v1276 = vld [vmem:[%s923 + $0x47] sm:$0x1]
    %v1279 = vrot.slane %v1275, 6
    %v1280 = vrot.slane %v1276, 5
    %v1281 = vsel %vm451, %v1280, %v1279
    %1282 = vrot.lane.b32.xlu0 %v1281, 96
    %v1283 = vpop.permute.xlu0 %1282
    %1285 = vst.msk [vmem:[#allocation3 + $0x38] sm:$0xc] %vm490, %v1283
    %v1286 = vld [vmem:[%s880] sm:$0x1]
    %v1287 = vld [vmem:[%s880 + $0x40] sm:$0x1]
    %v1290 = vrot.slane %v1286, 4
    %v1291 = vrot.slane %v1287, 3
    %v1292 = vsel %vm624, %v1291, %v1290
    %1294 = vst.msk [vmem:[#allocation3 + $0x20] sm:$0x30] %vm627, %v1292
    %v1295 = vld [vmem:[%s880 + $0x1] sm:$0x1]
    %v1296 = vld [vmem:[%s880 + $0x41] sm:$0x1]
    %v1299 = vrot.slane %v1295, 4
    %v1300 = vrot.slane %v1296, 3
    %v1301 = vsel %vm624, %v1300, %v1299
    %1302 = vrot.lane.b32.xlu0 %v1301, 32
    %v1303 = vpop.permute.xlu0 %1302
    %1305 = vst.msk [vmem:[#allocation3 + $0x20] sm:$0x30] %vm639, %v1303
    %v1306 = vld [vmem:[%s880 + $0x2] sm:$0x1]
    %v1307 = vld [vmem:[%s880 + $0x42] sm:$0x1]
    %v1310 = vrot.slane %v1306, 4
    %v1311 = vrot.slane %v1307, 3
    %v1312 = vsel %vm624, %v1311, %v1310
    %1313 = vrot.lane.b32.xlu0 %v1312, 64
    %v1314 = vpop.permute.xlu0 %1313
    %1316 = vst.msk [vmem:[#allocation3 + $0x20] sm:$0x30] %vm651, %v1314
    %v1317 = vld [vmem:[%s880 + $0x3] sm:$0x1]
    %v1318 = vld [vmem:[%s880 + $0x43] sm:$0x1]
    %v1321 = vrot.slane %v1317, 4
    %v1322 = vrot.slane %v1318, 3
    %v1323 = vsel %vm624, %v1322, %v1321
    %1324 = vrot.lane.b32.xlu0 %v1323, 96
    %v1325 = vpop.permute.xlu0 %1324
    %1327 = vst.msk [vmem:[#allocation3 + $0x20] sm:$0x30] %vm663, %v1325
    %v1328 = vld [vmem:[%s923] sm:$0x1]
    %v1329 = vld [vmem:[%s923 + $0x40] sm:$0x1]
    %v1332 = vrot.slane %v1328, 4
    %v1333 = vrot.slane %v1329, 3
    %v1334 = vsel %vm624, %v1333, %v1332
    %1336 = vst.msk [vmem:[#allocation3 + $0x28] sm:$0x30] %vm627, %v1334
    %v1337 = vld [vmem:[%s923 + $0x1] sm:$0x1]
    %v1338 = vld [vmem:[%s923 + $0x41] sm:$0x1]
    %v1341 = vrot.slane %v1337, 4
    %v1342 = vrot.slane %v1338, 3
    %v1343 = vsel %vm624, %v1342, %v1341
    %1344 = vrot.lane.b32.xlu0 %v1343, 32
    %v1345 = vpop.permute.xlu0 %1344
    %1347 = vst.msk [vmem:[#allocation3 + $0x28] sm:$0x30] %vm639, %v1345
    %v1348 = vld [vmem:[%s923 + $0x2] sm:$0x1]
    %v1349 = vld [vmem:[%s923 + $0x42] sm:$0x1]
    %v1352 = vrot.slane %v1348, 4
    %v1353 = vrot.slane %v1349, 3
    %v1354 = vsel %vm624, %v1353, %v1352
    %1355 = vrot.lane.b32.xlu0 %v1354, 64
    %v1356 = vpop.permute.xlu0 %1355
    %1358 = vst.msk [vmem:[#allocation3 + $0x28] sm:$0x30] %vm651, %v1356
    %v1359 = vld [vmem:[%s923 + $0x3] sm:$0x1]
    %v1360 = vld [vmem:[%s923 + $0x43] sm:$0x1]
    %v1363 = vrot.slane %v1359, 4
    %v1364 = vrot.slane %v1360, 3
    %v1365 = vsel %vm624, %v1364, %v1363
    %1366 = vrot.lane.b32.xlu0 %v1365, 96
    %v1367 = vpop.permute.xlu0 %1366
    %1369 = vst.msk [vmem:[#allocation3 + $0x28] sm:$0x30] %vm663, %v1367
    %s1370 = scalar_lea.vmem [#allocation2], 48
    %v1371 = vld [vmem:[%s1370] sm:$0x1]
    %v1372 = vld [vmem:[%s1370 + $0x40] sm:$0x1]
    %v1375 = vrot.slane %v1371, 4
    %v1376 = vrot.slane %v1372, 3
    %v1377 = vsel %vm624, %v1376, %v1375
    %1379 = vst.msk [vmem:[#allocation3 + $0x30] sm:$0x30] %vm627, %v1377
    %v1380 = vld [vmem:[%s1370 + $0x1] sm:$0x1]
    %v1381 = vld [vmem:[%s1370 + $0x41] sm:$0x1]
    %v1384 = vrot.slane %v1380, 4
    %v1385 = vrot.slane %v1381, 3
    %v1386 = vsel %vm624, %v1385, %v1384
    %1387 = vrot.lane.b32.xlu0 %v1386, 32
    %v1388 = vpop.permute.xlu0 %1387
    %1390 = vst.msk [vmem:[#allocation3 + $0x30] sm:$0x30] %vm639, %v1388
    %v1391 = vld [vmem:[%s1370 + $0x2] sm:$0x1]
    %v1392 = vld [vmem:[%s1370 + $0x42] sm:$0x1]
    %v1395 = vrot.slane %v1391, 4
    %v1396 = vrot.slane %v1392, 3
    %v1397 = vsel %vm624, %v1396, %v1395
    %1398 = vrot.lane.b32.xlu0 %v1397, 64
    %v1399 = vpop.permute.xlu0 %1398
    %1401 = vst.msk [vmem:[#allocation3 + $0x30] sm:$0x30] %vm651, %v1399
    %v1402 = vld [vmem:[%s1370 + $0x3] sm:$0x1]
    %v1403 = vld [vmem:[%s1370 + $0x43] sm:$0x1]
    %v1406 = vrot.slane %v1402, 4
    %v1407 = vrot.slane %v1403, 3
    %v1408 = vsel %vm624, %v1407, %v1406
    %1409 = vrot.lane.b32.xlu0 %v1408, 96
    %v1410 = vpop.permute.xlu0 %1409
    %1412 = vst.msk [vmem:[#allocation3 + $0x30] sm:$0x30] %vm663, %v1410
    %s1413 = scalar_lea.vmem [#allocation2], 56
    %v1414 = vld [vmem:[%s1413] sm:$0x1]
    %v1415 = vld [vmem:[%s1413 + $0x40] sm:$0x1]
    %v1418 = vrot.slane %v1414, 4
    %v1419 = vrot.slane %v1415, 3
    %v1420 = vsel %vm624, %v1419, %v1418
    %1422 = vst.msk [vmem:[#allocation3 + $0x38] sm:$0x30] %vm627, %v1420
    %v1423 = vld [vmem:[%s1413 + $0x1] sm:$0x1]
    %v1424 = vld [vmem:[%s1413 + $0x41] sm:$0x1]
    %v1427 = vrot.slane %v1423, 4
    %v1428 = vrot.slane %v1424, 3
    %v1429 = vsel %vm624, %v1428, %v1427
    %1430 = vrot.lane.b32.xlu0 %v1429, 32
    %v1431 = vpop.permute.xlu0 %1430
    %1433 = vst.msk [vmem:[#allocation3 + $0x38] sm:$0x30] %vm639, %v1431
    %v1434 = vld [vmem:[%s1413 + $0x2] sm:$0x1]
    %v1435 = vld [vmem:[%s1413 + $0x42] sm:$0x1]
    %v1438 = vrot.slane %v1434, 4
    %v1439 = vrot.slane %v1435, 3
    %v1440 = vsel %vm624, %v1439, %v1438
    %1441 = vrot.lane.b32.xlu0 %v1440, 64
    %v1442 = vpop.permute.xlu0 %1441
    %1444 = vst.msk [vmem:[#allocation3 + $0x38] sm:$0x30] %vm651, %v1442
    %v1445 = vld [vmem:[%s1413 + $0x3] sm:$0x1]
    %v1446 = vld [vmem:[%s1413 + $0x43] sm:$0x1]
    %v1449 = vrot.slane %v1445, 4
    %v1450 = vrot.slane %v1446, 3
    %v1451 = vsel %vm624, %v1450, %v1449
    %1452 = vrot.lane.b32.xlu0 %v1451, 96
    %v1453 = vpop.permute.xlu0 %1452
    %1455 = vst.msk [vmem:[#allocation3 + $0x38] sm:$0x30] %vm663, %v1453
    %v1456 = vld [vmem:[%s880 + $0x2] sm:$0x1]
    %v1457 = vld [vmem:[%s880 + $0x42] sm:$0x1]
    %v1460 = vrot.slane %v1456, 2
    %v1461 = vrot.slane %v1457, 1
    %v1462 = vsel %vm797, %v1461, %v1460
    %1464 = vst.msk [vmem:[#allocation3 + $0x20] sm:$0xc0] %vm800, %v1462
    %v1465 = vld [vmem:[%s880 + $0x3] sm:$0x1]
    %v1466 = vld [vmem:[%s880 + $0x43] sm:$0x1]
    %v1469 = vrot.slane %v1465, 2
    %v1470 = vrot.slane %v1466, 1
    %v1471 = vsel %vm797, %v1470, %v1469
    %1472 = vrot.lane.b32.xlu0 %v1471, 32
    %v1473 = vpop.permute.xlu0 %1472
    %1475 = vst.msk [vmem:[#allocation3 + $0x20] sm:$0xc0] %vm812, %v1473
    %v1476 = vld [vmem:[%s880 + $0x4] sm:$0x1]
    %v1477 = vld [vmem:[%s880 + $0x44] sm:$0x1]
    %v1480 = vrot.slane %v1476, 2
    %v1481 = vrot.slane %v1477, 1
    %v1482 = vsel %vm797, %v1481, %v1480
    %1483 = vrot.lane.b32.xlu0 %v1482, 64
    %v1484 = vpop.permute.xlu0 %1483
    %1486 = vst.msk [vmem:[#allocation3 + $0x20] sm:$0xc0] %vm824, %v1484
    %v1487 = vld [vmem:[%s880 + $0x5] sm:$0x1]
    %v1488 = vld [vmem:[%s880 + $0x45] sm:$0x1]
    %v1491 = vrot.slane %v1487, 2
    %v1492 = vrot.slane %v1488, 1
    %v1493 = vsel %vm797, %v1492, %v1491
    %1494 = vrot.lane.b32.xlu0 %v1493, 96
    %v1495 = vpop.permute.xlu0 %1494
    %1497 = vst.msk [vmem:[#allocation3 + $0x20] sm:$0xc0] %vm836, %v1495
    %v1498 = vld [vmem:[%s923 + $0x2] sm:$0x1]
    %v1499 = vld [vmem:[%s923 + $0x42] sm:$0x1]
    %v1502 = vrot.slane %v1498, 2
    %v1503 = vrot.slane %v1499, 1
    %v1504 = vsel %vm797, %v1503, %v1502
    %1506 = vst.msk [vmem:[#allocation3 + $0x28] sm:$0xc0] %vm800, %v1504
    %v1507 = vld [vmem:[%s923 + $0x3] sm:$0x1]
    %v1508 = vld [vmem:[%s923 + $0x43] sm:$0x1]
    %v1511 = vrot.slane %v1507, 2
    %v1512 = vrot.slane %v1508, 1
    %v1513 = vsel %vm797, %v1512, %v1511
    %1514 = vrot.lane.b32.xlu0 %v1513, 32
    %v1515 = vpop.permute.xlu0 %1514
    %1517 = vst.msk [vmem:[#allocation3 + $0x28] sm:$0xc0] %vm812, %v1515
    %v1518 = vld [vmem:[%s923 + $0x4] sm:$0x1]
    %v1519 = vld [vmem:[%s923 + $0x44] sm:$0x1]
    %v1522 = vrot.slane %v1518, 2
    %v1523 = vrot.slane %v1519, 1
    %v1524 = vsel %vm797, %v1523, %v1522
    %1525 = vrot.lane.b32.xlu0 %v1524, 64
    %v1526 = vpop.permute.xlu0 %1525
    %1528 = vst.msk [vmem:[#allocation3 + $0x28] sm:$0xc0] %vm824, %v1526
    %v1529 = vld [vmem:[%s923 + $0x5] sm:$0x1]
    %v1530 = vld [vmem:[%s923 + $0x45] sm:$0x1]
    %v1533 = vrot.slane %v1529, 2
    %v1534 = vrot.slane %v1530, 1
    %v1535 = vsel %vm797, %v1534, %v1533
    %1536 = vrot.lane.b32.xlu0 %v1535, 96
    %v1537 = vpop.permute.xlu0 %1536
    %1539 = vst.msk [vmem:[#allocation3 + $0x28] sm:$0xc0] %vm836, %v1537
    %v1540 = vld [vmem:[%s1370 + $0x2] sm:$0x1]
    %v1541 = vld [vmem:[%s1370 + $0x42] sm:$0x1]
    %v1544 = vrot.slane %v1540, 2
    %v1545 = vrot.slane %v1541, 1
    %v1546 = vsel %vm797, %v1545, %v1544
    %1548 = vst.msk [vmem:[#allocation3 + $0x30] sm:$0xc0] %vm800, %v1546
    %v1549 = vld [vmem:[%s1370 + $0x3] sm:$0x1]
    %v1550 = vld [vmem:[%s1370 + $0x43] sm:$0x1]
    %v1553 = vrot.slane %v1549, 2
    %v1554 = vrot.slane %v1550, 1
    %v1555 = vsel %vm797, %v1554, %v1553
    %1556 = vrot.lane.b32.xlu0 %v1555, 32
    %v1557 = vpop.permute.xlu0 %1556
    %1559 = vst.msk [vmem:[#allocation3 + $0x30] sm:$0xc0] %vm812, %v1557
    %v1560 = vld [vmem:[%s1370 + $0x4] sm:$0x1]
    %v1561 = vld [vmem:[%s1370 + $0x44] sm:$0x1]
    %v1564 = vrot.slane %v1560, 2
    %v1565 = vrot.slane %v1561, 1
    %v1566 = vsel %vm797, %v1565, %v1564
    %1567 = vrot.lane.b32.xlu0 %v1566, 64
    %v1568 = vpop.permute.xlu0 %1567
    %1570 = vst.msk [vmem:[#allocation3 + $0x30] sm:$0xc0] %vm824, %v1568
    %v1571 = vld [vmem:[%s1370 + $0x5] sm:$0x1]
    %v1572 = vld [vmem:[%s1370 + $0x45] sm:$0x1]
    %v1575 = vrot.slane %v1571, 2
    %v1576 = vrot.slane %v1572, 1
    %v1577 = vsel %vm797, %v1576, %v1575
    %1578 = vrot.lane.b32.xlu0 %v1577, 96
    %v1579 = vpop.permute.xlu0 %1578
    %1581 = vst.msk [vmem:[#allocation3 + $0x30] sm:$0xc0] %vm836, %v1579
    %v1582 = vld [vmem:[%s1413 + $0x2] sm:$0x1]
    %v1583 = vld [vmem:[%s1413 + $0x42] sm:$0x1]
    %v1586 = vrot.slane %v1582, 2
    %v1587 = vrot.slane %v1583, 1
    %v1588 = vsel %vm797, %v1587, %v1586
    %1590 = vst.msk [vmem:[#allocation3 + $0x38] sm:$0xc0] %vm800, %v1588
    %v1591 = vld [vmem:[%s1413 + $0x3] sm:$0x1]
    %v1592 = vld [vmem:[%s1413 + $0x43] sm:$0x1]
    %v1595 = vrot.slane %v1591, 2
    %v1596 = vrot.slane %v1592, 1
    %v1597 = vsel %vm797, %v1596, %v1595
    %1598 = vrot.lane.b32.xlu0 %v1597, 32
    %v1599 = vpop.permute.xlu0 %1598
    %1601 = vst.msk [vmem:[#allocation3 + $0x38] sm:$0xc0] %vm812, %v1599
    %v1602 = vld [vmem:[%s1413 + $0x4] sm:$0x1]
    %v1603 = vld [vmem:[%s1413 + $0x44] sm:$0x1]
    %v1606 = vrot.slane %v1602, 2
    %v1607 = vrot.slane %v1603, 1
    %v1608 = vsel %vm797, %v1607, %v1606
    %1609 = vrot.lane.b32.xlu0 %v1608, 64
    %v1610 = vpop.permute.xlu0 %1609
    %1612 = vst.msk [vmem:[#allocation3 + $0x38] sm:$0xc0] %vm824, %v1610
    %v1613 = vld [vmem:[%s1413 + $0x5] sm:$0x1]
    %v1614 = vld [vmem:[%s1413 + $0x45] sm:$0x1]
    %v1617 = vrot.slane %v1613, 2
    %v1618 = vrot.slane %v1614, 1
    %v1619 = vsel %vm797, %v1618, %v1617
    %1620 = vrot.lane.b32.xlu0 %v1619, 96
    %v1621 = vpop.permute.xlu0 %1620
    %1623 = vst.msk [vmem:[#allocation3 + $0x38] sm:$0xc0] %vm836, %v1621
    %v1624 = vld [vmem:[%s880 + $0x4] sm:$0x1]
    %v1625 = vld [vmem:[%s880 + $0x44] sm:$0x1]
    %v1628 = vrot.slane %v1625, 7
    %v1629 = vsel %vm290, %v1628, %v1624
    %1631 = vst.msk [vmem:[#allocation3 + $0x40] sm:$0x3] %vm293, %v1629
    %v1632 = vld [vmem:[%s880 + $0x5] sm:$0x1]
    %v1633 = vld [vmem:[%s880 + $0x45] sm:$0x1]
    %v1636 = vrot.slane %v1633, 7
    %v1637 = vsel %vm290, %v1636, %v1632
    %1638 = vrot.lane.b32.xlu0 %v1637, 32
    %v1639 = vpop.permute.xlu0 %1638
    %1641 = vst.msk [vmem:[#allocation3 + $0x40] sm:$0x3] %vm304, %v1639
    %v1642 = vld [vmem:[%s880 + $0x6] sm:$0x1]
    %v1643 = vld [vmem:[%s880 + $0x46] sm:$0x1]
    %v1646 = vrot.slane %v1643, 7
    %v1647 = vsel %vm290, %v1646, %v1642
    %1648 = vrot.lane.b32.xlu0 %v1647, 64
    %v1649 = vpop.permute.xlu0 %1648
    %1651 = vst.msk [vmem:[#allocation3 + $0x40] sm:$0x3] %vm315, %v1649
    %v1652 = vld [vmem:[%s880 + $0x7] sm:$0x1]
    %v1653 = vld [vmem:[%s880 + $0x47] sm:$0x1]
    %v1656 = vrot.slane %v1653, 7
    %v1657 = vsel %vm290, %v1656, %v1652
    %1658 = vrot.lane.b32.xlu0 %v1657, 96
    %v1659 = vpop.permute.xlu0 %1658
    %1661 = vst.msk [vmem:[#allocation3 + $0x40] sm:$0x3] %vm326, %v1659
    %v1662 = vld [vmem:[%s923 + $0x4] sm:$0x1]
    %v1663 = vld [vmem:[%s923 + $0x44] sm:$0x1]
    %v1666 = vrot.slane %v1663, 7
    %v1667 = vsel %vm290, %v1666, %v1662
    %1669 = vst.msk [vmem:[#allocation3 + $0x48] sm:$0x3] %vm293, %v1667
    %v1670 = vld [vmem:[%s923 + $0x5] sm:$0x1]
    %v1671 = vld [vmem:[%s923 + $0x45] sm:$0x1]
    %v1674 = vrot.slane %v1671, 7
    %v1675 = vsel %vm290, %v1674, %v1670
    %1676 = vrot.lane.b32.xlu0 %v1675, 32
    %v1677 = vpop.permute.xlu0 %1676
    %1679 = vst.msk [vmem:[#allocation3 + $0x48] sm:$0x3] %vm304, %v1677
    %v1680 = vld [vmem:[%s923 + $0x6] sm:$0x1]
    %v1681 = vld [vmem:[%s923 + $0x46] sm:$0x1]
    %v1684 = vrot.slane %v1681, 7
    %v1685 = vsel %vm290, %v1684, %v1680
    %1686 = vrot.lane.b32.xlu0 %v1685, 64
    %v1687 = vpop.permute.xlu0 %1686
    %1689 = vst.msk [vmem:[#allocation3 + $0x48] sm:$0x3] %vm315, %v1687
    %v1690 = vld [vmem:[%s923 + $0x7] sm:$0x1]
    %v1691 = vld [vmem:[%s923 + $0x47] sm:$0x1]
    %v1694 = vrot.slane %v1691, 7
    %v1695 = vsel %vm290, %v1694, %v1690
    %1696 = vrot.lane.b32.xlu0 %v1695, 96
    %v1697 = vpop.permute.xlu0 %1696
    %1699 = vst.msk [vmem:[#allocation3 + $0x48] sm:$0x3] %vm326, %v1697
    %v1700 = vld [vmem:[%s1370 + $0x4] sm:$0x1]
    %v1701 = vld [vmem:[%s1370 + $0x44] sm:$0x1]
    %v1704 = vrot.slane %v1701, 7
    %v1705 = vsel %vm290, %v1704, %v1700
    %1707 = vst.msk [vmem:[#allocation3 + $0x50] sm:$0x3] %vm293, %v1705
    %v1708 = vld [vmem:[%s1370 + $0x5] sm:$0x1]
    %v1709 = vld [vmem:[%s1370 + $0x45] sm:$0x1]
    %v1712 = vrot.slane %v1709, 7
    %v1713 = vsel %vm290, %v1712, %v1708
    %1714 = vrot.lane.b32.xlu0 %v1713, 32
    %v1715 = vpop.permute.xlu0 %1714
    %1717 = vst.msk [vmem:[#allocation3 + $0x50] sm:$0x3] %vm304, %v1715
    %v1718 = vld [vmem:[%s1370 + $0x6] sm:$0x1]
    %v1719 = vld [vmem:[%s1370 + $0x46] sm:$0x1]
    %v1722 = vrot.slane %v1719, 7
    %v1723 = vsel %vm290, %v1722, %v1718
    %1724 = vrot.lane.b32.xlu0 %v1723, 64
    %v1725 = vpop.permute.xlu0 %1724
    %1727 = vst.msk [vmem:[#allocation3 + $0x50] sm:$0x3] %vm315, %v1725
    %v1728 = vld [vmem:[%s1370 + $0x7] sm:$0x1]
    %v1729 = vld [vmem:[%s1370 + $0x47] sm:$0x1]
    %v1732 = vrot.slane %v1729, 7
    %v1733 = vsel %vm290, %v1732, %v1728
    %1734 = vrot.lane.b32.xlu0 %v1733, 96
    %v1735 = vpop.permute.xlu0 %1734
    %1737 = vst.msk [vmem:[#allocation3 + $0x50] sm:$0x3] %vm326, %v1735
    %v1738 = vld [vmem:[%s1413 + $0x4] sm:$0x1]
    %v1739 = vld [vmem:[%s1413 + $0x44] sm:$0x1]
    %v1742 = vrot.slane %v1739, 7
    %v1743 = vsel %vm290, %v1742, %v1738
    %1745 = vst.msk [vmem:[#allocation3 + $0x58] sm:$0x3] %vm293, %v1743
    %v1746 = vld [vmem:[%s1413 + $0x5] sm:$0x1]
    %v1747 = vld [vmem:[%s1413 + $0x45] sm:$0x1]
    %v1750 = vrot.slane %v1747, 7
    %v1751 = vsel %vm290, %v1750, %v1746
    %1752 = vrot.lane.b32.xlu0 %v1751, 32
    %v1753 = vpop.permute.xlu0 %1752
    %1755 = vst.msk [vmem:[#allocation3 + $0x58] sm:$0x3] %vm304, %v1753
    %v1756 = vld [vmem:[%s1413 + $0x6] sm:$0x1]
    %v1757 = vld [vmem:[%s1413 + $0x46] sm:$0x1]
    %v1760 = vrot.slane %v1757, 7
    %v1761 = vsel %vm290, %v1760, %v1756
    %1762 = vrot.lane.b32.xlu0 %v1761, 64
    %v1763 = vpop.permute.xlu0 %1762
    %1765 = vst.msk [vmem:[#allocation3 + $0x58] sm:$0x3] %vm315, %v1763
    %v1766 = vld [vmem:[%s1413 + $0x7] sm:$0x1]
    %v1767 = vld [vmem:[%s1413 + $0x47] sm:$0x1]
    %v1770 = vrot.slane %v1767, 7
    %v1771 = vsel %vm290, %v1770, %v1766
    %1772 = vrot.lane.b32.xlu0 %v1771, 96
    %v1773 = vpop.permute.xlu0 %1772
    %1775 = vst.msk [vmem:[#allocation3 + $0x58] sm:$0x3] %vm326, %v1773
    %v1776 = vld [vmem:[#allocation3] sm:$0xff]
    %v1777 = vld [vmem:[#allocation3 + $0x8] sm:$0xff]
    %v1778 = vld [vmem:[#allocation3 + $0x10] sm:$0xff]
    %v1779 = vld [vmem:[#allocation3 + $0x18] sm:$0xff]
    %v1780 = vld [vmem:[#allocation3 + $0x20] sm:$0xff]
    %v1781 = vld [vmem:[#allocation3 + $0x28] sm:$0xff]
    %v1782 = vld [vmem:[#allocation3 + $0x30] sm:$0xff]
    %v1783 = vld [vmem:[#allocation3 + $0x38] sm:$0xff]
    %v1784 = vld [vmem:[#allocation3 + $0x40] sm:$0x3]
    %v1785 = vld [vmem:[#allocation3 + $0x48] sm:$0x3]
    %v1786 = vld [vmem:[#allocation3 + $0x50] sm:$0x3]
    %v1787 = vld [vmem:[#allocation3 + $0x58] sm:$0x3]
    %v1788 = vld [vmem:[%s4] sm:$0xff]
    %v1789 = vld [vmem:[%s4 + $0x8] sm:$0xff]
    %v1790 = vld [vmem:[%s4 + $0x10] sm:$0xff]
    %v1791 = vld [vmem:[%s4 + $0x18] sm:$0xff]
    %v1792 = vld [vmem:[%s4 + $0x20] sm:$0xff]
    %v1793 = vld [vmem:[%s4 + $0x28] sm:$0xff]
    %v1794 = vld [vmem:[%s4 + $0x30] sm:$0xff]
    %v1795 = vld [vmem:[%s4 + $0x38] sm:$0xff]
    %v1796 = vld [vmem:[%s4 + $0x40] sm:$0xff]
    %v1797 = vld [vmem:[%s4 + $0x48] sm:$0xff]
    %v1798 = vld [vmem:[%s4 + $0x50] sm:$0xff]
    %v1799 = vld [vmem:[%s4 + $0x58] sm:$0xff]
    %v1800 = vld [vmem:[%s4 + $0x60] sm:$0xff]
    %v1801 = vld [vmem:[%s4 + $0x68] sm:$0xff]
    %v1802 = vld [vmem:[%s4 + $0x70] sm:$0xff]
    %v1803 = vld [vmem:[%s4 + $0x78] sm:$0xff]
    %v1804 = vld [vmem:[%s4 + $0x80] sm:$0xff]
    %v1805 = vld [vmem:[%s4 + $0x88] sm:$0xff]
    %v1806 = vld [vmem:[%s4 + $0x90] sm:$0xff]
    %v1807 = vld [vmem:[%s4 + $0x98] sm:$0xff]
    %v1808 = vld [vmem:[%s4 + $0xa0] sm:$0xff]
    %v1809 = vld [vmem:[%s4 + $0xa8] sm:$0xff]
    %v1810 = vld [vmem:[%s4 + $0xb0] sm:$0xff]
    %v1811 = vld [vmem:[%s4 + $0xb8] sm:$0xff]
    %v1812 = vld [vmem:[%s4 + $0xc0] sm:$0xff]
    %v1813 = vld [vmem:[%s4 + $0xc8] sm:$0xff]
    %v1814 = vld [vmem:[%s4 + $0xd0] sm:$0xff]
    %v1815 = vld [vmem:[%s4 + $0xd8] sm:$0xff]
    %v1816 = vld [vmem:[%s4 + $0xe0] sm:$0xff]
    %v1817 = vld [vmem:[%s4 + $0xe8] sm:$0xff]
    %v1818 = vld [vmem:[%s4 + $0xf0] sm:$0xff]
    %v1819 = vld [vmem:[%s4 + $0xf8] sm:$0xff]
    %v1820 = vld [vmem:[%s4 + $0x100] sm:$0xff]
    %v1821 = vld [vmem:[%s4 + $0x108] sm:$0xff]
    %v1822 = vld [vmem:[%s4 + $0x110] sm:$0xff]
    %v1823 = vld [vmem:[%s4 + $0x118] sm:$0xff]
    %v1824 = vld [vmem:[%s4 + $0x120] sm:$0xff]
    %v1825 = vld [vmem:[%s4 + $0x128] sm:$0xff]
    %v1826 = vld [vmem:[%s4 + $0x130] sm:$0xff]
    %v1827 = vld [vmem:[%s4 + $0x138] sm:$0xff]
    %v1828 = vld [vmem:[%s4 + $0x140] sm:$0xff]
    %v1829 = vld [vmem:[%s4 + $0x148] sm:$0xff]
    %v1830 = vld [vmem:[%s4 + $0x150] sm:$0xff]
    %v1831 = vld [vmem:[%s4 + $0x158] sm:$0xff]
    %v1832 = vld [vmem:[%s4 + $0x160] sm:$0xff]
    %v1833 = vld [vmem:[%s4 + $0x168] sm:$0xff]
    %v1834 = vld [vmem:[%s4 + $0x170] sm:$0xff]
    %v1835 = vld [vmem:[%s4 + $0x178] sm:$0xff]
    %v1836 = vld [vmem:[%s4 + $0x180] sm:$0xff]
    %v1837 = vld [vmem:[%s4 + $0x188] sm:$0xff]
    %v1838 = vld [vmem:[%s4 + $0x190] sm:$0xff]
    %v1839 = vld [vmem:[%s4 + $0x198] sm:$0xff]
    %v1840 = vld [vmem:[%s4 + $0x1a0] sm:$0xff]
    %v1841 = vld [vmem:[%s4 + $0x1a8] sm:$0xff]
    %v1842 = vld [vmem:[%s4 + $0x1b0] sm:$0xff]
    %v1843 = vld [vmem:[%s4 + $0x1b8] sm:$0xff]
    %v1844 = vld [vmem:[%s4 + $0x1c0] sm:$0xff]
    %v1845 = vld [vmem:[%s4 + $0x1c8] sm:$0xff]
    %v1846 = vld [vmem:[%s4 + $0x1d0] sm:$0xff]
    %v1847 = vld [vmem:[%s4 + $0x1d8] sm:$0xff]
    %v1848 = vld [vmem:[%s4 + $0x1e0] sm:$0xff]
    %v1849 = vld [vmem:[%s4 + $0x1e8] sm:$0xff]
    %v1850 = vld [vmem:[%s4 + $0x1f0] sm:$0xff]
    %v1851 = vld [vmem:[%s4 + $0x1f8] sm:$0xff]
    %v1852 = vld [vmem:[%s5] sm:$0x1]
    %v1854 = vlaneseq
    %v1855 = vshrl.u32 %v1854, 7
    %v1856 = vsub.s32 0, %v1855
    %v1857 = vrot.slane %v1852, %v1856
    %1859 = vmatprep.subr.mxu0 0.0
    %1860 = vmatpush1.msra.mxu0 %v1803
    %1861 = vmatprep.subr.mxu0 0.0
    %1862 = vmatpush1.msra.mxu0 %v1802
    %1863 = vmatprep.subr.mxu0 0.0
    %1864 = vmatpush1.msra.mxu0 %v1801
    %1865 = vmatprep.subr.mxu0 0.0
    %1866 = vmatpush1.msra.mxu0 %v1800
    %1867 = vmatprep.subr.mxu0 0.0
    %1868 = vmatpush1.msra.mxu0 %v1799
    %1869 = vmatprep.subr.mxu0 0.0
    %1870 = vmatpush1.msra.mxu0 %v1798
    %1871 = vmatprep.subr.mxu0 0.0
    %1872 = vmatpush1.msra.mxu0 %v1797
    %1873 = vmatprep.subr.mxu0 0.0
    %1874 = vmatpush1.msra.mxu0 %v1796
    %1875 = vmatprep.subr.mxu0 0.0
    %1876 = vmatpush1.msra.mxu0 %v1795
    %1877 = vmatprep.subr.mxu0 0.0
    %1878 = vmatpush1.msra.mxu0 %v1794
    %1879 = vmatprep.subr.mxu0 0.0
    %1880 = vmatpush1.msra.mxu0 %v1793
    %1881 = vmatprep.subr.mxu0 0.0
    %1882 = vmatpush1.msra.mxu0 %v1792
    %1883 = vmatprep.subr.mxu0 0.0
    %1884 = vmatpush1.msra.mxu0 %v1791
    %1885 = vmatprep.subr.mxu0 0.0
    %1886 = vmatpush1.msra.mxu0 %v1790
    %1887 = vmatprep.subr.mxu0 0.0
    %1888 = vmatpush1.msra.mxu0 %v1789
    %1889 = vmatprep.subr.mxu0 0.0
    %1890 = vmatpush1.msra.mxu0 %v1788
    %1891 = vmatprep.subr.mxu0 0.0
    %1892 = vmatpush2.msra.mxu0 %v1819
    %1893 = vmatprep.subr.mxu0 0.0
    %1894 = vmatpush2.msra.mxu0 %v1818
    %1895 = vmatprep.subr.mxu0 0.0
    %1896 = vmatpush2.msra.mxu0 %v1817
    %1897 = vmatprep.subr.mxu0 0.0
    %1898 = vmatpush2.msra.mxu0 %v1816
    %1899 = vmatprep.subr.mxu0 0.0
    %1900 = vmatpush2.msra.mxu0 %v1815
    %1901 = vmatprep.subr.mxu0 0.0
    %1902 = vmatpush2.msra.mxu0 %v1814
    %1903 = vmatprep.subr.mxu0 0.0
    %1904 = vmatpush2.msra.mxu0 %v1813
    %1905 = vmatprep.subr.mxu0 0.0
    %1906 = vmatpush2.msra.mxu0 %v1812
    %1907 = vmatprep.subr.mxu0 0.0
    %1908 = vmatpush2.msra.mxu0 %v1811
    %1909 = vmatprep.subr.mxu0 0.0
    %1910 = vmatpush2.msra.mxu0 %v1810
    %1911 = vmatprep.subr.mxu0 0.0
    %1912 = vmatpush2.msra.mxu0 %v1809
    %1913 = vmatprep.subr.mxu0 0.0
    %1914 = vmatpush2.msra.mxu0 %v1808
    %1915 = vmatprep.subr.mxu0 0.0
    %1916 = vmatpush2.msra.mxu0 %v1807
    %1917 = vmatprep.subr.mxu0 0.0
    %1918 = vmatpush2.msra.mxu0 %v1806
    %1919 = vmatprep.subr.mxu0 0.0
    %1920 = vmatpush2.msra.mxu0 %v1805
    %1921 = vmatprep.subr.mxu0 0.0
    %1922 = vmatpush2.msra.mxu0 %v1804
    %1923 = vmatprep.mubr.f32.mxu0 %v1777
    %1924 = vmatmul.mubr.f32.gmra.mxu0 %v1776
    %v1925 = vpop.f32.mrf.mxu0
    %v1926 = vadd.f32 %v1857, %v1925
    %v1927 = vpop.f32.mrf.mxu0
    %1928 = vmatprep.mubr.f32.mxu0 %v1781
    %1929 = vmatmul.mubr.f32.gmra.mxu0 %v1780
    %v1930 = vpop.f32.mrf.mxu0
    %v1931 = vadd.f32 %v1857, %v1930
    %v1932 = vpop.f32.mrf.mxu0
    %1933 = vmatprep.mubr.f32.mxu0 %v1785
    %1934 = vmatmul.mubr.f32.gmra.mxu0 %v1784
    %v1935 = vpop.f32.mrf.mxu0
    %v1936 = vadd.f32 %v1857, %v1935
    %v1937 = vpop.f32.mrf.mxu0
    %1938 = vdwg.mxu0
    %1939 = vmatprep.subr.mxu0 0.0
    %1940 = vmatpush1.msra.mxu0 %v1835
    %1941 = vmatprep.subr.mxu0 0.0
    %1942 = vmatpush1.msra.mxu0 %v1834
    %1943 = vmatprep.subr.mxu0 0.0
    %1944 = vmatpush1.msra.mxu0 %v1833
    %1945 = vmatprep.subr.mxu0 0.0
    %1946 = vmatpush1.msra.mxu0 %v1832
    %1947 = vmatprep.subr.mxu0 0.0
    %1948 = vmatpush1.msra.mxu0 %v1831
    %1949 = vmatprep.subr.mxu0 0.0
    %1950 = vmatpush1.msra.mxu0 %v1830
    %1951 = vmatprep.subr.mxu0 0.0
    %1952 = vmatpush1.msra.mxu0 %v1829
    %1953 = vmatprep.subr.mxu0 0.0
    %1954 = vmatpush1.msra.mxu0 %v1828
    %1955 = vmatprep.subr.mxu0 0.0
    %1956 = vmatpush1.msra.mxu0 %v1827
    %1957 = vmatprep.subr.mxu0 0.0
    %1958 = vmatpush1.msra.mxu0 %v1826
    %1959 = vmatprep.subr.mxu0 0.0
    %1960 = vmatpush1.msra.mxu0 %v1825
    %1961 = vmatprep.subr.mxu0 0.0
    %1962 = vmatpush1.msra.mxu0 %v1824
    %1963 = vmatprep.subr.mxu0 0.0
    %1964 = vmatpush1.msra.mxu0 %v1823
    %1965 = vmatprep.subr.mxu0 0.0
    %1966 = vmatpush1.msra.mxu0 %v1822
    %1967 = vmatprep.subr.mxu0 0.0
    %1968 = vmatpush1.msra.mxu0 %v1821
    %1969 = vmatprep.subr.mxu0 0.0
    %1970 = vmatpush1.msra.mxu0 %v1820
    %1971 = vmatprep.subr.mxu0 0.0
    %1972 = vmatpush2.msra.mxu0 %v1851
    %1973 = vmatprep.subr.mxu0 0.0
    %1974 = vmatpush2.msra.mxu0 %v1850
    %1975 = vmatprep.subr.mxu0 0.0
    %1976 = vmatpush2.msra.mxu0 %v1849
    %1977 = vmatprep.subr.mxu0 0.0
    %1978 = vmatpush2.msra.mxu0 %v1848
    %1979 = vmatprep.subr.mxu0 0.0
    %1980 = vmatpush2.msra.mxu0 %v1847
    %1981 = vmatprep.subr.mxu0 0.0
    %1982 = vmatpush2.msra.mxu0 %v1846
    %1983 = vmatprep.subr.mxu0 0.0
    %1984 = vmatpush2.msra.mxu0 %v1845
    %1985 = vmatprep.subr.mxu0 0.0
    %1986 = vmatpush2.msra.mxu0 %v1844
    %1987 = vmatprep.subr.mxu0 0.0
    %1988 = vmatpush2.msra.mxu0 %v1843
    %1989 = vmatprep.subr.mxu0 0.0
    %1990 = vmatpush2.msra.mxu0 %v1842
    %1991 = vmatprep.subr.mxu0 0.0
    %1992 = vmatpush2.msra.mxu0 %v1841
    %1993 = vmatprep.subr.mxu0 0.0
    %1994 = vmatpush2.msra.mxu0 %v1840
    %1995 = vmatprep.subr.mxu0 0.0
    %1996 = vmatpush2.msra.mxu0 %v1839
    %1997 = vmatprep.subr.mxu0 0.0
    %1998 = vmatpush2.msra.mxu0 %v1838
    %1999 = vmatprep.subr.mxu0 0.0
    %2000 = vmatpush2.msra.mxu0 %v1837
    %2001 = vmatprep.subr.mxu0 0.0
    %2002 = vmatpush2.msra.mxu0 %v1836
    %2003 = vmatprep.mubr.f32.mxu0 %v1779
    %2004 = vmatmul.mubr.f32.gmra.mxu0 %v1778
    %v2005 = vpop.f32.mrf.mxu0
    %v2006 = vadd.f32 %v1926, %v2005
    %v2007 = vpop.f32.mrf.mxu0
    %2008 = vmatprep.mubr.f32.mxu0 %v1783
    %2009 = vmatmul.mubr.f32.gmra.mxu0 %v1782
    %v2010 = vpop.f32.mrf.mxu0
    %v2011 = vadd.f32 %v1931, %v2010
    %v2012 = vpop.f32.mrf.mxu0
    %2013 = vmatprep.mubr.f32.mxu0 %v1787
    %2014 = vmatmul.mubr.f32.gmra.mxu0 %v1786
    %v2015 = vpop.f32.mrf.mxu0
    %v2016 = vadd.f32 %v1936, %v2015
    %v2017 = vpop.f32.mrf.mxu0
    %2018 = vdwg.mxu0
    %v2019 = vmax.f32 %v2006, 0.0
    %v2020 = vmax.f32 %v2011, 0.0
    %v2021 = vmax.f32 %v2016, 0.0
    %vm2022 = vcmask 523264
    %2023 = vst.msk [vmem:[#allocation4] sm:$0xff] %vm2022, %v2019
    %2024 = vst.msk [vmem:[#allocation4 + $0x8] sm:$0xff] %vm2022, %v2020
    %vm2025 = vcmask 517120
    %2026 = vst.msk [vmem:[#allocation4 + $0x10] sm:$0x3] %vm2025, %v2021
    %v2027 = vld [vmem:[#allocation4] sm:$0x3]
    %2028 = vst.msk [vmem:[#allocation5] sm:$0x3] %vm2025, %v2027
    %v2029 = vld [vmem:[#allocation4 + $0x2] sm:$0x3]
    %v2032 = vunpack.c.l.s4 1983009808
    %v2033 = vunpack.c.0.s8 %v2032
    %v2034 = vlaneseq
    %v2035 = vshrl.u32 %v2034, 7
    %v2036 = vsub.s32 %v2033, %v2035
    %v2037 = vrot.slane %v2029, %v2036
    %2038 = vrot.lane.b32.xlu0 %v2037, 64
    %v2039 = vpop.permute.xlu0 %2038
    %vm2041 = vcmask 1041920
    %2042 = vst.msk [vmem:[#allocation5] sm:$0x3] %vm2041, %v2039
    %v2043 = vld [vmem:[#allocation4 + $0x4] sm:$0x3]
    %2044 = vst.msk [vmem:[#allocation5 + $0x2] sm:$0x3] %vm2025, %v2043
    %v2045 = vld [vmem:[#allocation4 + $0x6] sm:$0x3]
    %v2048 = vunpack.c.l.s4 1983009808
    %v2049 = vunpack.c.0.s8 %v2048
    %v2050 = vlaneseq
    %v2051 = vshrl.u32 %v2050, 7
    %v2052 = vsub.s32 %v2049, %v2051
    %v2053 = vrot.slane %v2045, %v2052
    %2054 = vrot.lane.b32.xlu0 %v2053, 64
    %v2055 = vpop.permute.xlu0 %2054
    %2057 = vst.msk [vmem:[#allocation5 + $0x2] sm:$0x3] %vm2041, %v2055
    %v2058 = vld [vmem:[#allocation4 + $0x8] sm:$0x3]
    %2059 = vst.msk [vmem:[#allocation5 + $0x4] sm:$0x3] %vm2025, %v2058
    %v2060 = vld [vmem:[#allocation4 + $0xa] sm:$0x3]
    %v2063 = vunpack.c.l.s4 1983009808
    %v2064 = vunpack.c.0.s8 %v2063
    %v2065 = vlaneseq
    %v2066 = vshrl.u32 %v2065, 7
    %v2067 = vsub.s32 %v2064, %v2066
    %v2068 = vrot.slane %v2060, %v2067
    %2069 = vrot.lane.b32.xlu0 %v2068, 64
    %v2070 = vpop.permute.xlu0 %2069
    %2072 = vst.msk [vmem:[#allocation5 + $0x4] sm:$0x3] %vm2041, %v2070
    %v2073 = vld [vmem:[#allocation4 + $0xc] sm:$0x3]
    %2074 = vst.msk [vmem:[#allocation5 + $0x6] sm:$0x3] %vm2025, %v2073
    %v2075 = vld [vmem:[#allocation4 + $0xe] sm:$0x3]
    %v2078 = vunpack.c.l.s4 1983009808
    %v2079 = vunpack.c.0.s8 %v2078
    %v2080 = vlaneseq
    %v2081 = vshrl.u32 %v2080, 7
    %v2082 = vsub.s32 %v2079, %v2081
    %v2083 = vrot.slane %v2075, %v2082
    %2084 = vrot.lane.b32.xlu0 %v2083, 64
    %v2085 = vpop.permute.xlu0 %2084
    %2087 = vst.msk [vmem:[#allocation5 + $0x6] sm:$0x3] %vm2041, %v2085
    %v2088 = vld [vmem:[#allocation4 + $0x10] sm:$0x3]
    %2089 = vst.msk [vmem:[#allocation5 + $0x8] sm:$0x3] %vm2025, %v2088
    %v2090 = vld [vmem:[#allocation5] sm:$0xff]
    %v2091 = vld [vmem:[#allocation5 + $0x8] sm:$0x3]
    %v2092 = vld [vmem:[%s6] sm:$0xff]
    %v2093 = vld [vmem:[%s6 + $0x8] sm:$0xff]
    %v2094 = vld [vmem:[%s6 + $0x10] sm:$0xff]
    %v2095 = vld [vmem:[%s6 + $0x18] sm:$0xff]
    %v2096 = vld [vmem:[%s6 + $0x20] sm:$0xff]
    %v2097 = vld [vmem:[%s6 + $0x28] sm:$0xff]
    %v2098 = vld [vmem:[%s6 + $0x30] sm:$0xff]
    %v2099 = vld [vmem:[%s6 + $0x38] sm:$0xff]
    %v2100 = vld [vmem:[%s6 + $0x40] sm:$0xff]
    %v2101 = vld [vmem:[%s6 + $0x48] sm:$0xff]
    %v2102 = vld [vmem:[%s6 + $0x50] sm:$0xff]
    %v2103 = vld [vmem:[%s6 + $0x58] sm:$0xff]
    %v2104 = vld [vmem:[%s6 + $0x60] sm:$0xff]
    %v2105 = vld [vmem:[%s6 + $0x68] sm:$0xff]
    %v2106 = vld [vmem:[%s6 + $0x70] sm:$0xff]
    %v2107 = vld [vmem:[%s6 + $0x78] sm:$0xff]
    %v2108 = vld [vmem:[%s6 + $0x80] sm:$0xff]
    %v2109 = vld [vmem:[%s6 + $0x88] sm:$0xff]
    %v2110 = vld [vmem:[%s6 + $0x90] sm:$0xff]
    %v2111 = vld [vmem:[%s6 + $0x98] sm:$0xff]
    %v2112 = vld [vmem:[%s6 + $0xa0] sm:$0xff]
    %v2113 = vld [vmem:[%s6 + $0xa8] sm:$0xff]
    %v2114 = vld [vmem:[%s6 + $0xb0] sm:$0xff]
    %v2115 = vld [vmem:[%s6 + $0xb8] sm:$0xff]
    %v2116 = vld [vmem:[%s6 + $0xc0] sm:$0xff]
    %v2117 = vld [vmem:[%s6 + $0xc8] sm:$0xff]
    %v2118 = vld [vmem:[%s6 + $0xd0] sm:$0xff]
    %v2119 = vld [vmem:[%s6 + $0xd8] sm:$0xff]
    %v2120 = vld [vmem:[%s6 + $0xe0] sm:$0xff]
    %v2121 = vld [vmem:[%s6 + $0xe8] sm:$0xff]
    %v2122 = vld [vmem:[%s6 + $0xf0] sm:$0xff]
    %v2123 = vld [vmem:[%s6 + $0xf8] sm:$0xff]
    %v2124 = vld [vmem:[%s6 + $0x100] sm:$0xff]
    %v2125 = vld [vmem:[%s6 + $0x108] sm:$0xff]
    %v2126 = vld [vmem:[%s6 + $0x110] sm:$0xff]
    %v2127 = vld [vmem:[%s6 + $0x118] sm:$0xff]
    %v2128 = vld [vmem:[%s6 + $0x120] sm:$0xff]
    %v2129 = vld [vmem:[%s6 + $0x128] sm:$0xff]
    %v2130 = vld [vmem:[%s6 + $0x130] sm:$0xff]
    %v2131 = vld [vmem:[%s6 + $0x138] sm:$0xff]
    %v2132 = vld [vmem:[%s6 + $0x140] sm:$0xff]
    %v2133 = vld [vmem:[%s6 + $0x148] sm:$0xff]
    %v2134 = vld [vmem:[%s6 + $0x150] sm:$0xff]
    %v2135 = vld [vmem:[%s6 + $0x158] sm:$0xff]
    %v2136 = vld [vmem:[%s6 + $0x160] sm:$0xff]
    %v2137 = vld [vmem:[%s6 + $0x168] sm:$0xff]
    %v2138 = vld [vmem:[%s6 + $0x170] sm:$0xff]
    %v2139 = vld [vmem:[%s6 + $0x178] sm:$0xff]
    %v2140 = vld [vmem:[%s6 + $0x180] sm:$0xff]
    %v2141 = vld [vmem:[%s6 + $0x188] sm:$0xff]
    %v2142 = vld [vmem:[%s6 + $0x190] sm:$0xff]
    %v2143 = vld [vmem:[%s6 + $0x198] sm:$0xff]
    %v2144 = vld [vmem:[%s6 + $0x1a0] sm:$0xff]
    %v2145 = vld [vmem:[%s6 + $0x1a8] sm:$0xff]
    %v2146 = vld [vmem:[%s6 + $0x1b0] sm:$0xff]
    %v2147 = vld [vmem:[%s6 + $0x1b8] sm:$0xff]
    %v2148 = vld [vmem:[%s6 + $0x1c0] sm:$0xff]
    %v2149 = vld [vmem:[%s6 + $0x1c8] sm:$0xff]
    %v2150 = vld [vmem:[%s6 + $0x1d0] sm:$0xff]
    %v2151 = vld [vmem:[%s6 + $0x1d8] sm:$0xff]
    %v2152 = vld [vmem:[%s6 + $0x1e0] sm:$0xff]
    %v2153 = vld [vmem:[%s6 + $0x1e8] sm:$0xff]
    %v2154 = vld [vmem:[%s6 + $0x1f0] sm:$0xff]
    %v2155 = vld [vmem:[%s6 + $0x1f8] sm:$0xff]
    %v2156 = vld [vmem:[%s6 + $0x200] sm:$0xff]
    %v2157 = vld [vmem:[%s6 + $0x208] sm:$0xff]
    %v2158 = vld [vmem:[%s6 + $0x210] sm:$0xff]
    %v2159 = vld [vmem:[%s6 + $0x218] sm:$0xff]
    %v2160 = vld [vmem:[%s6 + $0x220] sm:$0xff]
    %v2161 = vld [vmem:[%s6 + $0x228] sm:$0xff]
    %v2162 = vld [vmem:[%s6 + $0x230] sm:$0xff]
    %v2163 = vld [vmem:[%s6 + $0x238] sm:$0xff]
    %v2164 = vld [vmem:[%s7] sm:$0x1]
    %v2166 = vlaneseq
    %v2167 = vshrl.u32 %v2166, 7
    %v2168 = vsub.s32 0, %v2167
    %v2169 = vrot.slane %v2164, %v2168
    %v2173 = vcombine.high %v2090, %v2090
    %v2175 = vunpack.c.l.s4 1983009808
    %v2176 = vunpack.c.0.s8 %v2175
    %v2177 = vlaneseq
    %v2178 = vshrl.u32 %v2177, 7
    %v2179 = vsub.s32 %v2176, %v2178
    %v2180 = vrot.slane %v2090, %v2179
    %v2182 = vunpack.c.l.s4 1983009808
    %v2183 = vunpack.c.0.s8 %v2182
    %v2184 = vlaneseq
    %v2185 = vshrl.u32 %v2184, 7
    %v2186 = vsub.s32 %v2183, %v2185
    %v2187 = vrot.slane %v2173, %v2186
    %v2188 = vcombine.high %v2180, %v2180
    %v2189 = vcombine.high %v2187, %v2187
    %v2191 = vunpack.c.l.s4 1983009808
    %v2192 = vunpack.c.0.s8 %v2191
    %v2193 = vlaneseq
    %v2194 = vshrl.u32 %v2193, 7
    %v2195 = vsub.s32 %v2192, %v2194
    %v2196 = vrot.slane %v2091, %v2195
    %v2201 = vsel %vm2022, %v2196, 0
    %2203 = vmatprep.subr.mxu0 0.0
    %2204 = vmatpush1.msra.mxu0 %v2107
    %2205 = vmatprep.subr.mxu0 0.0
    %2206 = vmatpush1.msra.mxu0 %v2106
    %2207 = vmatprep.subr.mxu0 0.0
    %2208 = vmatpush1.msra.mxu0 %v2105
    %2209 = vmatprep.subr.mxu0 0.0
    %2210 = vmatpush1.msra.mxu0 %v2104
    %2211 = vmatprep.subr.mxu0 0.0
    %2212 = vmatpush1.msra.mxu0 %v2103
    %2213 = vmatprep.subr.mxu0 0.0
    %2214 = vmatpush1.msra.mxu0 %v2102
    %2215 = vmatprep.subr.mxu0 0.0
    %2216 = vmatpush1.msra.mxu0 %v2101
    %2217 = vmatprep.subr.mxu0 0.0
    %2218 = vmatpush1.msra.mxu0 %v2100
    %2219 = vmatprep.subr.mxu0 0.0
    %2220 = vmatpush1.msra.mxu0 %v2099
    %2221 = vmatprep.subr.mxu0 0.0
    %2222 = vmatpush1.msra.mxu0 %v2098
    %2223 = vmatprep.subr.mxu0 0.0
    %2224 = vmatpush1.msra.mxu0 %v2097
    %2225 = vmatprep.subr.mxu0 0.0
    %2226 = vmatpush1.msra.mxu0 %v2096
    %2227 = vmatprep.subr.mxu0 0.0
    %2228 = vmatpush1.msra.mxu0 %v2095
    %2229 = vmatprep.subr.mxu0 0.0
    %2230 = vmatpush1.msra.mxu0 %v2094
    %2231 = vmatprep.subr.mxu0 0.0
    %2232 = vmatpush1.msra.mxu0 %v2093
    %2233 = vmatprep.subr.mxu0 0.0
    %2234 = vmatpush1.msra.mxu0 %v2092
    %2235 = vmatprep.subr.mxu0 0.0
    %2236 = vmatpush2.msra.mxu0 %v2123
    %2237 = vmatprep.subr.mxu0 0.0
    %2238 = vmatpush2.msra.mxu0 %v2122
    %2239 = vmatprep.subr.mxu0 0.0
    %2240 = vmatpush2.msra.mxu0 %v2121
    %2241 = vmatprep.subr.mxu0 0.0
    %2242 = vmatpush2.msra.mxu0 %v2120
    %2243 = vmatprep.subr.mxu0 0.0
    %2244 = vmatpush2.msra.mxu0 %v2119
    %2245 = vmatprep.subr.mxu0 0.0
    %2246 = vmatpush2.msra.mxu0 %v2118
    %2247 = vmatprep.subr.mxu0 0.0
    %2248 = vmatpush2.msra.mxu0 %v2117
    %2249 = vmatprep.subr.mxu0 0.0
    %2250 = vmatpush2.msra.mxu0 %v2116
    %2251 = vmatprep.subr.mxu0 0.0
    %2252 = vmatpush2.msra.mxu0 %v2115
    %2253 = vmatprep.subr.mxu0 0.0
    %2254 = vmatpush2.msra.mxu0 %v2114
    %2255 = vmatprep.subr.mxu0 0.0
    %2256 = vmatpush2.msra.mxu0 %v2113
    %2257 = vmatprep.subr.mxu0 0.0
    %2258 = vmatpush2.msra.mxu0 %v2112
    %2259 = vmatprep.subr.mxu0 0.0
    %2260 = vmatpush2.msra.mxu0 %v2111
    %2261 = vmatprep.subr.mxu0 0.0
    %2262 = vmatpush2.msra.mxu0 %v2110
    %2263 = vmatprep.subr.mxu0 0.0
    %2264 = vmatpush2.msra.mxu0 %v2109
    %2265 = vmatprep.subr.mxu0 0.0
    %2266 = vmatpush2.msra.mxu0 %v2108
    %2267 = vmatprep.mubr.f32.mxu0 %v2188
    %2268 = vmatmul.mubr.f32.gmra.mxu0 %v2180
    %v2269 = vpop.f32.mrf.mxu0
    %v2270 = vadd.f32 %v2169, %v2269
    %v2271 = vpop.f32.mrf.mxu0
    %2272 = vdwg.mxu0
    %2273 = vmatprep.subr.mxu0 0.0
    %2274 = vmatpush1.msra.mxu0 %v2139
    %2275 = vmatprep.subr.mxu0 0.0
    %2276 = vmatpush1.msra.mxu0 %v2138
    %2277 = vmatprep.subr.mxu0 0.0
    %2278 = vmatpush1.msra.mxu0 %v2137
    %2279 = vmatprep.subr.mxu0 0.0
    %2280 = vmatpush1.msra.mxu0 %v2136
    %2281 = vmatprep.subr.mxu0 0.0
    %2282 = vmatpush1.msra.mxu0 %v2135
    %2283 = vmatprep.subr.mxu0 0.0
    %2284 = vmatpush1.msra.mxu0 %v2134
    %2285 = vmatprep.subr.mxu0 0.0
    %2286 = vmatpush1.msra.mxu0 %v2133
    %2287 = vmatprep.subr.mxu0 0.0
    %2288 = vmatpush1.msra.mxu0 %v2132
    %2289 = vmatprep.subr.mxu0 0.0
    %2290 = vmatpush1.msra.mxu0 %v2131
    %2291 = vmatprep.subr.mxu0 0.0
    %2292 = vmatpush1.msra.mxu0 %v2130
    %2293 = vmatprep.subr.mxu0 0.0
    %2294 = vmatpush1.msra.mxu0 %v2129
    %2295 = vmatprep.subr.mxu0 0.0
    %2296 = vmatpush1.msra.mxu0 %v2128
    %2297 = vmatprep.subr.mxu0 0.0
    %2298 = vmatpush1.msra.mxu0 %v2127
    %2299 = vmatprep.subr.mxu0 0.0
    %2300 = vmatpush1.msra.mxu0 %v2126
    %2301 = vmatprep.subr.mxu0 0.0
    %2302 = vmatpush1.msra.mxu0 %v2125
    %2303 = vmatprep.subr.mxu0 0.0
    %2304 = vmatpush1.msra.mxu0 %v2124
    %2305 = vmatprep.subr.mxu0 0.0
    %2306 = vmatpush2.msra.mxu0 %v2155
    %2307 = vmatprep.subr.mxu0 0.0
    %2308 = vmatpush2.msra.mxu0 %v2154
    %2309 = vmatprep.subr.mxu0 0.0
    %2310 = vmatpush2.msra.mxu0 %v2153
    %2311 = vmatprep.subr.mxu0 0.0
    %2312 = vmatpush2.msra.mxu0 %v2152
    %2313 = vmatprep.subr.mxu0 0.0
    %2314 = vmatpush2.msra.mxu0 %v2151
    %2315 = vmatprep.subr.mxu0 0.0
    %2316 = vmatpush2.msra.mxu0 %v2150
    %2317 = vmatprep.subr.mxu0 0.0
    %2318 = vmatpush2.msra.mxu0 %v2149
    %2319 = vmatprep.subr.mxu0 0.0
    %2320 = vmatpush2.msra.mxu0 %v2148
    %2321 = vmatprep.subr.mxu0 0.0
    %2322 = vmatpush2.msra.mxu0 %v2147
    %2323 = vmatprep.subr.mxu0 0.0
    %2324 = vmatpush2.msra.mxu0 %v2146
    %2325 = vmatprep.subr.mxu0 0.0
    %2326 = vmatpush2.msra.mxu0 %v2145
    %2327 = vmatprep.subr.mxu0 0.0
    %2328 = vmatpush2.msra.mxu0 %v2144
    %2329 = vmatprep.subr.mxu0 0.0
    %2330 = vmatpush2.msra.mxu0 %v2143
    %2331 = vmatprep.subr.mxu0 0.0
    %2332 = vmatpush2.msra.mxu0 %v2142
    %2333 = vmatprep.subr.mxu0 0.0
    %2334 = vmatpush2.msra.mxu0 %v2141
    %2335 = vmatprep.subr.mxu0 0.0
    %2336 = vmatpush2.msra.mxu0 %v2140
    %2337 = vmatprep.mubr.f32.mxu0 %v2189
    %2338 = vmatmul.mubr.f32.gmra.mxu0 %v2187
    %v2339 = vpop.f32.mrf.mxu0
    %v2340 = vadd.f32 %v2270, %v2339
    %v2341 = vpop.f32.mrf.mxu0
    %2342 = vdwg.mxu0
    %2343 = vmatprep.subr.mxu0 0.0
    %2344 = vmatpush1.msra.mxu0 0.0
    %2345 = vmatprep.subr.mxu0 0.0
    %2346 = vmatpush1.msra.mxu0 0.0
    %2347 = vmatprep.subr.mxu0 0.0
    %2348 = vmatpush1.msra.mxu0 0.0
    %2349 = vmatprep.subr.mxu0 0.0
    %2350 = vmatpush1.msra.mxu0 0.0
    %2351 = vmatprep.subr.mxu0 0.0
    %2352 = vmatpush1.msra.mxu0 0.0
    %2353 = vmatprep.subr.mxu0 0.0
    %2354 = vmatpush1.msra.mxu0 0.0
    %2355 = vmatprep.subr.mxu0 0.0
    %2356 = vmatpush1.msra.mxu0 0.0
    %2357 = vmatprep.subr.mxu0 0.0
    %2358 = vmatpush1.msra.mxu0 0.0
    %2359 = vmatprep.subr.mxu0 0.0
    %2360 = vmatpush1.msra.mxu0 %v2163
    %2361 = vmatprep.subr.mxu0 0.0
    %2362 = vmatpush1.msra.mxu0 %v2162
    %2363 = vmatprep.subr.mxu0 0.0
    %2364 = vmatpush1.msra.mxu0 %v2161
    %2365 = vmatprep.subr.mxu0 0.0
    %2366 = vmatpush1.msra.mxu0 %v2160
    %2367 = vmatprep.subr.mxu0 0.0
    %2368 = vmatpush1.msra.mxu0 %v2159
    %2369 = vmatprep.subr.mxu0 0.0
    %2370 = vmatpush1.msra.mxu0 %v2158
    %2371 = vmatprep.subr.mxu0 0.0
    %2372 = vmatpush1.msra.mxu0 %v2157
    %2373 = vmatprep.subr.mxu0 0.0
    %2374 = vmatpush1.msra.mxu0 %v2156
    %2375 = vmatprep.subr.mxu0 0.0
    %2376 = vmatpush2.msra.mxu0 0.0
    %2377 = vmatprep.subr.mxu0 0.0
    %2378 = vmatpush2.msra.mxu0 0.0
    %2379 = vmatprep.subr.mxu0 0.0
    %2380 = vmatpush2.msra.mxu0 0.0
    %2381 = vmatprep.subr.mxu0 0.0
    %2382 = vmatpush2.msra.mxu0 0.0
    %2383 = vmatprep.subr.mxu0 0.0
    %2384 = vmatpush2.msra.mxu0 0.0
    %2385 = vmatprep.subr.mxu0 0.0
    %2386 = vmatpush2.msra.mxu0 0.0
    %2387 = vmatprep.subr.mxu0 0.0
    %2388 = vmatpush2.msra.mxu0 0.0
    %2389 = vmatprep.subr.mxu0 0.0
    %2390 = vmatpush2.msra.mxu0 0.0
    %2391 = vmatprep.subr.mxu0 0.0
    %2392 = vmatpush2.msra.mxu0 0.0
    %2393 = vmatprep.subr.mxu0 0.0
    %2394 = vmatpush2.msra.mxu0 0.0
    %2395 = vmatprep.subr.mxu0 0.0
    %2396 = vmatpush2.msra.mxu0 0.0
    %2397 = vmatprep.subr.mxu0 0.0
    %2398 = vmatpush2.msra.mxu0 0.0
    %2399 = vmatprep.subr.mxu0 0.0
    %2400 = vmatpush2.msra.mxu0 0.0
    %2401 = vmatprep.subr.mxu0 0.0
    %2402 = vmatpush2.msra.mxu0 0.0
    %2403 = vmatprep.subr.mxu0 0.0
    %2404 = vmatpush2.msra.mxu0 0.0
    %2405 = vmatprep.subr.mxu0 0.0
    %2406 = vmatpush2.msra.mxu0 0.0
    %2407 = vmatprep.mubr.f32.mxu0 0.0
    %2408 = vmatmul.mubr.f32.gmra.mxu0 %v2201
    %v2409 = vpop.f32.mrf.mxu0
    %v2410 = vadd.f32 %v2340, %v2409
    %v2411 = vpop.f32.mrf.mxu0
    %2412 = vdwg.mxu0
    %v2413 = vmax.f32 %v2410, 0.0
    %2414 = vst.msk [vmem:[#allocation6] sm:$0x3] %vm2025, %v2413
    %v2415 = vld [vmem:[%s1] sm:$0x3]
    %2417 = vrot.lane.b32.xlu0 %v2415, 64
    %v2418 = vpop.permute.xlu0 %2417
    %vm2420 = vcmask 583168
    %2421 = vst.msk [vmem:[#allocation6] sm:$0x3] %vm2420, %v2418
    %v2422 = vld [vmem:[#allocation6] sm:$0x3]
    %v2423 = vld [vmem:[%s8] sm:$0xff]
    %v2424 = vld [vmem:[%s8 + $0x8] sm:$0xff]
    %v2425 = vld [vmem:[%s8 + $0x10] sm:$0xff]
    %v2426 = vld [vmem:[%s8 + $0x18] sm:$0xff]
    %v2427 = vld [vmem:[%s8 + $0x20] sm:$0xff]
    %v2428 = vld [vmem:[%s8 + $0x28] sm:$0xff]
    %v2429 = vld [vmem:[%s8 + $0x30] sm:$0xff]
    %v2430 = vld [vmem:[%s8 + $0x38] sm:$0xff]
    %v2431 = vld [vmem:[%s8 + $0x40] sm:$0xff]
    %v2432 = vld [vmem:[%s8 + $0x48] sm:$0xff]
    %v2433 = vld [vmem:[%s8 + $0x50] sm:$0xff]
    %v2434 = vld [vmem:[%s8 + $0x58] sm:$0xff]
    %v2435 = vld [vmem:[%s8 + $0x60] sm:$0xff]
    %v2436 = vld [vmem:[%s8 + $0x68] sm:$0xff]
    %v2437 = vld [vmem:[%s8 + $0x70] sm:$0xff]
    %v2438 = vld [vmem:[%s8 + $0x78] sm:$0xff]
    %v2439 = vld [vmem:[%s8 + $0x80] sm:$0xff]
    %v2440 = vld [vmem:[%s8 + $0x88] sm:$0xff]
    %v2441 = vld [vmem:[%s8 + $0x90] sm:$0xff]
    %v2442 = vld [vmem:[%s8 + $0x98] sm:$0xff]
    %v2443 = vld [vmem:[%s8 + $0xa0] sm:$0xff]
    %v2444 = vld [vmem:[%s8 + $0xa8] sm:$0xff]
    %v2445 = vld [vmem:[%s8 + $0xb0] sm:$0xff]
    %v2446 = vld [vmem:[%s8 + $0xb8] sm:$0xff]
    %v2447 = vld [vmem:[%s8 + $0xc0] sm:$0xff]
    %v2448 = vld [vmem:[%s8 + $0xc8] sm:$0xff]
    %v2449 = vld [vmem:[%s8 + $0xd0] sm:$0xff]
    %v2450 = vld [vmem:[%s9] sm:$0x7]
    %v2452 = vlaneseq
    %v2453 = vshrl.u32 %v2452, 7
    %v2454 = vsub.s32 0, %v2453
    %v2455 = vrot.slane %v2450, %v2454
    %v2456 = vlaneseq
    %v2457 = vshrl.u32 %v2456, 7
    %v2458 = vsub.s32 1, %v2457
    %v2459 = vrot.slane %v2450, %v2458
    %v2460 = vlaneseq
    %v2461 = vshrl.u32 %v2460, 7
    %v2462 = vsub.s32 2, %v2461
    %v2463 = vrot.slane %v2450, %v2462
    %vm2467 = vcmask 588800
    %v2469 = vsel %vm2467, %v2422, 0
    %2471 = vmatprep.subr.mxu0 0.0
    %2472 = vmatpush1.msra.mxu0 0.0
    %2473 = vmatprep.subr.mxu0 0.0
    %2474 = vmatpush1.msra.mxu0 0.0
    %2475 = vmatprep.subr.mxu0 0.0
    %2476 = vmatpush1.msra.mxu0 0.0
    %2477 = vmatprep.subr.mxu0 0.0
    %2478 = vmatpush1.msra.mxu0 0.0
    %2479 = vmatprep.subr.mxu0 0.0
    %2480 = vmatpush1.msra.mxu0 0.0
    %2481 = vmatprep.subr.mxu0 0.0
    %2482 = vmatpush1.msra.mxu0 0.0
    %2483 = vmatprep.subr.mxu0 0.0
    %2484 = vmatpush1.msra.mxu0 0.0
    %2485 = vmatprep.subr.mxu0 %v2448
    %2486 = vmatpush1.msra.mxu0 %v2447
    %2487 = vmatprep.subr.mxu0 %v2445
    %2488 = vmatpush1.msra.mxu0 %v2444
    %2489 = vmatprep.subr.mxu0 %v2442
    %2490 = vmatpush1.msra.mxu0 %v2441
    %2491 = vmatprep.subr.mxu0 %v2439
    %2492 = vmatpush1.msra.mxu0 %v2438
    %2493 = vmatprep.subr.mxu0 %v2436
    %2494 = vmatpush1.msra.mxu0 %v2435
    %2495 = vmatprep.subr.mxu0 %v2433
    %2496 = vmatpush1.msra.mxu0 %v2432
    %2497 = vmatprep.subr.mxu0 %v2430
    %2498 = vmatpush1.msra.mxu0 %v2429
    %2499 = vmatprep.subr.mxu0 %v2427
    %2500 = vmatpush1.msra.mxu0 %v2426
    %2501 = vmatprep.subr.mxu0 %v2424
    %2502 = vmatpush1.msra.mxu0 %v2423
    %2503 = vmatprep.subr.mxu0 0.0
    %2504 = vmatpush2.msra.mxu0 0.0
    %2505 = vmatprep.subr.mxu0 0.0
    %2506 = vmatpush2.msra.mxu0 0.0
    %2507 = vmatprep.subr.mxu0 0.0
    %2508 = vmatpush2.msra.mxu0 0.0
    %2509 = vmatprep.subr.mxu0 0.0
    %2510 = vmatpush2.msra.mxu0 0.0
    %2511 = vmatprep.subr.mxu0 0.0
    %2512 = vmatpush2.msra.mxu0 0.0
    %2513 = vmatprep.subr.mxu0 0.0
    %2514 = vmatpush2.msra.mxu0 0.0
    %2515 = vmatprep.subr.mxu0 0.0
    %2516 = vmatpush2.msra.mxu0 0.0
    %2517 = vmatprep.subr.mxu0 0.0
    %2518 = vmatpush2.msra.mxu0 0.0
    %2519 = vmatprep.subr.mxu0 0.0
    %2520 = vmatpush2.msra.mxu0 0.0
    %2521 = vmatprep.subr.mxu0 0.0
    %2522 = vmatpush2.msra.mxu0 0.0
    %2523 = vmatprep.subr.mxu0 0.0
    %2524 = vmatpush2.msra.mxu0 0.0
    %2525 = vmatprep.subr.mxu0 0.0
    %2526 = vmatpush2.msra.mxu0 0.0
    %2527 = vmatprep.subr.mxu0 0.0
    %2528 = vmatpush2.msra.mxu0 0.0
    %2529 = vmatprep.subr.mxu0 0.0
    %2530 = vmatpush2.msra.mxu0 0.0
    %2531 = vmatprep.subr.mxu0 0.0
    %2532 = vmatpush2.msra.mxu0 0.0
    %2533 = vmatprep.subr.mxu0 0.0
    %2534 = vmatpush2.msra.mxu0 0.0
    %2535 = vmatprep.mubr.f32.mxu0 0.0
    %2536 = vmatmul.mubr.f32.gmra.mxu0 %v2469
    %v2537 = vpop.f32.mrf.mxu0
    %v2538 = vadd.f32 %v2455, %v2537
    %v2539 = vpop.f32.mrf.mxu0
    %v2540 = vadd.f32 %v2459, %v2539
    %2541 = vdwg.mxu0
    %2542 = vmatprep.subr.mxu0 0.0
    %2543 = vmatpush1.msra.mxu0 0.0
    %2544 = vmatprep.subr.mxu0 0.0
    %2545 = vmatpush1.msra.mxu0 0.0
    %2546 = vmatprep.subr.mxu0 0.0
    %2547 = vmatpush1.msra.mxu0 0.0
    %2548 = vmatprep.subr.mxu0 0.0
    %2549 = vmatpush1.msra.mxu0 0.0
    %2550 = vmatprep.subr.mxu0 0.0
    %2551 = vmatpush1.msra.mxu0 0.0
    %2552 = vmatprep.subr.mxu0 0.0
    %2553 = vmatpush1.msra.mxu0 0.0
    %2554 = vmatprep.subr.mxu0 0.0
    %2555 = vmatpush1.msra.mxu0 0.0
    %2556 = vmatprep.subr.mxu0 0.0
    %2557 = vmatpush1.msra.mxu0 %v2449
    %2558 = vmatprep.subr.mxu0 0.0
    %2559 = vmatpush1.msra.mxu0 %v2446
    %2560 = vmatprep.subr.mxu0 0.0
    %2561 = vmatpush1.msra.mxu0 %v2443
    %2562 = vmatprep.subr.mxu0 0.0
    %2563 = vmatpush1.msra.mxu0 %v2440
    %2564 = vmatprep.subr.mxu0 0.0
    %2565 = vmatpush1.msra.mxu0 %v2437
    %2566 = vmatprep.subr.mxu0 0.0
    %2567 = vmatpush1.msra.mxu0 %v2434
    %2568 = vmatprep.subr.mxu0 0.0
    %2569 = vmatpush1.msra.mxu0 %v2431
    %2570 = vmatprep.subr.mxu0 0.0
    %2571 = vmatpush1.msra.mxu0 %v2428
    %2572 = vmatprep.subr.mxu0 0.0
    %2573 = vmatpush1.msra.mxu0 %v2425
    %2574 = vmatprep.subr.mxu0 0.0
    %2575 = vmatpush2.msra.mxu0 0.0
    %2576 = vmatprep.subr.mxu0 0.0
    %2577 = vmatpush2.msra.mxu0 0.0
    %2578 = vmatprep.subr.mxu0 0.0
    %2579 = vmatpush2.msra.mxu0 0.0
    %2580 = vmatprep.subr.mxu0 0.0
    %2581 = vmatpush2.msra.mxu0 0.0
    %2582 = vmatprep.subr.mxu0 0.0
    %2583 = vmatpush2.msra.mxu0 0.0
    %2584 = vmatprep.subr.mxu0 0.0
    %2585 = vmatpush2.msra.mxu0 0.0
    %2586 = vmatprep.subr.mxu0 0.0
    %2587 = vmatpush2.msra.mxu0 0.0
    %2588 = vmatprep.subr.mxu0 0.0
    %2589 = vmatpush2.msra.mxu0 0.0
    %2590 = vmatprep.subr.mxu0 0.0
    %2591 = vmatpush2.msra.mxu0 0.0
    %2592 = vmatprep.subr.mxu0 0.0
    %2593 = vmatpush2.msra.mxu0 0.0
    %2594 = vmatprep.subr.mxu0 0.0
    %2595 = vmatpush2.msra.mxu0 0.0
    %2596 = vmatprep.subr.mxu0 0.0
    %2597 = vmatpush2.msra.mxu0 0.0
    %2598 = vmatprep.subr.mxu0 0.0
    %2599 = vmatpush2.msra.mxu0 0.0
    %2600 = vmatprep.subr.mxu0 0.0
    %2601 = vmatpush2.msra.mxu0 0.0
    %2602 = vmatprep.subr.mxu0 0.0
    %2603 = vmatpush2.msra.mxu0 0.0
    %2604 = vmatprep.subr.mxu0 0.0
    %2605 = vmatpush2.msra.mxu0 0.0
    %2606 = vmatprep.mubr.f32.mxu0 0.0
    %2607 = vmatmul.mubr.f32.gmra.mxu0 %v2469
    %v2608 = vpop.f32.mrf.mxu0
    %v2609 = vadd.f32 %v2463, %v2608
    %v2610 = vpop.f32.mrf.mxu0
    %2611 = vdwg.mxu0
    %v2612 = vlaneseq
    %v2613 = vand.u32 %v2612, 127
    %v2614 = vadd.s32 %v2613, 128
    %v2615 = vadd.s32 %v2613, 256
    %vm2616 = vcmp.lt.s32.totalorder %v2613, 256
    %vm2617 = vcmp.lt.s32.totalorder %v2614, 256
    %vm2618 = vcmp.lt.s32.totalorder %v2615, 256
    %v2619 = vmax.f32 %v2538, 0.0
    %v2620 = vmax.f32 %v2540, 0.0
    %v2621 = vmax.f32 %v2609, 0.0
    %v2622 = vsel %vm2616, %v2619, %v2538
    %v2623 = vsel %vm2617, %v2620, %v2540
    %v2624 = vsel %vm2618, %v2621, %v2609
    %v2628 = vcombine.low %v2622, %v2623
    %v2630 = vunpack.c.l.s4 1983009808
    %v2631 = vunpack.c.0.s8 %v2630
    %v2632 = vlaneseq
    %v2633 = vshrl.u32 %v2632, 7
    %v2634 = vsub.s32 %v2631, %v2633
    %v2635 = vrot.slane %v2628, %v2634
    %v2637 = vunpack.c.l.s4 1983009808
    %v2638 = vunpack.c.0.s8 %v2637
    %v2639 = vlaneseq
    %v2640 = vshrl.u32 %v2639, 7
    %v2641 = vsub.s32 %v2638, %v2640
    %v2642 = vrot.slane %v2624, %v2641
    %v2643 = vcombine.low %v2635, %v2642
    %vm2645 = vcmask 1041408
    %vm2646 = vcmask 1043458
    %vm2647 = vmor %vm2646, %vm2645
    %vm2648 = vcmask 521220
    %vm2649 = vmor %vm2648, %vm2647
    %2650 = vst.msk [vmem:[#allocation7] sm:$0x3f] %vm2649, %v2643
    // Predicated region
    $region42: #{nature_cnn_forward.1} parent=1 // pred_check
      _
    $region43: #{nature_cnn_forward.1} parent=1 // pred_check_branch
      %2652 = sbr.rel (0) target = $region45
    $region44: #{nature_cnn_forward.1} parent=1 // pred_region
      %s2654 = ssub.s32 96, 96
      %2655 = vsyncadd [#allocation8], %s2654
      %s2657 = sshll.u32 [#allocation7], 4
      %s2658 = int_to_ptr.vmem [resolvable:$true] %s2657
      %2660 = dma.vmem_to_hbm [thread:$0]  %s2658, 96, %s10, [#allocation8]
    $region45: #{nature_cnn_forward.1} parent=1 // pred_fallthru
      _
    // Predicated region
    $region46: #{nature_cnn_forward.1} parent=1 // pred_check
      _
    $region47: #{nature_cnn_forward.1} parent=1 // pred_check_branch
      %2662 = sbr.rel (0) target = $region49
    $region48: #{nature_cnn_forward.1} parent=1 // pred_region
      %2663 = dma.done [#allocation8], 96
    $region49: #{nature_cnn_forward.1} parent=1 // pred_fallthru
      _
    %2664 = vsyncpa [#allocation8], 1

</llo_original>
